<compile_context>
chip_gen: v6e
topology: v6e:2x2x1
jax: 0.10.0
libtpu: 0.0.40
codegen_flags: <defaults>
</compile_context>

<pallas_src>
import jax
import jax.numpy as jnp
from jax.experimental import pallas as pl
from jax.experimental.pallas import tpu as pltpu

H0, H1, H2 = 768, 512, 768


def _round_up(n, m):
    return (n + m - 1) // m * m


def _to_dtype(a, dtype):
    return a if a.dtype == jnp.dtype(dtype) else a.astype(dtype)


# ---------------------------------------------------------------------------
# Kernels
# ---------------------------------------------------------------------------
def _mlp_emb_kernel(x_ref, w0_ref, b0_ref, w1_ref, b1_ref, w2_ref, b2_ref, o_ref):
    # Layer 0: Linear(input_dim -> 768) + ReLU.  x cast to the MXU dtype in-kernel.
    h = jnp.dot(x_ref[...].astype(w0_ref.dtype), w0_ref[...],
                preferred_element_type=jnp.float32)
    h = jnp.maximum(h + b0_ref[...], 0.0)
    # Layer 1: Linear(768 -> 512) + ReLU
    h = jnp.dot(h.astype(w1_ref.dtype), w1_ref[...],
                preferred_element_type=jnp.float32)
    h = jnp.maximum(h + b1_ref[...], 0.0)
    # Layer 2: Linear(512 -> 768), no activation
    h = jnp.dot(h.astype(w2_ref.dtype), w2_ref[...],
                preferred_element_type=jnp.float32)
    o_ref[...] = (h + b2_ref[...]).astype(o_ref.dtype)


def _mlp_emb_kernel_ktiled(x_ref, w0_ref, b0_ref, w1_ref, b1_ref, w2_ref, b2_ref,
                           o_ref, acc_ref):
    # K-tiled first layer: accumulate x[:, k_tile] @ w0[k_tile, :] into f32 scratch,
    # then run bias/ReLU and the two remaining layers on the last K step.
    k = pl.program_id(1)

    @pl.when(k == 0)
    def _():
        acc_ref[...] = jnp.zeros_like(acc_ref)

    acc_ref[...] += jnp.dot(x_ref[...].astype(w0_ref.dtype), w0_ref[...],
                            preferred_element_type=jnp.float32)

    @pl.when(k == pl.num_programs(1) - 1)
    def _():
        h = jnp.maximum(acc_ref[...] + b0_ref[...], 0.0)
        h = jnp.dot(h.astype(w1_ref.dtype), w1_ref[...],
                    preferred_element_type=jnp.float32)
        h = jnp.maximum(h + b1_ref[...], 0.0)
        h = jnp.dot(h.astype(w2_ref.dtype), w2_ref[...],
                    preferred_element_type=jnp.float32)
        o_ref[...] = (h + b2_ref[...]).astype(o_ref.dtype)


# ---------------------------------------------------------------------------
# Wrapper
# ---------------------------------------------------------------------------
def mlp_emb(x, params, *, tb=512, k_tile=None,
            compute_dtype=jnp.bfloat16, out_dtype=jnp.float32):
    """x: (B, input_dim) float32.  params: dict of w0,b0,w1,b1,w2,b2.

    Weights may be pre-cast once via prepare_params() (recommended when reused);
    otherwise they are cast here.  Biases are kept / promoted to float32.
    """
    B, D_in = x.shape

    w0 = _to_dtype(params["w0"], compute_dtype)
    w1 = _to_dtype(params["w1"], compute_dtype)
    w2 = _to_dtype(params["w2"], compute_dtype)
    b0 = _to_dtype(params["b0"].reshape(1, H0), jnp.float32)
    b1 = _to_dtype(params["b1"].reshape(1, H1), jnp.float32)
    b2 = _to_dtype(params["b2"].reshape(1, H2), jnp.float32)

    # ---- batch tile -------------------------------------------------------
    tb = int(tb)
    if tb >= B:
        # Single tile covering the whole (possibly non-multiple-of-8) batch.
        tb = B
        grid_b = 1
    else:
        tb = max(16, (tb // 16) * 16)          # multiple of 16 rows (bf16 packing)
        # Keep >=2 grid steps on large batches so the "parallel" axis can shard
        # across 2 TensorCores (v7x), but never shrink the tile below 256 rows.
        half = _round_up(pl.cdiv(B, 2), 16)
        if 256 <= half < tb:
            tb = half
        grid_b = pl.cdiv(B, tb)                # ragged last block handled by Pallas

    # ---- optional K-tiling of layer 0 over input_dim ----------------------
    c_item = jnp.dtype(compute_dtype).itemsize
    if k_tile is None and D_in % 128 == 0 and D_in * H0 * c_item > (8 << 20):
        for cand in (512, 256, 128):
            if D_in % cand == 0:
                k_tile = cand
                break
    use_kt = k_tile is not None and 0 < int(k_tile) < D_in
    if use_kt:
        k_tile = int(k_tile)
        if D_in % k_tile != 0 or k_tile % 128 != 0:
            raise ValueError("k_tile must be a multiple of 128 dividing input_dim")
        # TODO(synk): for large input_dim that is not a multiple of 128, pad D_in
        # once at parameter-preparation time instead of falling back to whole-w0.

    # ---- cost estimate & VMEM budget --------------------------------------
    out_item = jnp.dtype(out_dtype).itemsize
    flops = 2 * B * (D_in * H0 + H0 * H1 + H1 * H2)
    bytes_accessed = (x.size * x.dtype.itemsize
                      + (w0.size + w1.size + w2.size) * c_item
                      + (b0.size + b1.size + b2.size) * 4
                      + B * H2 * out_item)
    cost = pl.CostEstimate(flops=flops, transcendentals=0,
                           bytes_accessed=bytes_accessed)

    if use_kt:
        vmem_est = (2 * tb * k_tile * x.dtype.itemsize   # x K-tile, double-buffered
                    + 2 * k_tile * H0 * c_item           # w0 K-tile, double-buffered
                    + (H0 * H1 + H1 * H2) * c_item       # w1, w2 resident
                    + tb * H0 * 4                        # f32 accumulator scratch
                    + 2 * tb * H2 * out_item)            # output tile
    else:
        vmem_est = (2 * tb * D_in * x.dtype.itemsize
                    + (D_in * H0 + H0 * H1 + H1 * H2) * c_item
                    + 2 * tb * H2 * out_item)
    vmem_limit = None
    if vmem_est > (24 << 20):
        vmem_limit = int(min(2 * vmem_est + (8 << 20), 56 << 20))

    # ---- build & run -------------------------------------------------------
    def run(weight_pipeline_mode):
        def wspec(shape, index_map):
            # Grid-invariant operands: request single-buffering when supported.
            if weight_pipeline_mode is None:
                return pl.BlockSpec(shape, index_map)
            return pl.BlockSpec(shape, index_map, pipeline_mode=weight_pipeline_mode)

        if use_kt:
            grid = (grid_b, D_in // k_tile)
            in_specs = [
                pl.BlockSpec((tb, k_tile), lambda i, k: (i, k)),       # x (varies)
                pl.BlockSpec((k_tile, H0), lambda i, k: (k, 0)),       # w0 (varies -> keep double-buffered)
                wspec((1, H0),  lambda i, k: (0, 0)),                  # b0
                wspec((H0, H1), lambda i, k: (0, 0)),                  # w1
                wspec((1, H1),  lambda i, k: (0, 0)),                  # b1
                wspec((H1, H2), lambda i, k: (0, 0)),                  # w2
                wspec((1, H2),  lambda i, k: (0, 0)),                  # b2
            ]
            out_spec = pl.BlockSpec((tb, H2), lambda i, k: (i, 0))
            scratch = [pltpu.VMEM((tb, H0), jnp.float32)]
            kernel = _mlp_emb_kernel_ktiled
            dims = ("parallel", "arbitrary")
        else:
            grid = (grid_b,)
            in_specs = [
                pl.BlockSpec((tb, D_in), lambda i: (i, 0)),            # x (varies)
                wspec((D_in, H0), lambda i: (0, 0)),                   # w0
                wspec((1, H0),    lambda i: (0, 0)),                   # b0
                wspec((H0, H1),   lambda i: (0, 0)),                   # w1
                wspec((1, H1),    lambda i: (0, 0)),                   # b1
                wspec((H1, H2),   lambda i: (0, 0)),                   # w2
                wspec((1, H2),    lambda i: (0, 0)),                   # b2
            ]
            out_spec = pl.BlockSpec((tb, H2), lambda i: (i, 0))
            scratch = []
            kernel = _mlp_emb_kernel
            dims = ("parallel",)

        return pl.pallas_call(
            kernel,
            out_shape=jax.ShapeDtypeStruct((B, H2), out_dtype),
            grid_spec=pltpu.PrefetchScalarGridSpec(
                num_scalar_prefetch=0,
                grid=grid,
                in_specs=in_specs,
                out_specs=out_spec,
                scratch_shapes=scratch,
            ),
            compiler_params=pltpu.CompilerParams(
                dimension_semantics=dims,
                vmem_limit_bytes=vmem_limit,
            ),
            cost_estimate=cost,
        )(x, w0, b0, w1, b1, w2, b2)

    # Grid-invariant weights/biases have nothing to pipeline; single-buffering them
    # halves their VMEM footprint.  Fall back silently to default double-buffering
    # if this JAX build rejects pipeline_mode on the TPU auto-pipeliner.
    try:
        return run(pl.Buffered(1))
    except Exception:
        return run(None)


# ---------------------------------------------------------------------------
# Params / reference
# ---------------------------------------------------------------------------
def init_params(key, input_dim):
    """Deterministic init mirroring nn.Linear's default U(-1/sqrt(fan_in), 1/sqrt(fan_in))."""
    dims = [(input_dim, H0), (H0, H1), (H1, H2)]
    params = {}
    for idx, (fan_in, fan_out) in enumerate(dims):
        key, kw, kb = jax.random.split(key, 3)
        bound = 1.0 / (fan_in ** 0.5)
        params[f"w{idx}"] = jax.random.uniform(
            kw, (fan_in, fan_out), jnp.float32, -bound, bound)
        params[f"b{idx}"] = jax.random.uniform(
            kb, (1, fan_out), jnp.float32, -bound, bound)
    return params


def prepare_params(params, compute_dtype=jnp.bfloat16):
    """One-time cast of the weight matrices to the MXU dtype (biases stay f32).

    Use this when the same params are applied to many batches, so the per-call
    wrapper never re-reads/re-writes the weights through HBM just to cast them.
    """
    out = dict(params)
    for k in ("w0", "w1", "w2"):
        out[k] = params[k].astype(compute_dtype)
    return out


def mlp_emb_ref(x, p, compute_dtype=jnp.bfloat16):
    """Pure-JAX reference with the same bf16 operands / f32 accumulation."""
    w0 = p["w0"].astype(compute_dtype)
    w1 = p["w1"].astype(compute_dtype)
    w2 = p["w2"].astype(compute_dtype)
    h = jnp.dot(x.astype(compute_dtype), w0, preferred_element_type=jnp.float32)
    h = jnp.maximum(h + p["b0"], 0.0)
    h = jnp.dot(h.astype(compute_dtype), w1, preferred_element_type=jnp.float32)
    h = jnp.maximum(h + p["b1"], 0.0)
    h = jnp.dot(h.astype(compute_dtype), w2, preferred_element_type=jnp.float32)
    return h + p["b2"]


if __name__ == "__main__":
    key = jax.random.PRNGKey(0)
    k_params, k_params2, k_x, k_x2 = jax.random.split(key, 4)

    # Test 1: default single-grid-axis path, non-tile-aligned batch (ragged handling,
    # no wrapper pad/slice), pre-cast (cached) bf16 weights.
    B1, D_IN1 = 20, 32
    params1 = init_params(k_params, D_IN1)
    params1_bf16 = prepare_params(params1)
    x1 = jax.random.normal(k_x, (B1, D_IN1), jnp.float32)
    out1 = jax.block_until_ready(mlp_emb(x1, params1_bf16))
    ref1 = mlp_emb_ref(x1, params1)
    assert out1.shape == (B1, 768) and out1.dtype == jnp.float32
    assert jnp.allclose(out1, ref1, atol=2e-2, rtol=2e-2)

    # Test 2: K-tiled path over input_dim (forced small k_tile to exercise it at
    # small shapes), f32 params cast inside the wrapper.
    B2, D_IN2 = 24, 256
    params2 = init_params(k_params2, D_IN2)
    x2 = jax.random.normal(k_x2, (B2, D_IN2), jnp.float32)
    out2 = jax.block_until_ready(mlp_emb(x2, params2, k_tile=128))
    ref2 = mlp_emb_ref(x2, params2)
    assert out2.shape == (B2, 768) and out2.dtype == jnp.float32
    assert jnp.allclose(out2, ref2, atol=2e-2, rtol=2e-2)

    print("KERNEL_OK")
</pallas_src>

<mosaic_0001>
module attributes {stable_mosaic.version = 11 : i64} {
  func.func @_mlp_emb_kernel(%arg0: i32, %arg1: memref<20x32xf32, #tpu.memory_space<vmem>>, %arg2: memref<32x768xbf16, #tpu.memory_space<vmem>>, %arg3: memref<1x768xf32, #tpu.memory_space<vmem>>, %arg4: memref<768x512xbf16, #tpu.memory_space<vmem>>, %arg5: memref<1x512xf32, #tpu.memory_space<vmem>>, %arg6: memref<512x768xbf16, #tpu.memory_space<vmem>>, %arg7: memref<1x768xf32, #tpu.memory_space<vmem>>, %arg8: memref<20x768xf32, #tpu.memory_space<vmem>>) attributes {dimension_semantics = [#tpu.dimension_semantics<parallel>], iteration_bounds = array<i64: 1>, scalar_prefetch = 0 : i64, scratch_operands = 0 : i64, tpu.core_type = #tpu.core_type<tc>, window_params = [{transform_indices = @transform_0, window_bounds = array<i64: 20, 32>}, {pipeline_mode = #tpu.pipeline_mode<synchronous>, transform_indices = @transform_1, window_bounds = array<i64: 32, 768>}, {pipeline_mode = #tpu.pipeline_mode<synchronous>, transform_indices = @transform_2, window_bounds = array<i64: 1, 768>}, {pipeline_mode = #tpu.pipeline_mode<synchronous>, transform_indices = @transform_3, window_bounds = array<i64: 768, 512>}, {pipeline_mode = #tpu.pipeline_mode<synchronous>, transform_indices = @transform_4, window_bounds = array<i64: 1, 512>}, {pipeline_mode = #tpu.pipeline_mode<synchronous>, transform_indices = @transform_5, window_bounds = array<i64: 512, 768>}, {pipeline_mode = #tpu.pipeline_mode<synchronous>, transform_indices = @transform_6, window_bounds = array<i64: 1, 768>}, {transform_indices = @transform_7, window_bounds = array<i64: 20, 768>}]} {
    %c0 = arith.constant 0 : index
    %c0_0 = arith.constant 0 : index
    %0 = vector.load %arg1[%c0, %c0_0] : memref<20x32xf32, #tpu.memory_space<vmem>>, vector<20x32xf32>
    %1 = arith.truncf %0 : vector<20x32xf32> to vector<20x32xbf16>
    %c0_1 = arith.constant 0 : index
    %c0_2 = arith.constant 0 : index
    %2 = vector.load %arg2[%c0_1, %c0_2] : memref<32x768xbf16, #tpu.memory_space<vmem>>, vector<32x768xbf16>
    %cst = arith.constant dense<0.000000e+00> : vector<20x768xf32>
    %3 = tpu.matmul %1, %2, %cst {dimension_numbers = #tpu.dot_dimension_numbers<[1], [0], [0], [1], [0, 0, 1, 1], [], []>} : vector<20x32xbf16>, vector<32x768xbf16>, vector<20x768xf32> -> vector<20x768xf32>
    %c0_3 = arith.constant 0 : index
    %c0_4 = arith.constant 0 : index
    %4 = vector.load %arg3[%c0_3, %c0_4] : memref<1x768xf32, #tpu.memory_space<vmem>>, vector<1x768xf32>
    %5 = vector.broadcast %4 : vector<1x768xf32> to vector<20x768xf32>
    %6 = arith.addf %3, %5 : vector<20x768xf32>
    %cst_5 = arith.constant 0.000000e+00 : f32
    %7 = vector.broadcast %cst_5 : f32 to vector<20x768xf32>
    %8 = arith.maximumf %6, %7 : vector<20x768xf32>
    %9 = arith.truncf %8 : vector<20x768xf32> to vector<20x768xbf16>
    %c0_6 = arith.constant 0 : index
    %c0_7 = arith.constant 0 : index
    %10 = vector.load %arg4[%c0_6, %c0_7] : memref<768x512xbf16, #tpu.memory_space<vmem>>, vector<768x512xbf16>
    %cst_8 = arith.constant dense<0.000000e+00> : vector<20x512xf32>
    %11 = tpu.matmul %9, %10, %cst_8 {dimension_numbers = #tpu.dot_dimension_numbers<[1], [0], [0], [1], [0, 0, 1, 1], [], []>} : vector<20x768xbf16>, vector<768x512xbf16>, vector<20x512xf32> -> vector<20x512xf32>
    %c0_9 = arith.constant 0 : index
    %c0_10 = arith.constant 0 : index
    %12 = vector.load %arg5[%c0_9, %c0_10] : memref<1x512xf32, #tpu.memory_space<vmem>>, vector<1x512xf32>
    %13 = vector.broadcast %12 : vector<1x512xf32> to vector<20x512xf32>
    %14 = arith.addf %11, %13 : vector<20x512xf32>
    %cst_11 = arith.constant 0.000000e+00 : f32
    %15 = vector.broadcast %cst_11 : f32 to vector<20x512xf32>
    %16 = arith.maximumf %14, %15 : vector<20x512xf32>
    %17 = arith.truncf %16 : vector<20x512xf32> to vector<20x512xbf16>
    %c0_12 = arith.constant 0 : index
    %c0_13 = arith.constant 0 : index
    %18 = vector.load %arg6[%c0_12, %c0_13] : memref<512x768xbf16, #tpu.memory_space<vmem>>, vector<512x768xbf16>
    %cst_14 = arith.constant dense<0.000000e+00> : vector<20x768xf32>
    %19 = tpu.matmul %17, %18, %cst_14 {dimension_numbers = #tpu.dot_dimension_numbers<[1], [0], [0], [1], [0, 0, 1, 1], [], []>} : vector<20x512xbf16>, vector<512x768xbf16>, vector<20x768xf32> -> vector<20x768xf32>
    %c0_15 = arith.constant 0 : index
    %c0_16 = arith.constant 0 : index
    %20 = vector.load %arg7[%c0_15, %c0_16] : memref<1x768xf32, #tpu.memory_space<vmem>>, vector<1x768xf32>
    %21 = vector.broadcast %20 : vector<1x768xf32> to vector<20x768xf32>
    %22 = arith.addf %19, %21 : vector<20x768xf32>
    %c0_17 = arith.constant 0 : index
    %c0_18 = arith.constant 0 : index
    %23 = vector.load %arg8[%c0_17, %c0_18] : memref<20x768xf32, #tpu.memory_space<vmem>>, vector<20x768xf32>
    tpu.vector_store %arg8[%c0_17, %c0_18], %22 {strides = array<i32>} : memref<20x768xf32, #tpu.memory_space<vmem>>, vector<20x768xf32>,
    return
  }
  func.func @transform_0(%arg0: i32) -> (i32, i32) {
    %c0_i32 = arith.constant 0 : i32
    %c0_i32_0 = arith.constant 0 : i32
    return %arg0, %c0_i32 : i32, i32
  }
  func.func @transform_1(%arg0: i32) -> (i32, i32) {
    %c0_i32 = arith.constant 0 : i32
    %c0_i32_0 = arith.constant 0 : i32
    %c0_i32_1 = arith.constant 0 : i32
    return %c0_i32, %c0_i32_0 : i32, i32
  }
  func.func @transform_2(%arg0: i32) -> (i32, i32) {
    %c0_i32 = arith.constant 0 : i32
    %c0_i32_0 = arith.constant 0 : i32
    %c0_i32_1 = arith.constant 0 : i32
    return %c0_i32, %c0_i32_0 : i32, i32
  }
  func.func @transform_3(%arg0: i32) -> (i32, i32) {
    %c0_i32 = arith.constant 0 : i32
    %c0_i32_0 = arith.constant 0 : i32
    %c0_i32_1 = arith.constant 0 : i32
    return %c0_i32, %c0_i32_0 : i32, i32
  }
  func.func @transform_4(%arg0: i32) -> (i32, i32) {
    %c0_i32 = arith.constant 0 : i32
    %c0_i32_0 = arith.constant 0 : i32
    %c0_i32_1 = arith.constant 0 : i32
    return %c0_i32, %c0_i32_0 : i32, i32
  }
  func.func @transform_5(%arg0: i32) -> (i32, i32) {
    %c0_i32 = arith.constant 0 : i32
    %c0_i32_0 = arith.constant 0 : i32
    %c0_i32_1 = arith.constant 0 : i32
    return %c0_i32, %c0_i32_0 : i32, i32
  }
  func.func @transform_6(%arg0: i32) -> (i32, i32) {
    %c0_i32 = arith.constant 0 : i32
    %c0_i32_0 = arith.constant 0 : i32
    %c0_i32_1 = arith.constant 0 : i32
    return %c0_i32, %c0_i32_0 : i32, i32
  }
  func.func @transform_7(%arg0: i32) -> (i32, i32) {
    %c0_i32 = arith.constant 0 : i32
    %c0_i32_0 = arith.constant 0 : i32
    return %arg0, %c0_i32 : i32, i32
  }
}

module attributes {stable_mosaic.version = 11 : i64} {
  func.func @_mlp_emb_kernel(%arg0: i32, %arg1: memref<20x32xf32, #tpu.memory_space<vmem>>, %arg2: memref<32x768xbf16, #tpu.memory_space<vmem>>, %arg3: memref<1x768xf32, #tpu.memory_space<vmem>>, %arg4: memref<768x512xbf16, #tpu.memory_space<vmem>>, %arg5: memref<1x512xf32, #tpu.memory_space<vmem>>, %arg6: memref<512x768xbf16, #tpu.memory_space<vmem>>, %arg7: memref<1x768xf32, #tpu.memory_space<vmem>>, %arg8: memref<20x768xf32, #tpu.memory_space<vmem>>) attributes {dimension_semantics = [#tpu.dimension_semantics<parallel>], iteration_bounds = array<i64: 1>, scalar_prefetch = 0 : i64, scratch_operands = 0 : i64, tpu.core_type = #tpu.core_type<tc>, window_params = [{transform_indices = @transform_0, window_bounds = array<i64: 20, 32>}, {pipeline_mode = #tpu.pipeline_mode<synchronous>, transform_indices = @transform_1, window_bounds = array<i64: 32, 768>}, {pipeline_mode = #tpu.pipeline_mode<synchronous>, transform_indices = @transform_2, window_bounds = array<i64: 1, 768>}, {pipeline_mode = #tpu.pipeline_mode<synchronous>, transform_indices = @transform_3, window_bounds = array<i64: 768, 512>}, {pipeline_mode = #tpu.pipeline_mode<synchronous>, transform_indices = @transform_4, window_bounds = array<i64: 1, 512>}, {pipeline_mode = #tpu.pipeline_mode<synchronous>, transform_indices = @transform_5, window_bounds = array<i64: 512, 768>}, {pipeline_mode = #tpu.pipeline_mode<synchronous>, transform_indices = @transform_6, window_bounds = array<i64: 1, 768>}, {transform_indices = @transform_7, window_bounds = array<i64: 20, 768>}]} {
    %c0 = arith.constant 0 : index
    %c0_0 = arith.constant 0 : index
    %0 = vector.load %arg1[%c0, %c0_0] : memref<20x32xf32, #tpu.memory_space<vmem>>, vector<20x32xf32>
    %1 = arith.truncf %0 : vector<20x32xf32> to vector<20x32xbf16>
    %c0_1 = arith.constant 0 : index
    %c0_2 = arith.constant 0 : index
    %2 = vector.load %arg2[%c0_1, %c0_2] : memref<32x768xbf16, #tpu.memory_space<vmem>>, vector<32x768xbf16>
    %cst = arith.constant dense<0.000000e+00> : vector<20x768xf32>
    %3 = tpu.matmul %1, %2, %cst {dimension_numbers = #tpu.dot_dimension_numbers<[1], [0], [0], [1], [0, 0, 1, 1], [], []>} : vector<20x32xbf16>, vector<32x768xbf16>, vector<20x768xf32> -> vector<20x768xf32>
    %c0_3 = arith.constant 0 : index
    %c0_4 = arith.constant 0 : index
    %4 = vector.load %arg3[%c0_3, %c0_4] : memref<1x768xf32, #tpu.memory_space<vmem>>, vector<1x768xf32>
    %5 = vector.broadcast %4 : vector<1x768xf32> to vector<20x768xf32>
    %6 = arith.addf %3, %5 : vector<20x768xf32>
    %cst_5 = arith.constant 0.000000e+00 : f32
    %7 = vector.broadcast %cst_5 : f32 to vector<20x768xf32>
    %8 = arith.maximumf %6, %7 : vector<20x768xf32>
    %9 = arith.truncf %8 : vector<20x768xf32> to vector<20x768xbf16>
    %c0_6 = arith.constant 0 : index
    %c0_7 = arith.constant 0 : index
    %10 = vector.load %arg4[%c0_6, %c0_7] : memref<768x512xbf16, #tpu.memory_space<vmem>>, vector<768x512xbf16>
    %cst_8 = arith.constant dense<0.000000e+00> : vector<20x512xf32>
    %11 = tpu.matmul %9, %10, %cst_8 {dimension_numbers = #tpu.dot_dimension_numbers<[1], [0], [0], [1], [0, 0, 1, 1], [], []>} : vector<20x768xbf16>, vector<768x512xbf16>, vector<20x512xf32> -> vector<20x512xf32>
    %c0_9 = arith.constant 0 : index
    %c0_10 = arith.constant 0 : index
    %12 = vector.load %arg5[%c0_9, %c0_10] : memref<1x512xf32, #tpu.memory_space<vmem>>, vector<1x512xf32>
    %13 = vector.broadcast %12 : vector<1x512xf32> to vector<20x512xf32>
    %14 = arith.addf %11, %13 : vector<20x512xf32>
    %cst_11 = arith.constant 0.000000e+00 : f32
    %15 = vector.broadcast %cst_11 : f32 to vector<20x512xf32>
    %16 = arith.maximumf %14, %15 : vector<20x512xf32>
    %17 = arith.truncf %16 : vector<20x512xf32> to vector<20x512xbf16>
    %c0_12 = arith.constant 0 : index
    %c0_13 = arith.constant 0 : index
    %18 = vector.load %arg6[%c0_12, %c0_13] : memref<512x768xbf16, #tpu.memory_space<vmem>>, vector<512x768xbf16>
    %cst_14 = arith.constant dense<0.000000e+00> : vector<20x768xf32>
    %19 = tpu.matmul %17, %18, %cst_14 {dimension_numbers = #tpu.dot_dimension_numbers<[1], [0], [0], [1], [0, 0, 1, 1], [], []>} : vector<20x512xbf16>, vector<512x768xbf16>, vector<20x768xf32> -> vector<20x768xf32>
    %c0_15 = arith.constant 0 : index
    %c0_16 = arith.constant 0 : index
    %20 = vector.load %arg7[%c0_15, %c0_16] : memref<1x768xf32, #tpu.memory_space<vmem>>, vector<1x768xf32>
    %21 = vector.broadcast %20 : vector<1x768xf32> to vector<20x768xf32>
    %22 = arith.addf %19, %21 : vector<20x768xf32>
    %c0_17 = arith.constant 0 : index
    %c0_18 = arith.constant 0 : index
    %23 = vector.load %arg8[%c0_17, %c0_18] : memref<20x768xf32, #tpu.memory_space<vmem>>, vector<20x768xf32>
    tpu.vector_store %arg8[%c0_17, %c0_18], %22 {strides = array<i32>} : memref<20x768xf32, #tpu.memory_space<vmem>>, vector<20x768xf32>,
    return
  }
  func.func @transform_0(%arg0: i32) -> (i32, i32) {
    %c0_i32 = arith.constant 0 : i32
    %c0_i32_0 = arith.constant 0 : i32
    return %arg0, %c0_i32 : i32, i32
  }
  func.func @transform_1(%arg0: i32) -> (i32, i32) {
    %c0_i32 = arith.constant 0 : i32
    %c0_i32_0 = arith.constant 0 : i32
    %c0_i32_1 = arith.constant 0 : i32
    return %c0_i32, %c0_i32_0 : i32, i32
  }
  func.func @transform_2(%arg0: i32) -> (i32, i32) {
    %c0_i32 = arith.constant 0 : i32
    %c0_i32_0 = arith.constant 0 : i32
    %c0_i32_1 = arith.constant 0 : i32
    return %c0_i32, %c0_i32_0 : i32, i32
  }
  func.func @transform_3(%arg0: i32) -> (i32, i32) {
    %c0_i32 = arith.constant 0 : i32
    %c0_i32_0 = arith.constant 0 : i32
    %c0_i32_1 = arith.constant 0 : i32
    return %c0_i32, %c0_i32_0 : i32, i32
  }
  func.func @transform_4(%arg0: i32) -> (i32, i32) {
    %c0_i32 = arith.constant 0 : i32
    %c0_i32_0 = arith.constant 0 : i32
    %c0_i32_1 = arith.constant 0 : i32
    return %c0_i32, %c0_i32_0 : i32, i32
  }
  func.func @transform_5(%arg0: i32) -> (i32, i32) {
    %c0_i32 = arith.constant 0 : i32
    %c0_i32_0 = arith.constant 0 : i32
    %c0_i32_1 = arith.constant 0 : i32
    return %c0_i32, %c0_i32_0 : i32, i32
  }
  func.func @transform_6(%arg0: i32) -> (i32, i32) {
    %c0_i32 = arith.constant 0 : i32
    %c0_i32_0 = arith.constant 0 : i32
    %c0_i32_1 = arith.constant 0 : i32
    return %c0_i32, %c0_i32_0 : i32, i32
  }
  func.func @transform_7(%arg0: i32) -> (i32, i32) {
    %c0_i32 = arith.constant 0 : i32
    %c0_i32_0 = arith.constant 0 : i32
    return %arg0, %c0_i32 : i32, i32
  }
}

</mosaic_0001>

<llo_original>
// kernel: tpu_custom_call.1
$region0: #{tpu_custom_call.1}
  #allocation0 [shape = 'u32[]', space=smem, size = 0x4, offset = 0x4, fixed_abs, tag = 'smem constant byte address 0x4 - core index']
  #allocation1 [shape = 'u32[144,128]{1,0:T(1,128)}', space=vmem, size = 0x12000, scoped, tag = 'internal scratch']
  %s0 = inlined_call_operand.hbm [shape: f32[20,32], index: 0, kind: input, shape index: {}]
  %s1 = inlined_call_operand.hbm [shape: bf16[32,768], index: 1, kind: input, shape index: {}]
  %s2 = inlined_call_operand.hbm [shape: f32[1,768], index: 2, kind: input, shape index: {}]
  %s3 = inlined_call_operand.hbm [shape: bf16[768,512], index: 3, kind: input, shape index: {}]
  %s4 = inlined_call_operand.vmem [shape: f32[1,512], index: 4, kind: input, shape index: {}]
  %s5 = inlined_call_operand.hbm [shape: bf16[512,768], index: 5, kind: input, shape index: {}]
  %s6 = inlined_call_operand.vmem [shape: f32[1,768], index: 6, kind: input, shape index: {}]
  %s7 = inlined_call_operand.hbm [shape: f32[20,768], index: 7, kind: output, shape index: {}]
  %s8 = sld [smem:[#allocation0]]
  $region58: #{tpu_custom_call.1} parent=0
    _
  %s10 = ssub.s32 1, %s8
  %s11 = scalar_select 0, %s10, %s8
  $region1: #{tpu_custom_call.1} parent=0
    #allocation2 [shape = 'u8[12288]{0}', space=vmem, size = 0x3000, scoped, tag = 'input window, operand 0, single buffered']
    #allocation3 [shape = 's32[1]{0}', space=sflag, size = 0x4, scoped, tag = 'scoped memory for tpu_custom_call.1']
    #allocation4 [shape = 's32[1]{0}', space=sflag, size = 0x4, scoped, tag = 'scoped memory for tpu_custom_call.1']
    #allocation5 [shape = 'u8[49152]{0}', space=vmem, size = 0xc000, scoped, tag = 'input window, operand 1, single buffered']
    #allocation6 [shape = 's32[1]{0}', space=sflag, size = 0x4, scoped, tag = 'scoped memory for tpu_custom_call.1']
    #allocation7 [shape = 'u8[3072]{0}', space=vmem, size = 0xc00, scoped, tag = 'input window, operand 2, single buffered']
    #allocation8 [shape = 'u8[786432]{0}', space=vmem, size = 0xc0000, scoped, tag = 'input window, operand 3, single buffered']
    #allocation9 [shape = 's32[1]{0}', space=sflag, size = 0x4, scoped, tag = 'scoped memory for tpu_custom_call.1']
    #allocation10 [shape = 'u8[786432]{0}', space=vmem, size = 0xc0000, scoped, tag = 'input window, operand 5, single buffered']
    #allocation11 [shape = 'u8[73728]{0}', space=vmem, size = 0x12000, scoped, tag = 'output window, operand 0, single buffered']
    %12 = vsyncpa [#allocation3], 0
    %13 = vsyncpa [#allocation6], 0
    %14 = vsyncpa [#allocation9], 0
    %15 = vsyncpa [#allocation4], 0
    // Predicated region
    $region2: #{tpu_custom_call.1} parent=1 // pred_check
      _
    $region3: #{tpu_custom_call.1} parent=1 // pred_check_branch
      %17 = sbr.rel (0) target = $region5
    $region4: #{tpu_custom_call.1} parent=1 // pred_region
      %s19 = ssub.s32 384, 384
      %20 = vsyncadd [#allocation3], %s19
      %s21 = sshll.u32 [#allocation2], 4
      %s22 = int_to_ptr.vmem [resolvable:$true] %s21
      %27 = dma.hbm_to_vmem [thread:$0]  %s0, 384, %s22, [#allocation3], 128, 128, 8
    $region5: #{tpu_custom_call.1} parent=1 // pred_fallthru
      _
    // Predicated region
    $region6: #{tpu_custom_call.1} parent=1 // pred_check
      _
    $region7: #{tpu_custom_call.1} parent=1 // pred_check_branch
      %29 = sbr.rel (0) target = $region9
    $region8: #{tpu_custom_call.1} parent=1 // pred_region
      %s31 = ssub.s32 1536, 1536
      %32 = vsyncadd [#allocation6], %s31
      %s33 = sshll.u32 [#allocation5], 4
      %s34 = int_to_ptr.vmem [resolvable:$true] %s33
      %39 = dma.hbm_to_vmem [thread:$0]  %s1, 1536, %s34, [#allocation6], 384, 384, 24
    $region9: #{tpu_custom_call.1} parent=1 // pred_fallthru
      _
    // Predicated region
    $region10: #{tpu_custom_call.1} parent=1 // pred_check
      _
    $region11: #{tpu_custom_call.1} parent=1 // pred_check_branch
      %41 = sbr.rel (0) target = $region13
    $region12: #{tpu_custom_call.1} parent=1 // pred_region
      %s43 = ssub.s32 96, 96
      %44 = vsyncadd [#allocation6], %s43
      %s46 = sshll.u32 [#allocation7], 4
      %s47 = int_to_ptr.vmem [resolvable:$true] %s46
      %49 = dma.hbm_to_vmem [thread:$0]  %s2, 96, %s47, [#allocation6]
    $region13: #{tpu_custom_call.1} parent=1 // pred_fallthru
      _
    // Predicated region
    $region14: #{tpu_custom_call.1} parent=1 // pred_check
      _
    $region15: #{tpu_custom_call.1} parent=1 // pred_check_branch
      %51 = sbr.rel (0) target = $region17
    $region16: #{tpu_custom_call.1} parent=1 // pred_region
      %s53 = ssub.s32 24576, 24576
      %54 = vsyncadd [#allocation9], %s53
      %s55 = sshll.u32 [#allocation8], 4
      %s56 = int_to_ptr.vmem [resolvable:$true] %s55
      %61 = dma.hbm_to_vmem [thread:$0]  %s3, 24576, %s56, [#allocation9], 256, 256, 16
    $region17: #{tpu_custom_call.1} parent=1 // pred_fallthru
      _
    // Predicated region
    $region18: #{tpu_custom_call.1} parent=1 // pred_check
      _
    $region19: #{tpu_custom_call.1} parent=1 // pred_check_branch
      %63 = sbr.rel (0) target = $region21
    $region20: #{tpu_custom_call.1} parent=1 // pred_region
      _
    $region21: #{tpu_custom_call.1} parent=1 // pred_fallthru
      _
    // Predicated region
    $region22: #{tpu_custom_call.1} parent=1 // pred_check
      _
    $region23: #{tpu_custom_call.1} parent=1 // pred_check_branch
      %65 = sbr.rel (0) target = $region25
    $region24: #{tpu_custom_call.1} parent=1 // pred_region
      %s67 = ssub.s32 24576, 24576
      %68 = vsyncadd [#allocation9], %s67
      %s69 = sshll.u32 [#allocation10], 4
      %s70 = int_to_ptr.vmem [resolvable:$true] %s69
      %75 = dma.hbm_to_vmem [thread:$0]  %s5, 24576, %s70, [#allocation9], 384, 384, 24
    $region25: #{tpu_custom_call.1} parent=1 // pred_fallthru
      _
    // Predicated region
    $region26: #{tpu_custom_call.1} parent=1 // pred_check
      _
    $region27: #{tpu_custom_call.1} parent=1 // pred_check_branch
      %77 = sbr.rel (0) target = $region29
    $region28: #{tpu_custom_call.1} parent=1 // pred_region
      _
    $region29: #{tpu_custom_call.1} parent=1 // pred_fallthru
      _
    // Predicated region
    $region30: #{tpu_custom_call.1} parent=1 // pred_check
      _
    $region31: #{tpu_custom_call.1} parent=1 // pred_check_branch
      %79 = sbr.rel (0) target = $region33
    $region32: #{tpu_custom_call.1} parent=1 // pred_region
      %80 = dma.done [#allocation3], 384
    $region33: #{tpu_custom_call.1} parent=1 // pred_fallthru
      _
    // Predicated region
    $region34: #{tpu_custom_call.1} parent=1 // pred_check
      _
    $region35: #{tpu_custom_call.1} parent=1 // pred_check_branch
      %82 = sbr.rel (0) target = $region37
    $region36: #{tpu_custom_call.1} parent=1 // pred_region
      %83 = dma.done [#allocation6], 1536
    $region37: #{tpu_custom_call.1} parent=1 // pred_fallthru
      _
    // Predicated region
    $region38: #{tpu_custom_call.1} parent=1 // pred_check
      _
    $region39: #{tpu_custom_call.1} parent=1 // pred_check_branch
      %85 = sbr.rel (0) target = $region41
    $region40: #{tpu_custom_call.1} parent=1 // pred_region
      %86 = dma.done [#allocation6], 96
    $region41: #{tpu_custom_call.1} parent=1 // pred_fallthru
      _
    // Predicated region
    $region42: #{tpu_custom_call.1} parent=1 // pred_check
      _
    $region43: #{tpu_custom_call.1} parent=1 // pred_check_branch
      %88 = sbr.rel (0) target = $region45
    $region44: #{tpu_custom_call.1} parent=1 // pred_region
      %89 = dma.done [#allocation9], 24576
    $region45: #{tpu_custom_call.1} parent=1 // pred_fallthru
      _
    // Predicated region
    $region46: #{tpu_custom_call.1} parent=1 // pred_check
      _
    $region47: #{tpu_custom_call.1} parent=1 // pred_check_branch
      %91 = sbr.rel (0) target = $region49
    $region48: #{tpu_custom_call.1} parent=1 // pred_region
      %92 = dma.done [#allocation9], 24576
    $region49: #{tpu_custom_call.1} parent=1 // pred_fallthru
      _
    %v94 = vld [vmem:[#allocation2] sm:$0xff]
    %v95 = vld [vmem:[#allocation2 + $0x8] sm:$0xff]
    %v96 = vld [vmem:[#allocation2 + $0x10] sm:$0xf]
    %v97 = vpack.c.bf16 %v95, %v94
    %v98 = vpack.c.bf16 %v96, %v96
    %v99 = vld [vmem:[#allocation5] sm:$0xff]
    %v100 = vld [vmem:[#allocation5 + $0x8] sm:$0xff]
    %v101 = vld [vmem:[#allocation5 + $0x10] sm:$0xff]
    %v102 = vld [vmem:[#allocation5 + $0x18] sm:$0xff]
    %v103 = vld [vmem:[#allocation5 + $0x20] sm:$0xff]
    %v104 = vld [vmem:[#allocation5 + $0x28] sm:$0xff]
    %v105 = vld [vmem:[#allocation5 + $0x30] sm:$0xff]
    %v106 = vld [vmem:[#allocation5 + $0x38] sm:$0xff]
    %v107 = vld [vmem:[#allocation5 + $0x40] sm:$0xff]
    %v108 = vld [vmem:[#allocation5 + $0x48] sm:$0xff]
    %v109 = vld [vmem:[#allocation5 + $0x50] sm:$0xff]
    %v110 = vld [vmem:[#allocation5 + $0x58] sm:$0xff]
    %v111 = vld [vmem:[#allocation7] sm:$0x3f]
    %v113 = vlaneseq
    %v114 = vshrl.u32 %v113, 7
    %v115 = vsub.s32 0, %v114
    %v116 = vrot.slane %v111, %v115
    %v117 = vlaneseq
    %v118 = vshrl.u32 %v117, 7
    %v119 = vsub.s32 1, %v118
    %v120 = vrot.slane %v111, %v119
    %v121 = vlaneseq
    %v122 = vshrl.u32 %v121, 7
    %v123 = vsub.s32 2, %v122
    %v124 = vrot.slane %v111, %v123
    %v125 = vlaneseq
    %v126 = vshrl.u32 %v125, 7
    %v127 = vsub.s32 3, %v126
    %v128 = vrot.slane %v111, %v127
    %v129 = vlaneseq
    %v130 = vshrl.u32 %v129, 7
    %v131 = vsub.s32 4, %v130
    %v132 = vrot.slane %v111, %v131
    %v133 = vlaneseq
    %v134 = vshrl.u32 %v133, 7
    %v135 = vsub.s32 5, %v134
    %v136 = vrot.slane %v111, %v135
    %v155 = vunpack.c.l.b16 %v99
    %v156 = vunpack.c.h.b16 %v99
    %v157 = vunpack.c.l.b16 %v100
    %v158 = vunpack.c.h.b16 %v100
    %v159 = vunpack.c.l.b16 %v101
    %v160 = vunpack.c.h.b16 %v101
    %v161 = vunpack.c.l.b16 %v102
    %v162 = vunpack.c.h.b16 %v102
    %v163 = vunpack.c.l.b16 %v103
    %v164 = vunpack.c.h.b16 %v103
    %v165 = vunpack.c.l.b16 %v104
    %v166 = vunpack.c.h.b16 %v104
    %v167 = vunpack.c.l.b16 %v105
    %v168 = vunpack.c.h.b16 %v105
    %v169 = vunpack.c.l.b16 %v106
    %v170 = vunpack.c.h.b16 %v106
    %v171 = vunpack.c.l.b16 %v107
    %v172 = vunpack.c.h.b16 %v107
    %v173 = vunpack.c.l.b16 %v108
    %v174 = vunpack.c.h.b16 %v108
    %v175 = vunpack.c.l.b16 %v109
    %v176 = vunpack.c.h.b16 %v109
    %v177 = vunpack.c.l.b16 %v110
    %v178 = vunpack.c.h.b16 %v110
    %v179 = vpack.c.b16 %v161, %v155
    %v180 = vpack.c.b16 %v162, %v156
    %v181 = vpack.c.b16 %v163, %v157
    %v182 = vpack.c.b16 %v164, %v158
    %v183 = vpack.c.b16 %v165, %v159
    %v184 = vpack.c.b16 %v166, %v160
    %v185 = vpack.c.b16 %v173, %v167
    %v186 = vpack.c.b16 %v174, %v168
    %v187 = vpack.c.b16 %v175, %v169
    %v188 = vpack.c.b16 %v176, %v170
    %v189 = vpack.c.b16 %v177, %v171
    %v190 = vpack.c.b16 %v178, %v172
    %vm203 = vcmask 261120
    %v205 = vsel %vm203, %v97, 0
    %v208 = vsel %vm203, %v98, 0
    %210 = vmatprep.subr.bf16.mxu0 0
    %211 = vmatpush1.bf16.msra.mxu0 0
    %212 = vmatprep.subr.bf16.mxu0 0
    %213 = vmatpush1.bf16.msra.mxu0 0
    %214 = vmatprep.subr.bf16.mxu0 0
    %215 = vmatpush1.bf16.msra.mxu0 0
    %216 = vmatprep.subr.bf16.mxu0 0
    %217 = vmatpush1.bf16.msra.mxu0 0
    %218 = vmatprep.subr.bf16.mxu0 0
    %219 = vmatpush1.bf16.msra.mxu0 0
    %220 = vmatprep.subr.bf16.mxu0 0
    %221 = vmatpush1.bf16.msra.mxu0 0
    %222 = vmatprep.subr.bf16.mxu0 %v186
    %223 = vmatpush1.bf16.msra.mxu0 %v185
    %224 = vmatprep.subr.bf16.mxu0 %v180
    %225 = vmatpush1.bf16.msra.mxu0 %v179
    %226 = vmatprep.subr.bf16.mxu0 0
    %227 = vmatpush2.bf16.msra.mxu0 0
    %228 = vmatprep.subr.bf16.mxu0 0
    %229 = vmatpush2.bf16.msra.mxu0 0
    %230 = vmatprep.subr.bf16.mxu0 0
    %231 = vmatpush2.bf16.msra.mxu0 0
    %232 = vmatprep.subr.bf16.mxu0 0
    %233 = vmatpush2.bf16.msra.mxu0 0
    %234 = vmatprep.subr.bf16.mxu0 0
    %235 = vmatpush2.bf16.msra.mxu0 0
    %236 = vmatprep.subr.bf16.mxu0 0
    %237 = vmatpush2.bf16.msra.mxu0 0
    %238 = vmatprep.subr.bf16.mxu0 0
    %239 = vmatpush2.bf16.msra.mxu0 0
    %240 = vmatprep.subr.bf16.mxu0 0
    %241 = vmatpush2.bf16.msra.mxu0 0
    %242 = vmatprep.mubr.bf16.mxu0 0
    %243 = vmatmul.mubr.bf16.gmra.mxu0 %v205
    %v244 = vpop.f32.mrf.mxu0
    %v245 = vadd.f32 %v116, %v244
    %v246 = vpop.f32.mrf.mxu0
    %v247 = vadd.f32 %v120, %v246
    %v248 = vpop.f32.mrf.mxu0
    %v249 = vadd.f32 %v116, %v248
    %v250 = vpop.f32.mrf.mxu0
    %v251 = vadd.f32 %v120, %v250
    %252 = vmatprep.mubr.bf16.mxu0 0
    %253 = vmatmul.mubr.bf16.gmra.mxu0 %v208
    %v254 = vpop.f32.mrf.mxu0
    %v255 = vadd.f32 %v116, %v254
    %v256 = vpop.f32.mrf.mxu0
    %v257 = vadd.f32 %v120, %v256
    %v258 = vpop.f32.mrf.mxu0
    %v259 = vpop.f32.mrf.mxu0
    %260 = vdwg.mxu0
    %261 = vmatprep.subr.bf16.mxu0 0
    %262 = vmatpush1.bf16.msra.mxu0 0
    %263 = vmatprep.subr.bf16.mxu0 0
    %264 = vmatpush1.bf16.msra.mxu0 0
    %265 = vmatprep.subr.bf16.mxu0 0
    %266 = vmatpush1.bf16.msra.mxu0 0
    %267 = vmatprep.subr.bf16.mxu0 0
    %268 = vmatpush1.bf16.msra.mxu0 0
    %269 = vmatprep.subr.bf16.mxu0 0
    %270 = vmatpush1.bf16.msra.mxu0 0
    %271 = vmatprep.subr.bf16.mxu0 0
    %272 = vmatpush1.bf16.msra.mxu0 0
    %273 = vmatprep.subr.bf16.mxu0 %v188
    %274 = vmatpush1.bf16.msra.mxu0 %v187
    %275 = vmatprep.subr.bf16.mxu0 %v182
    %276 = vmatpush1.bf16.msra.mxu0 %v181
    %277 = vmatprep.subr.bf16.mxu0 0
    %278 = vmatpush2.bf16.msra.mxu0 0
    %279 = vmatprep.subr.bf16.mxu0 0
    %280 = vmatpush2.bf16.msra.mxu0 0
    %281 = vmatprep.subr.bf16.mxu0 0
    %282 = vmatpush2.bf16.msra.mxu0 0
    %283 = vmatprep.subr.bf16.mxu0 0
    %284 = vmatpush2.bf16.msra.mxu0 0
    %285 = vmatprep.subr.bf16.mxu0 0
    %286 = vmatpush2.bf16.msra.mxu0 0
    %287 = vmatprep.subr.bf16.mxu0 0
    %288 = vmatpush2.bf16.msra.mxu0 0
    %289 = vmatprep.subr.bf16.mxu0 0
    %290 = vmatpush2.bf16.msra.mxu0 0
    %291 = vmatprep.subr.bf16.mxu0 0
    %292 = vmatpush2.bf16.msra.mxu0 0
    %293 = vmatprep.mubr.bf16.mxu0 0
    %294 = vmatmul.mubr.bf16.gmra.mxu0 %v205
    %v295 = vpop.f32.mrf.mxu0
    %v296 = vadd.f32 %v124, %v295
    %v297 = vpop.f32.mrf.mxu0
    %v298 = vadd.f32 %v128, %v297
    %v299 = vpop.f32.mrf.mxu0
    %v300 = vadd.f32 %v124, %v299
    %v301 = vpop.f32.mrf.mxu0
    %v302 = vadd.f32 %v128, %v301
    %303 = vmatprep.mubr.bf16.mxu0 0
    %304 = vmatmul.mubr.bf16.gmra.mxu0 %v208
    %v305 = vpop.f32.mrf.mxu0
    %v306 = vadd.f32 %v124, %v305
    %v307 = vpop.f32.mrf.mxu0
    %v308 = vadd.f32 %v128, %v307
    %v309 = vpop.f32.mrf.mxu0
    %v310 = vpop.f32.mrf.mxu0
    %311 = vdwg.mxu0
    %312 = vmatprep.subr.bf16.mxu0 0
    %313 = vmatpush1.bf16.msra.mxu0 0
    %314 = vmatprep.subr.bf16.mxu0 0
    %315 = vmatpush1.bf16.msra.mxu0 0
    %316 = vmatprep.subr.bf16.mxu0 0
    %317 = vmatpush1.bf16.msra.mxu0 0
    %318 = vmatprep.subr.bf16.mxu0 0
    %319 = vmatpush1.bf16.msra.mxu0 0
    %320 = vmatprep.subr.bf16.mxu0 0
    %321 = vmatpush1.bf16.msra.mxu0 0
    %322 = vmatprep.subr.bf16.mxu0 0
    %323 = vmatpush1.bf16.msra.mxu0 0
    %324 = vmatprep.subr.bf16.mxu0 %v190
    %325 = vmatpush1.bf16.msra.mxu0 %v189
    %326 = vmatprep.subr.bf16.mxu0 %v184
    %327 = vmatpush1.bf16.msra.mxu0 %v183
    %328 = vmatprep.subr.bf16.mxu0 0
    %329 = vmatpush2.bf16.msra.mxu0 0
    %330 = vmatprep.subr.bf16.mxu0 0
    %331 = vmatpush2.bf16.msra.mxu0 0
    %332 = vmatprep.subr.bf16.mxu0 0
    %333 = vmatpush2.bf16.msra.mxu0 0
    %334 = vmatprep.subr.bf16.mxu0 0
    %335 = vmatpush2.bf16.msra.mxu0 0
    %336 = vmatprep.subr.bf16.mxu0 0
    %337 = vmatpush2.bf16.msra.mxu0 0
    %338 = vmatprep.subr.bf16.mxu0 0
    %339 = vmatpush2.bf16.msra.mxu0 0
    %340 = vmatprep.subr.bf16.mxu0 0
    %341 = vmatpush2.bf16.msra.mxu0 0
    %342 = vmatprep.subr.bf16.mxu0 0
    %343 = vmatpush2.bf16.msra.mxu0 0
    %344 = vmatprep.mubr.bf16.mxu0 0
    %345 = vmatmul.mubr.bf16.gmra.mxu0 %v205
    %v346 = vpop.f32.mrf.mxu0
    %v347 = vadd.f32 %v132, %v346
    %v348 = vpop.f32.mrf.mxu0
    %v349 = vadd.f32 %v136, %v348
    %v350 = vpop.f32.mrf.mxu0
    %v351 = vadd.f32 %v132, %v350
    %v352 = vpop.f32.mrf.mxu0
    %v353 = vadd.f32 %v136, %v352
    %354 = vmatprep.mubr.bf16.mxu0 0
    %355 = vmatmul.mubr.bf16.gmra.mxu0 %v208
    %v356 = vpop.f32.mrf.mxu0
    %v357 = vadd.f32 %v132, %v356
    %v358 = vpop.f32.mrf.mxu0
    %v359 = vadd.f32 %v136, %v358
    %v360 = vpop.f32.mrf.mxu0
    %v361 = vpop.f32.mrf.mxu0
    %362 = vdwg.mxu0
    %v363 = vmax.f32 %v245, 0.0
    %v364 = vmax.f32 %v247, 0.0
    %v365 = vmax.f32 %v296, 0.0
    %v366 = vmax.f32 %v298, 0.0
    %v367 = vmax.f32 %v347, 0.0
    %v368 = vmax.f32 %v349, 0.0
    %v369 = vmax.f32 %v249, 0.0
    %v370 = vmax.f32 %v251, 0.0
    %v371 = vmax.f32 %v300, 0.0
    %v372 = vmax.f32 %v302, 0.0
    %v373 = vmax.f32 %v351, 0.0
    %v374 = vmax.f32 %v353, 0.0
    %v375 = vmax.f32 %v255, 0.0
    %v376 = vmax.f32 %v257, 0.0
    %v377 = vmax.f32 %v306, 0.0
    %v378 = vmax.f32 %v308, 0.0
    %v379 = vmax.f32 %v357, 0.0
    %v380 = vmax.f32 %v359, 0.0
    %v381 = vpack.c.bf16 %v369, %v363
    %v382 = vpack.c.bf16 %v370, %v364
    %v383 = vpack.c.bf16 %v371, %v365
    %v384 = vpack.c.bf16 %v372, %v366
    %v385 = vpack.c.bf16 %v373, %v367
    %v386 = vpack.c.bf16 %v374, %v368
    %v387 = vpack.c.bf16 %v375, %v375
    %v388 = vpack.c.bf16 %v376, %v376
    %v389 = vpack.c.bf16 %v377, %v377
    %v390 = vpack.c.bf16 %v378, %v378
    %v391 = vpack.c.bf16 %v379, %v379
    %v392 = vpack.c.bf16 %v380, %v380
    %v393 = vld [vmem:[#allocation8] sm:$0xff]
    %v394 = vld [vmem:[#allocation8 + $0x8] sm:$0xff]
    %v395 = vld [vmem:[#allocation8 + $0x10] sm:$0xff]
    %v396 = vld [vmem:[#allocation8 + $0x18] sm:$0xff]
    %v397 = vld [vmem:[#allocation8 + $0x20] sm:$0xff]
    %v398 = vld [vmem:[#allocation8 + $0x28] sm:$0xff]
    %v399 = vld [vmem:[#allocation8 + $0x30] sm:$0xff]
    %v400 = vld [vmem:[#allocation8 + $0x38] sm:$0xff]
    %v401 = vld [vmem:[#allocation8 + $0x40] sm:$0xff]
    %v402 = vld [vmem:[#allocation8 + $0x48] sm:$0xff]
    %v403 = vld [vmem:[#allocation8 + $0x50] sm:$0xff]
    %v404 = vld [vmem:[#allocation8 + $0x58] sm:$0xff]
    %v405 = vld [vmem:[#allocation8 + $0x60] sm:$0xff]
    %v406 = vld [vmem:[#allocation8 + $0x68] sm:$0xff]
    %v407 = vld [vmem:[#allocation8 + $0x70] sm:$0xff]
    %v408 = vld [vmem:[#allocation8 + $0x78] sm:$0xff]
    %v409 = vld [vmem:[#allocation8 + $0x80] sm:$0xff]
    %v410 = vld [vmem:[#allocation8 + $0x88] sm:$0xff]
    %v411 = vld [vmem:[#allocation8 + $0x90] sm:$0xff]
    %v412 = vld [vmem:[#allocation8 + $0x98] sm:$0xff]
    %v413 = vld [vmem:[#allocation8 + $0xa0] sm:$0xff]
    %v414 = vld [vmem:[#allocation8 + $0xa8] sm:$0xff]
    %v415 = vld [vmem:[#allocation8 + $0xb0] sm:$0xff]
    %v416 = vld [vmem:[#allocation8 + $0xb8] sm:$0xff]
    %v417 = vld [vmem:[#allocation8 + $0xc0] sm:$0xff]
    %v418 = vld [vmem:[#allocation8 + $0xc8] sm:$0xff]
    %v419 = vld [vmem:[#allocation8 + $0xd0] sm:$0xff]
    %v420 = vld [vmem:[#allocation8 + $0xd8] sm:$0xff]
    %v421 = vld [vmem:[#allocation8 + $0xe0] sm:$0xff]
    %v422 = vld [vmem:[#allocation8 + $0xe8] sm:$0xff]
    %v423 = vld [vmem:[#allocation8 + $0xf0] sm:$0xff]
    %v424 = vld [vmem:[#allocation8 + $0xf8] sm:$0xff]
    %v425 = vld [vmem:[#allocation8 + $0x100] sm:$0xff]
    %v426 = vld [vmem:[#allocation8 + $0x108] sm:$0xff]
    %v427 = vld [vmem:[#allocation8 + $0x110] sm:$0xff]
    %v428 = vld [vmem:[#allocation8 + $0x118] sm:$0xff]
    %v429 = vld [vmem:[#allocation8 + $0x120] sm:$0xff]
    %v430 = vld [vmem:[#allocation8 + $0x128] sm:$0xff]
    %v431 = vld [vmem:[#allocation8 + $0x130] sm:$0xff]
    %v432 = vld [vmem:[#allocation8 + $0x138] sm:$0xff]
    %v433 = vld [vmem:[#allocation8 + $0x140] sm:$0xff]
    %v434 = vld [vmem:[#allocation8 + $0x148] sm:$0xff]
    %v435 = vld [vmem:[#allocation8 + $0x150] sm:$0xff]
    %v436 = vld [vmem:[#allocation8 + $0x158] sm:$0xff]
    %v437 = vld [vmem:[#allocation8 + $0x160] sm:$0xff]
    %v438 = vld [vmem:[#allocation8 + $0x168] sm:$0xff]
    %v439 = vld [vmem:[#allocation8 + $0x170] sm:$0xff]
    %v440 = vld [vmem:[#allocation8 + $0x178] sm:$0xff]
    %v441 = vld [vmem:[#allocation8 + $0x180] sm:$0xff]
    %v442 = vld [vmem:[#allocation8 + $0x188] sm:$0xff]
    %v443 = vld [vmem:[#allocation8 + $0x190] sm:$0xff]
    %v444 = vld [vmem:[#allocation8 + $0x198] sm:$0xff]
    %v445 = vld [vmem:[#allocation8 + $0x1a0] sm:$0xff]
    %v446 = vld [vmem:[#allocation8 + $0x1a8] sm:$0xff]
    %v447 = vld [vmem:[#allocation8 + $0x1b0] sm:$0xff]
    %v448 = vld [vmem:[#allocation8 + $0x1b8] sm:$0xff]
    %v449 = vld [vmem:[#allocation8 + $0x1c0] sm:$0xff]
    %v450 = vld [vmem:[#allocation8 + $0x1c8] sm:$0xff]
    %v451 = vld [vmem:[#allocation8 + $0x1d0] sm:$0xff]
    %v452 = vld [vmem:[#allocation8 + $0x1d8] sm:$0xff]
    %v453 = vld [vmem:[#allocation8 + $0x1e0] sm:$0xff]
    %v454 = vld [vmem:[#allocation8 + $0x1e8] sm:$0xff]
    %v455 = vld [vmem:[#allocation8 + $0x1f0] sm:$0xff]
    %v456 = vld [vmem:[#allocation8 + $0x1f8] sm:$0xff]
    %v457 = vld [vmem:[#allocation8 + $0x200] sm:$0xff]
    %v458 = vld [vmem:[#allocation8 + $0x208] sm:$0xff]
    %v459 = vld [vmem:[#allocation8 + $0x210] sm:$0xff]
    %v460 = vld [vmem:[#allocation8 + $0x218] sm:$0xff]
    %v461 = vld [vmem:[#allocation8 + $0x220] sm:$0xff]
    %v462 = vld [vmem:[#allocation8 + $0x228] sm:$0xff]
    %v463 = vld [vmem:[#allocation8 + $0x230] sm:$0xff]
    %v464 = vld [vmem:[#allocation8 + $0x238] sm:$0xff]
    %v465 = vld [vmem:[#allocation8 + $0x240] sm:$0xff]
    %v466 = vld [vmem:[#allocation8 + $0x248] sm:$0xff]
    %v467 = vld [vmem:[#allocation8 + $0x250] sm:$0xff]
    %v468 = vld [vmem:[#allocation8 + $0x258] sm:$0xff]
    %v469 = vld [vmem:[#allocation8 + $0x260] sm:$0xff]
    %v470 = vld [vmem:[#allocation8 + $0x268] sm:$0xff]
    %v471 = vld [vmem:[#allocation8 + $0x270] sm:$0xff]
    %v472 = vld [vmem:[#allocation8 + $0x278] sm:$0xff]
    %v473 = vld [vmem:[#allocation8 + $0x280] sm:$0xff]
    %v474 = vld [vmem:[#allocation8 + $0x288] sm:$0xff]
    %v475 = vld [vmem:[#allocation8 + $0x290] sm:$0xff]
    %v476 = vld [vmem:[#allocation8 + $0x298] sm:$0xff]
    %v477 = vld [vmem:[#allocation8 + $0x2a0] sm:$0xff]
    %v478 = vld [vmem:[#allocation8 + $0x2a8] sm:$0xff]
    %v479 = vld [vmem:[#allocation8 + $0x2b0] sm:$0xff]
    %v480 = vld [vmem:[#allocation8 + $0x2b8] sm:$0xff]
    %v481 = vld [vmem:[#allocation8 + $0x2c0] sm:$0xff]
    %v482 = vld [vmem:[#allocation8 + $0x2c8] sm:$0xff]
    %v483 = vld [vmem:[#allocation8 + $0x2d0] sm:$0xff]
    %v484 = vld [vmem:[#allocation8 + $0x2d8] sm:$0xff]
    %v485 = vld [vmem:[#allocation8 + $0x2e0] sm:$0xff]
    %v486 = vld [vmem:[#allocation8 + $0x2e8] sm:$0xff]
    %v487 = vld [vmem:[#allocation8 + $0x2f0] sm:$0xff]
    %v488 = vld [vmem:[#allocation8 + $0x2f8] sm:$0xff]
    %v489 = vld [vmem:[#allocation8 + $0x300] sm:$0xff]
    %v490 = vld [vmem:[#allocation8 + $0x308] sm:$0xff]
    %v491 = vld [vmem:[#allocation8 + $0x310] sm:$0xff]
    %v492 = vld [vmem:[#allocation8 + $0x318] sm:$0xff]
    %v493 = vld [vmem:[#allocation8 + $0x320] sm:$0xff]
    %v494 = vld [vmem:[#allocation8 + $0x328] sm:$0xff]
    %v495 = vld [vmem:[#allocation8 + $0x330] sm:$0xff]
    %v496 = vld [vmem:[#allocation8 + $0x338] sm:$0xff]
    %v497 = vld [vmem:[#allocation8 + $0x340] sm:$0xff]
    %v498 = vld [vmem:[#allocation8 + $0x348] sm:$0xff]
    %v499 = vld [vmem:[#allocation8 + $0x350] sm:$0xff]
    %v500 = vld [vmem:[#allocation8 + $0x358] sm:$0xff]
    %v501 = vld [vmem:[#allocation8 + $0x360] sm:$0xff]
    %v502 = vld [vmem:[#allocation8 + $0x368] sm:$0xff]
    %v503 = vld [vmem:[#allocation8 + $0x370] sm:$0xff]
    %v504 = vld [vmem:[#allocation8 + $0x378] sm:$0xff]
    %v505 = vld [vmem:[#allocation8 + $0x380] sm:$0xff]
    %v506 = vld [vmem:[#allocation8 + $0x388] sm:$0xff]
    %v507 = vld [vmem:[#allocation8 + $0x390] sm:$0xff]
    %v508 = vld [vmem:[#allocation8 + $0x398] sm:$0xff]
    %v509 = vld [vmem:[#allocation8 + $0x3a0] sm:$0xff]
    %v510 = vld [vmem:[#allocation8 + $0x3a8] sm:$0xff]
    %v511 = vld [vmem:[#allocation8 + $0x3b0] sm:$0xff]
    %v512 = vld [vmem:[#allocation8 + $0x3b8] sm:$0xff]
    %v513 = vld [vmem:[#allocation8 + $0x3c0] sm:$0xff]
    %v514 = vld [vmem:[#allocation8 + $0x3c8] sm:$0xff]
    %v515 = vld [vmem:[#allocation8 + $0x3d0] sm:$0xff]
    %v516 = vld [vmem:[#allocation8 + $0x3d8] sm:$0xff]
    %v517 = vld [vmem:[#allocation8 + $0x3e0] sm:$0xff]
    %v518 = vld [vmem:[#allocation8 + $0x3e8] sm:$0xff]
    %v519 = vld [vmem:[#allocation8 + $0x3f0] sm:$0xff]
    %v520 = vld [vmem:[#allocation8 + $0x3f8] sm:$0xff]
    %v521 = vld [vmem:[#allocation8 + $0x400] sm:$0xff]
    %v522 = vld [vmem:[#allocation8 + $0x408] sm:$0xff]
    %v523 = vld [vmem:[#allocation8 + $0x410] sm:$0xff]
    %v524 = vld [vmem:[#allocation8 + $0x418] sm:$0xff]
    %v525 = vld [vmem:[#allocation8 + $0x420] sm:$0xff]
    %v526 = vld [vmem:[#allocation8 + $0x428] sm:$0xff]
    %v527 = vld [vmem:[#allocation8 + $0x430] sm:$0xff]
    %v528 = vld [vmem:[#allocation8 + $0x438] sm:$0xff]
    %v529 = vld [vmem:[#allocation8 + $0x440] sm:$0xff]
    %v530 = vld [vmem:[#allocation8 + $0x448] sm:$0xff]
    %v531 = vld [vmem:[#allocation8 + $0x450] sm:$0xff]
    %v532 = vld [vmem:[#allocation8 + $0x458] sm:$0xff]
    %v533 = vld [vmem:[#allocation8 + $0x460] sm:$0xff]
    %v534 = vld [vmem:[#allocation8 + $0x468] sm:$0xff]
    %v535 = vld [vmem:[#allocation8 + $0x470] sm:$0xff]
    %v536 = vld [vmem:[#allocation8 + $0x478] sm:$0xff]
    %v537 = vld [vmem:[#allocation8 + $0x480] sm:$0xff]
    %v538 = vld [vmem:[#allocation8 + $0x488] sm:$0xff]
    %v539 = vld [vmem:[#allocation8 + $0x490] sm:$0xff]
    %v540 = vld [vmem:[#allocation8 + $0x498] sm:$0xff]
    %v541 = vld [vmem:[#allocation8 + $0x4a0] sm:$0xff]
    %v542 = vld [vmem:[#allocation8 + $0x4a8] sm:$0xff]
    %v543 = vld [vmem:[#allocation8 + $0x4b0] sm:$0xff]
    %v544 = vld [vmem:[#allocation8 + $0x4b8] sm:$0xff]
    %v545 = vld [vmem:[#allocation8 + $0x4c0] sm:$0xff]
    %v546 = vld [vmem:[#allocation8 + $0x4c8] sm:$0xff]
    %v547 = vld [vmem:[#allocation8 + $0x4d0] sm:$0xff]
    %v548 = vld [vmem:[#allocation8 + $0x4d8] sm:$0xff]
    %v549 = vld [vmem:[#allocation8 + $0x4e0] sm:$0xff]
    %v550 = vld [vmem:[#allocation8 + $0x4e8] sm:$0xff]
    %v551 = vld [vmem:[#allocation8 + $0x4f0] sm:$0xff]
    %v552 = vld [vmem:[#allocation8 + $0x4f8] sm:$0xff]
    %v553 = vld [vmem:[#allocation8 + $0x500] sm:$0xff]
    %v554 = vld [vmem:[#allocation8 + $0x508] sm:$0xff]
    %v555 = vld [vmem:[#allocation8 + $0x510] sm:$0xff]
    %v556 = vld [vmem:[#allocation8 + $0x518] sm:$0xff]
    %v557 = vld [vmem:[#allocation8 + $0x520] sm:$0xff]
    %v558 = vld [vmem:[#allocation8 + $0x528] sm:$0xff]
    %v559 = vld [vmem:[#allocation8 + $0x530] sm:$0xff]
    %v560 = vld [vmem:[#allocation8 + $0x538] sm:$0xff]
    %v561 = vld [vmem:[#allocation8 + $0x540] sm:$0xff]
    %v562 = vld [vmem:[#allocation8 + $0x548] sm:$0xff]
    %v563 = vld [vmem:[#allocation8 + $0x550] sm:$0xff]
    %v564 = vld [vmem:[#allocation8 + $0x558] sm:$0xff]
    %v565 = vld [vmem:[#allocation8 + $0x560] sm:$0xff]
    %v566 = vld [vmem:[#allocation8 + $0x568] sm:$0xff]
    %v567 = vld [vmem:[#allocation8 + $0x570] sm:$0xff]
    %v568 = vld [vmem:[#allocation8 + $0x578] sm:$0xff]
    %v569 = vld [vmem:[#allocation8 + $0x580] sm:$0xff]
    %v570 = vld [vmem:[#allocation8 + $0x588] sm:$0xff]
    %v571 = vld [vmem:[#allocation8 + $0x590] sm:$0xff]
    %v572 = vld [vmem:[#allocation8 + $0x598] sm:$0xff]
    %v573 = vld [vmem:[#allocation8 + $0x5a0] sm:$0xff]
    %v574 = vld [vmem:[#allocation8 + $0x5a8] sm:$0xff]
    %v575 = vld [vmem:[#allocation8 + $0x5b0] sm:$0xff]
    %v576 = vld [vmem:[#allocation8 + $0x5b8] sm:$0xff]
    %v577 = vld [vmem:[#allocation8 + $0x5c0] sm:$0xff]
    %v578 = vld [vmem:[#allocation8 + $0x5c8] sm:$0xff]
    %v579 = vld [vmem:[#allocation8 + $0x5d0] sm:$0xff]
    %v580 = vld [vmem:[#allocation8 + $0x5d8] sm:$0xff]
    %v581 = vld [vmem:[#allocation8 + $0x5e0] sm:$0xff]
    %v582 = vld [vmem:[#allocation8 + $0x5e8] sm:$0xff]
    %v583 = vld [vmem:[#allocation8 + $0x5f0] sm:$0xff]
    %v584 = vld [vmem:[#allocation8 + $0x5f8] sm:$0xff]
    %v585 = vld [vmem:[%s4] sm:$0xf]
    %v587 = vlaneseq
    %v588 = vshrl.u32 %v587, 7
    %v589 = vsub.s32 0, %v588
    %v590 = vrot.slane %v585, %v589
    %v591 = vlaneseq
    %v592 = vshrl.u32 %v591, 7
    %v593 = vsub.s32 1, %v592
    %v594 = vrot.slane %v585, %v593
    %v595 = vlaneseq
    %v596 = vshrl.u32 %v595, 7
    %v597 = vsub.s32 2, %v596
    %v598 = vrot.slane %v585, %v597
    %v599 = vlaneseq
    %v600 = vshrl.u32 %v599, 7
    %v601 = vsub.s32 3, %v600
    %v602 = vrot.slane %v585, %v601
    %v799 = vunpack.c.l.b16 %v393
    %v800 = vunpack.c.h.b16 %v393
    %v801 = vunpack.c.l.b16 %v394
    %v802 = vunpack.c.h.b16 %v394
    %v803 = vunpack.c.l.b16 %v395
    %v804 = vunpack.c.h.b16 %v395
    %v805 = vunpack.c.l.b16 %v396
    %v806 = vunpack.c.h.b16 %v396
    %v807 = vunpack.c.l.b16 %v397
    %v808 = vunpack.c.h.b16 %v397
    %v809 = vunpack.c.l.b16 %v398
    %v810 = vunpack.c.h.b16 %v398
    %v811 = vunpack.c.l.b16 %v399
    %v812 = vunpack.c.h.b16 %v399
    %v813 = vunpack.c.l.b16 %v400
    %v814 = vunpack.c.h.b16 %v400
    %v815 = vunpack.c.l.b16 %v401
    %v816 = vunpack.c.h.b16 %v401
    %v817 = vunpack.c.l.b16 %v402
    %v818 = vunpack.c.h.b16 %v402
    %v819 = vunpack.c.l.b16 %v403
    %v820 = vunpack.c.h.b16 %v403
    %v821 = vunpack.c.l.b16 %v404
    %v822 = vunpack.c.h.b16 %v404
    %v823 = vunpack.c.l.b16 %v405
    %v824 = vunpack.c.h.b16 %v405
    %v825 = vunpack.c.l.b16 %v406
    %v826 = vunpack.c.h.b16 %v406
    %v827 = vunpack.c.l.b16 %v407
    %v828 = vunpack.c.h.b16 %v407
    %v829 = vunpack.c.l.b16 %v408
    %v830 = vunpack.c.h.b16 %v408
    %v831 = vunpack.c.l.b16 %v409
    %v832 = vunpack.c.h.b16 %v409
    %v833 = vunpack.c.l.b16 %v410
    %v834 = vunpack.c.h.b16 %v410
    %v835 = vunpack.c.l.b16 %v411
    %v836 = vunpack.c.h.b16 %v411
    %v837 = vunpack.c.l.b16 %v412
    %v838 = vunpack.c.h.b16 %v412
    %v839 = vunpack.c.l.b16 %v413
    %v840 = vunpack.c.h.b16 %v413
    %v841 = vunpack.c.l.b16 %v414
    %v842 = vunpack.c.h.b16 %v414
    %v843 = vunpack.c.l.b16 %v415
    %v844 = vunpack.c.h.b16 %v415
    %v845 = vunpack.c.l.b16 %v416
    %v846 = vunpack.c.h.b16 %v416
    %v847 = vunpack.c.l.b16 %v417
    %v848 = vunpack.c.h.b16 %v417
    %v849 = vunpack.c.l.b16 %v418
    %v850 = vunpack.c.h.b16 %v418
    %v851 = vunpack.c.l.b16 %v419
    %v852 = vunpack.c.h.b16 %v419
    %v853 = vunpack.c.l.b16 %v420
    %v854 = vunpack.c.h.b16 %v420
    %v855 = vunpack.c.l.b16 %v421
    %v856 = vunpack.c.h.b16 %v421
    %v857 = vunpack.c.l.b16 %v422
    %v858 = vunpack.c.h.b16 %v422
    %v859 = vunpack.c.l.b16 %v423
    %v860 = vunpack.c.h.b16 %v423
    %v861 = vunpack.c.l.b16 %v424
    %v862 = vunpack.c.h.b16 %v424
    %v863 = vunpack.c.l.b16 %v425
    %v864 = vunpack.c.h.b16 %v425
    %v865 = vunpack.c.l.b16 %v426
    %v866 = vunpack.c.h.b16 %v426
    %v867 = vunpack.c.l.b16 %v427
    %v868 = vunpack.c.h.b16 %v427
    %v869 = vunpack.c.l.b16 %v428
    %v870 = vunpack.c.h.b16 %v428
    %v871 = vunpack.c.l.b16 %v429
    %v872 = vunpack.c.h.b16 %v429
    %v873 = vunpack.c.l.b16 %v430
    %v874 = vunpack.c.h.b16 %v430
    %v875 = vunpack.c.l.b16 %v431
    %v876 = vunpack.c.h.b16 %v431
    %v877 = vunpack.c.l.b16 %v432
    %v878 = vunpack.c.h.b16 %v432
    %v879 = vunpack.c.l.b16 %v433
    %v880 = vunpack.c.h.b16 %v433
    %v881 = vunpack.c.l.b16 %v434
    %v882 = vunpack.c.h.b16 %v434
    %v883 = vunpack.c.l.b16 %v435
    %v884 = vunpack.c.h.b16 %v435
    %v885 = vunpack.c.l.b16 %v436
    %v886 = vunpack.c.h.b16 %v436
    %v887 = vunpack.c.l.b16 %v437
    %v888 = vunpack.c.h.b16 %v437
    %v889 = vunpack.c.l.b16 %v438
    %v890 = vunpack.c.h.b16 %v438
    %v891 = vunpack.c.l.b16 %v439
    %v892 = vunpack.c.h.b16 %v439
    %v893 = vunpack.c.l.b16 %v440
    %v894 = vunpack.c.h.b16 %v440
    %v895 = vunpack.c.l.b16 %v441
    %v896 = vunpack.c.h.b16 %v441
    %v897 = vunpack.c.l.b16 %v442
    %v898 = vunpack.c.h.b16 %v442
    %v899 = vunpack.c.l.b16 %v443
    %v900 = vunpack.c.h.b16 %v443
    %v901 = vunpack.c.l.b16 %v444
    %v902 = vunpack.c.h.b16 %v444
    %v903 = vunpack.c.l.b16 %v445
    %v904 = vunpack.c.h.b16 %v445
    %v905 = vunpack.c.l.b16 %v446
    %v906 = vunpack.c.h.b16 %v446
    %v907 = vunpack.c.l.b16 %v447
    %v908 = vunpack.c.h.b16 %v447
    %v909 = vunpack.c.l.b16 %v448
    %v910 = vunpack.c.h.b16 %v448
    %v911 = vunpack.c.l.b16 %v449
    %v912 = vunpack.c.h.b16 %v449
    %v913 = vunpack.c.l.b16 %v450
    %v914 = vunpack.c.h.b16 %v450
    %v915 = vunpack.c.l.b16 %v451
    %v916 = vunpack.c.h.b16 %v451
    %v917 = vunpack.c.l.b16 %v452
    %v918 = vunpack.c.h.b16 %v452
    %v919 = vunpack.c.l.b16 %v453
    %v920 = vunpack.c.h.b16 %v453
    %v921 = vunpack.c.l.b16 %v454
    %v922 = vunpack.c.h.b16 %v454
    %v923 = vunpack.c.l.b16 %v455
    %v924 = vunpack.c.h.b16 %v455
    %v925 = vunpack.c.l.b16 %v456
    %v926 = vunpack.c.h.b16 %v456
    %v927 = vunpack.c.l.b16 %v457
    %v928 = vunpack.c.h.b16 %v457
    %v929 = vunpack.c.l.b16 %v458
    %v930 = vunpack.c.h.b16 %v458
    %v931 = vunpack.c.l.b16 %v459
    %v932 = vunpack.c.h.b16 %v459
    %v933 = vunpack.c.l.b16 %v460
    %v934 = vunpack.c.h.b16 %v460
    %v935 = vunpack.c.l.b16 %v461
    %v936 = vunpack.c.h.b16 %v461
    %v937 = vunpack.c.l.b16 %v462
    %v938 = vunpack.c.h.b16 %v462
    %v939 = vunpack.c.l.b16 %v463
    %v940 = vunpack.c.h.b16 %v463
    %v941 = vunpack.c.l.b16 %v464
    %v942 = vunpack.c.h.b16 %v464
    %v943 = vunpack.c.l.b16 %v465
    %v944 = vunpack.c.h.b16 %v465
    %v945 = vunpack.c.l.b16 %v466
    %v946 = vunpack.c.h.b16 %v466
    %v947 = vunpack.c.l.b16 %v467
    %v948 = vunpack.c.h.b16 %v467
    %v949 = vunpack.c.l.b16 %v468
    %v950 = vunpack.c.h.b16 %v468
    %v951 = vunpack.c.l.b16 %v469
    %v952 = vunpack.c.h.b16 %v469
    %v953 = vunpack.c.l.b16 %v470
    %v954 = vunpack.c.h.b16 %v470
    %v955 = vunpack.c.l.b16 %v471
    %v956 = vunpack.c.h.b16 %v471
    %v957 = vunpack.c.l.b16 %v472
    %v958 = vunpack.c.h.b16 %v472
    %v959 = vunpack.c.l.b16 %v473
    %v960 = vunpack.c.h.b16 %v473
    %v961 = vunpack.c.l.b16 %v474
    %v962 = vunpack.c.h.b16 %v474
    %v963 = vunpack.c.l.b16 %v475
    %v964 = vunpack.c.h.b16 %v475
    %v965 = vunpack.c.l.b16 %v476
    %v966 = vunpack.c.h.b16 %v476
    %v967 = vunpack.c.l.b16 %v477
    %v968 = vunpack.c.h.b16 %v477
    %v969 = vunpack.c.l.b16 %v478
    %v970 = vunpack.c.h.b16 %v478
    %v971 = vunpack.c.l.b16 %v479
    %v972 = vunpack.c.h.b16 %v479
    %v973 = vunpack.c.l.b16 %v480
    %v974 = vunpack.c.h.b16 %v480
    %v975 = vunpack.c.l.b16 %v481
    %v976 = vunpack.c.h.b16 %v481
    %v977 = vunpack.c.l.b16 %v482
    %v978 = vunpack.c.h.b16 %v482
    %v979 = vunpack.c.l.b16 %v483
    %v980 = vunpack.c.h.b16 %v483
    %v981 = vunpack.c.l.b16 %v484
    %v982 = vunpack.c.h.b16 %v484
    %v983 = vunpack.c.l.b16 %v485
    %v984 = vunpack.c.h.b16 %v485
    %v985 = vunpack.c.l.b16 %v486
    %v986 = vunpack.c.h.b16 %v486
    %v987 = vunpack.c.l.b16 %v487
    %v988 = vunpack.c.h.b16 %v487
    %v989 = vunpack.c.l.b16 %v488
    %v990 = vunpack.c.h.b16 %v488
    %v991 = vunpack.c.l.b16 %v489
    %v992 = vunpack.c.h.b16 %v489
    %v993 = vunpack.c.l.b16 %v490
    %v994 = vunpack.c.h.b16 %v490
    %v995 = vunpack.c.l.b16 %v491
    %v996 = vunpack.c.h.b16 %v491
    %v997 = vunpack.c.l.b16 %v492
    %v998 = vunpack.c.h.b16 %v492
    %v999 = vunpack.c.l.b16 %v493
    %v1000 = vunpack.c.h.b16 %v493
    %v1001 = vunpack.c.l.b16 %v494
    %v1002 = vunpack.c.h.b16 %v494
    %v1003 = vunpack.c.l.b16 %v495
    %v1004 = vunpack.c.h.b16 %v495
    %v1005 = vunpack.c.l.b16 %v496
    %v1006 = vunpack.c.h.b16 %v496
    %v1007 = vunpack.c.l.b16 %v497
    %v1008 = vunpack.c.h.b16 %v497
    %v1009 = vunpack.c.l.b16 %v498
    %v1010 = vunpack.c.h.b16 %v498
    %v1011 = vunpack.c.l.b16 %v499
    %v1012 = vunpack.c.h.b16 %v499
    %v1013 = vunpack.c.l.b16 %v500
    %v1014 = vunpack.c.h.b16 %v500
    %v1015 = vunpack.c.l.b16 %v501
    %v1016 = vunpack.c.h.b16 %v501
    %v1017 = vunpack.c.l.b16 %v502
    %v1018 = vunpack.c.h.b16 %v502
    %v1019 = vunpack.c.l.b16 %v503
    %v1020 = vunpack.c.h.b16 %v503
    %v1021 = vunpack.c.l.b16 %v504
    %v1022 = vunpack.c.h.b16 %v504
    %v1023 = vunpack.c.l.b16 %v505
    %v1024 = vunpack.c.h.b16 %v505
    %v1025 = vunpack.c.l.b16 %v506
    %v1026 = vunpack.c.h.b16 %v506
    %v1027 = vunpack.c.l.b16 %v507
    %v1028 = vunpack.c.h.b16 %v507
    %v1029 = vunpack.c.l.b16 %v508
    %v1030 = vunpack.c.h.b16 %v508
    %v1031 = vunpack.c.l.b16 %v509
    %v1032 = vunpack.c.h.b16 %v509
    %v1033 = vunpack.c.l.b16 %v510
    %v1034 = vunpack.c.h.b16 %v510
    %v1035 = vunpack.c.l.b16 %v511
    %v1036 = vunpack.c.h.b16 %v511
    %v1037 = vunpack.c.l.b16 %v512
    %v1038 = vunpack.c.h.b16 %v512
    %v1039 = vunpack.c.l.b16 %v513
    %v1040 = vunpack.c.h.b16 %v513
    %v1041 = vunpack.c.l.b16 %v514
    %v1042 = vunpack.c.h.b16 %v514
    %v1043 = vunpack.c.l.b16 %v515
    %v1044 = vunpack.c.h.b16 %v515
    %v1045 = vunpack.c.l.b16 %v516
    %v1046 = vunpack.c.h.b16 %v516
    %v1047 = vunpack.c.l.b16 %v517
    %v1048 = vunpack.c.h.b16 %v517
    %v1049 = vunpack.c.l.b16 %v518
    %v1050 = vunpack.c.h.b16 %v518
    %v1051 = vunpack.c.l.b16 %v519
    %v1052 = vunpack.c.h.b16 %v519
    %v1053 = vunpack.c.l.b16 %v520
    %v1054 = vunpack.c.h.b16 %v520
    %v1055 = vunpack.c.l.b16 %v521
    %v1056 = vunpack.c.h.b16 %v521
    %v1057 = vunpack.c.l.b16 %v522
    %v1058 = vunpack.c.h.b16 %v522
    %v1059 = vunpack.c.l.b16 %v523
    %v1060 = vunpack.c.h.b16 %v523
    %v1061 = vunpack.c.l.b16 %v524
    %v1062 = vunpack.c.h.b16 %v524
    %v1063 = vunpack.c.l.b16 %v525
    %v1064 = vunpack.c.h.b16 %v525
    %v1065 = vunpack.c.l.b16 %v526
    %v1066 = vunpack.c.h.b16 %v526
    %v1067 = vunpack.c.l.b16 %v527
    %v1068 = vunpack.c.h.b16 %v527
    %v1069 = vunpack.c.l.b16 %v528
    %v1070 = vunpack.c.h.b16 %v528
    %v1071 = vunpack.c.l.b16 %v529
    %v1072 = vunpack.c.h.b16 %v529
    %v1073 = vunpack.c.l.b16 %v530
    %v1074 = vunpack.c.h.b16 %v530
    %v1075 = vunpack.c.l.b16 %v531
    %v1076 = vunpack.c.h.b16 %v531
    %v1077 = vunpack.c.l.b16 %v532
    %v1078 = vunpack.c.h.b16 %v532
    %v1079 = vunpack.c.l.b16 %v533
    %v1080 = vunpack.c.h.b16 %v533
    %v1081 = vunpack.c.l.b16 %v534
    %v1082 = vunpack.c.h.b16 %v534
    %v1083 = vunpack.c.l.b16 %v535
    %v1084 = vunpack.c.h.b16 %v535
    %v1085 = vunpack.c.l.b16 %v536
    %v1086 = vunpack.c.h.b16 %v536
    %v1087 = vunpack.c.l.b16 %v537
    %v1088 = vunpack.c.h.b16 %v537
    %v1089 = vunpack.c.l.b16 %v538
    %v1090 = vunpack.c.h.b16 %v538
    %v1091 = vunpack.c.l.b16 %v539
    %v1092 = vunpack.c.h.b16 %v539
    %v1093 = vunpack.c.l.b16 %v540
    %v1094 = vunpack.c.h.b16 %v540
    %v1095 = vunpack.c.l.b16 %v541
    %v1096 = vunpack.c.h.b16 %v541
    %v1097 = vunpack.c.l.b16 %v542
    %v1098 = vunpack.c.h.b16 %v542
    %v1099 = vunpack.c.l.b16 %v543
    %v1100 = vunpack.c.h.b16 %v543
    %v1101 = vunpack.c.l.b16 %v544
    %v1102 = vunpack.c.h.b16 %v544
    %v1103 = vunpack.c.l.b16 %v545
    %v1104 = vunpack.c.h.b16 %v545
    %v1105 = vunpack.c.l.b16 %v546
    %v1106 = vunpack.c.h.b16 %v546
    %v1107 = vunpack.c.l.b16 %v547
    %v1108 = vunpack.c.h.b16 %v547
    %v1109 = vunpack.c.l.b16 %v548
    %v1110 = vunpack.c.h.b16 %v548
    %v1111 = vunpack.c.l.b16 %v549
    %v1112 = vunpack.c.h.b16 %v549
    %v1113 = vunpack.c.l.b16 %v550
    %v1114 = vunpack.c.h.b16 %v550
    %v1115 = vunpack.c.l.b16 %v551
    %v1116 = vunpack.c.h.b16 %v551
    %v1117 = vunpack.c.l.b16 %v552
    %v1118 = vunpack.c.h.b16 %v552
    %v1119 = vunpack.c.l.b16 %v553
    %v1120 = vunpack.c.h.b16 %v553
    %v1121 = vunpack.c.l.b16 %v554
    %v1122 = vunpack.c.h.b16 %v554
    %v1123 = vunpack.c.l.b16 %v555
    %v1124 = vunpack.c.h.b16 %v555
    %v1125 = vunpack.c.l.b16 %v556
    %v1126 = vunpack.c.h.b16 %v556
    %v1127 = vunpack.c.l.b16 %v557
    %v1128 = vunpack.c.h.b16 %v557
    %v1129 = vunpack.c.l.b16 %v558
    %v1130 = vunpack.c.h.b16 %v558
    %v1131 = vunpack.c.l.b16 %v559
    %v1132 = vunpack.c.h.b16 %v559
    %v1133 = vunpack.c.l.b16 %v560
    %v1134 = vunpack.c.h.b16 %v560
    %v1135 = vunpack.c.l.b16 %v561
    %v1136 = vunpack.c.h.b16 %v561
    %v1137 = vunpack.c.l.b16 %v562
    %v1138 = vunpack.c.h.b16 %v562
    %v1139 = vunpack.c.l.b16 %v563
    %v1140 = vunpack.c.h.b16 %v563
    %v1141 = vunpack.c.l.b16 %v564
    %v1142 = vunpack.c.h.b16 %v564
    %v1143 = vunpack.c.l.b16 %v565
    %v1144 = vunpack.c.h.b16 %v565
    %v1145 = vunpack.c.l.b16 %v566
    %v1146 = vunpack.c.h.b16 %v566
    %v1147 = vunpack.c.l.b16 %v567
    %v1148 = vunpack.c.h.b16 %v567
    %v1149 = vunpack.c.l.b16 %v568
    %v1150 = vunpack.c.h.b16 %v568
    %v1151 = vunpack.c.l.b16 %v569
    %v1152 = vunpack.c.h.b16 %v569
    %v1153 = vunpack.c.l.b16 %v570
    %v1154 = vunpack.c.h.b16 %v570
    %v1155 = vunpack.c.l.b16 %v571
    %v1156 = vunpack.c.h.b16 %v571
    %v1157 = vunpack.c.l.b16 %v572
    %v1158 = vunpack.c.h.b16 %v572
    %v1159 = vunpack.c.l.b16 %v573
    %v1160 = vunpack.c.h.b16 %v573
    %v1161 = vunpack.c.l.b16 %v574
    %v1162 = vunpack.c.h.b16 %v574
    %v1163 = vunpack.c.l.b16 %v575
    %v1164 = vunpack.c.h.b16 %v575
    %v1165 = vunpack.c.l.b16 %v576
    %v1166 = vunpack.c.h.b16 %v576
    %v1167 = vunpack.c.l.b16 %v577
    %v1168 = vunpack.c.h.b16 %v577
    %v1169 = vunpack.c.l.b16 %v578
    %v1170 = vunpack.c.h.b16 %v578
    %v1171 = vunpack.c.l.b16 %v579
    %v1172 = vunpack.c.h.b16 %v579
    %v1173 = vunpack.c.l.b16 %v580
    %v1174 = vunpack.c.h.b16 %v580
    %v1175 = vunpack.c.l.b16 %v581
    %v1176 = vunpack.c.h.b16 %v581
    %v1177 = vunpack.c.l.b16 %v582
    %v1178 = vunpack.c.h.b16 %v582
    %v1179 = vunpack.c.l.b16 %v583
    %v1180 = vunpack.c.h.b16 %v583
    %v1181 = vunpack.c.l.b16 %v584
    %v1182 = vunpack.c.h.b16 %v584
    %v1183 = vpack.c.b16 %v803, %v799
    %v1184 = vpack.c.b16 %v804, %v800
    %v1185 = vpack.c.b16 %v805, %v801
    %v1186 = vpack.c.b16 %v806, %v802
    %v1187 = vpack.c.b16 %v811, %v807
    %v1188 = vpack.c.b16 %v812, %v808
    %v1189 = vpack.c.b16 %v813, %v809
    %v1190 = vpack.c.b16 %v814, %v810
    %v1191 = vpack.c.b16 %v819, %v815
    %v1192 = vpack.c.b16 %v820, %v816
    %v1193 = vpack.c.b16 %v821, %v817
    %v1194 = vpack.c.b16 %v822, %v818
    %v1195 = vpack.c.b16 %v827, %v823
    %v1196 = vpack.c.b16 %v828, %v824
    %v1197 = vpack.c.b16 %v829, %v825
    %v1198 = vpack.c.b16 %v830, %v826
    %v1199 = vpack.c.b16 %v835, %v831
    %v1200 = vpack.c.b16 %v836, %v832
    %v1201 = vpack.c.b16 %v837, %v833
    %v1202 = vpack.c.b16 %v838, %v834
    %v1203 = vpack.c.b16 %v843, %v839
    %v1204 = vpack.c.b16 %v844, %v840
    %v1205 = vpack.c.b16 %v845, %v841
    %v1206 = vpack.c.b16 %v846, %v842
    %v1207 = vpack.c.b16 %v851, %v847
    %v1208 = vpack.c.b16 %v852, %v848
    %v1209 = vpack.c.b16 %v853, %v849
    %v1210 = vpack.c.b16 %v854, %v850
    %v1211 = vpack.c.b16 %v859, %v855
    %v1212 = vpack.c.b16 %v860, %v856
    %v1213 = vpack.c.b16 %v861, %v857
    %v1214 = vpack.c.b16 %v862, %v858
    %v1215 = vpack.c.b16 %v867, %v863
    %v1216 = vpack.c.b16 %v868, %v864
    %v1217 = vpack.c.b16 %v869, %v865
    %v1218 = vpack.c.b16 %v870, %v866
    %v1219 = vpack.c.b16 %v875, %v871
    %v1220 = vpack.c.b16 %v876, %v872
    %v1221 = vpack.c.b16 %v877, %v873
    %v1222 = vpack.c.b16 %v878, %v874
    %v1223 = vpack.c.b16 %v883, %v879
    %v1224 = vpack.c.b16 %v884, %v880
    %v1225 = vpack.c.b16 %v885, %v881
    %v1226 = vpack.c.b16 %v886, %v882
    %v1227 = vpack.c.b16 %v891, %v887
    %v1228 = vpack.c.b16 %v892, %v888
    %v1229 = vpack.c.b16 %v893, %v889
    %v1230 = vpack.c.b16 %v894, %v890
    %v1231 = vpack.c.b16 %v899, %v895
    %v1232 = vpack.c.b16 %v900, %v896
    %v1233 = vpack.c.b16 %v901, %v897
    %v1234 = vpack.c.b16 %v902, %v898
    %v1235 = vpack.c.b16 %v907, %v903
    %v1236 = vpack.c.b16 %v908, %v904
    %v1237 = vpack.c.b16 %v909, %v905
    %v1238 = vpack.c.b16 %v910, %v906
    %v1239 = vpack.c.b16 %v915, %v911
    %v1240 = vpack.c.b16 %v916, %v912
    %v1241 = vpack.c.b16 %v917, %v913
    %v1242 = vpack.c.b16 %v918, %v914
    %v1243 = vpack.c.b16 %v923, %v919
    %v1244 = vpack.c.b16 %v924, %v920
    %v1245 = vpack.c.b16 %v925, %v921
    %v1246 = vpack.c.b16 %v926, %v922
    %v1247 = vpack.c.b16 %v931, %v927
    %v1248 = vpack.c.b16 %v932, %v928
    %v1249 = vpack.c.b16 %v933, %v929
    %v1250 = vpack.c.b16 %v934, %v930
    %v1251 = vpack.c.b16 %v939, %v935
    %v1252 = vpack.c.b16 %v940, %v936
    %v1253 = vpack.c.b16 %v941, %v937
    %v1254 = vpack.c.b16 %v942, %v938
    %v1255 = vpack.c.b16 %v947, %v943
    %v1256 = vpack.c.b16 %v948, %v944
    %v1257 = vpack.c.b16 %v949, %v945
    %v1258 = vpack.c.b16 %v950, %v946
    %v1259 = vpack.c.b16 %v955, %v951
    %v1260 = vpack.c.b16 %v956, %v952
    %v1261 = vpack.c.b16 %v957, %v953
    %v1262 = vpack.c.b16 %v958, %v954
    %v1263 = vpack.c.b16 %v963, %v959
    %v1264 = vpack.c.b16 %v964, %v960
    %v1265 = vpack.c.b16 %v965, %v961
    %v1266 = vpack.c.b16 %v966, %v962
    %v1267 = vpack.c.b16 %v971, %v967
    %v1268 = vpack.c.b16 %v972, %v968
    %v1269 = vpack.c.b16 %v973, %v969
    %v1270 = vpack.c.b16 %v974, %v970
    %v1271 = vpack.c.b16 %v979, %v975
    %v1272 = vpack.c.b16 %v980, %v976
    %v1273 = vpack.c.b16 %v981, %v977
    %v1274 = vpack.c.b16 %v982, %v978
    %v1275 = vpack.c.b16 %v987, %v983
    %v1276 = vpack.c.b16 %v988, %v984
    %v1277 = vpack.c.b16 %v989, %v985
    %v1278 = vpack.c.b16 %v990, %v986
    %v1279 = vpack.c.b16 %v995, %v991
    %v1280 = vpack.c.b16 %v996, %v992
    %v1281 = vpack.c.b16 %v997, %v993
    %v1282 = vpack.c.b16 %v998, %v994
    %v1283 = vpack.c.b16 %v1003, %v999
    %v1284 = vpack.c.b16 %v1004, %v1000
    %v1285 = vpack.c.b16 %v1005, %v1001
    %v1286 = vpack.c.b16 %v1006, %v1002
    %v1287 = vpack.c.b16 %v1011, %v1007
    %v1288 = vpack.c.b16 %v1012, %v1008
    %v1289 = vpack.c.b16 %v1013, %v1009
    %v1290 = vpack.c.b16 %v1014, %v1010
    %v1291 = vpack.c.b16 %v1019, %v1015
    %v1292 = vpack.c.b16 %v1020, %v1016
    %v1293 = vpack.c.b16 %v1021, %v1017
    %v1294 = vpack.c.b16 %v1022, %v1018
    %v1295 = vpack.c.b16 %v1027, %v1023
    %v1296 = vpack.c.b16 %v1028, %v1024
    %v1297 = vpack.c.b16 %v1029, %v1025
    %v1298 = vpack.c.b16 %v1030, %v1026
    %v1299 = vpack.c.b16 %v1035, %v1031
    %v1300 = vpack.c.b16 %v1036, %v1032
    %v1301 = vpack.c.b16 %v1037, %v1033
    %v1302 = vpack.c.b16 %v1038, %v1034
    %v1303 = vpack.c.b16 %v1043, %v1039
    %v1304 = vpack.c.b16 %v1044, %v1040
    %v1305 = vpack.c.b16 %v1045, %v1041
    %v1306 = vpack.c.b16 %v1046, %v1042
    %v1307 = vpack.c.b16 %v1051, %v1047
    %v1308 = vpack.c.b16 %v1052, %v1048
    %v1309 = vpack.c.b16 %v1053, %v1049
    %v1310 = vpack.c.b16 %v1054, %v1050
    %v1311 = vpack.c.b16 %v1059, %v1055
    %v1312 = vpack.c.b16 %v1060, %v1056
    %v1313 = vpack.c.b16 %v1061, %v1057
    %v1314 = vpack.c.b16 %v1062, %v1058
    %v1315 = vpack.c.b16 %v1067, %v1063
    %v1316 = vpack.c.b16 %v1068, %v1064
    %v1317 = vpack.c.b16 %v1069, %v1065
    %v1318 = vpack.c.b16 %v1070, %v1066
    %v1319 = vpack.c.b16 %v1075, %v1071
    %v1320 = vpack.c.b16 %v1076, %v1072
    %v1321 = vpack.c.b16 %v1077, %v1073
    %v1322 = vpack.c.b16 %v1078, %v1074
    %v1323 = vpack.c.b16 %v1083, %v1079
    %v1324 = vpack.c.b16 %v1084, %v1080
    %v1325 = vpack.c.b16 %v1085, %v1081
    %v1326 = vpack.c.b16 %v1086, %v1082
    %v1327 = vpack.c.b16 %v1091, %v1087
    %v1328 = vpack.c.b16 %v1092, %v1088
    %v1329 = vpack.c.b16 %v1093, %v1089
    %v1330 = vpack.c.b16 %v1094, %v1090
    %v1331 = vpack.c.b16 %v1099, %v1095
    %v1332 = vpack.c.b16 %v1100, %v1096
    %v1333 = vpack.c.b16 %v1101, %v1097
    %v1334 = vpack.c.b16 %v1102, %v1098
    %v1335 = vpack.c.b16 %v1107, %v1103
    %v1336 = vpack.c.b16 %v1108, %v1104
    %v1337 = vpack.c.b16 %v1109, %v1105
    %v1338 = vpack.c.b16 %v1110, %v1106
    %v1339 = vpack.c.b16 %v1115, %v1111
    %v1340 = vpack.c.b16 %v1116, %v1112
    %v1341 = vpack.c.b16 %v1117, %v1113
    %v1342 = vpack.c.b16 %v1118, %v1114
    %v1343 = vpack.c.b16 %v1123, %v1119
    %v1344 = vpack.c.b16 %v1124, %v1120
    %v1345 = vpack.c.b16 %v1125, %v1121
    %v1346 = vpack.c.b16 %v1126, %v1122
    %v1347 = vpack.c.b16 %v1131, %v1127
    %v1348 = vpack.c.b16 %v1132, %v1128
    %v1349 = vpack.c.b16 %v1133, %v1129
    %v1350 = vpack.c.b16 %v1134, %v1130
    %v1351 = vpack.c.b16 %v1139, %v1135
    %v1352 = vpack.c.b16 %v1140, %v1136
    %v1353 = vpack.c.b16 %v1141, %v1137
    %v1354 = vpack.c.b16 %v1142, %v1138
    %v1355 = vpack.c.b16 %v1147, %v1143
    %v1356 = vpack.c.b16 %v1148, %v1144
    %v1357 = vpack.c.b16 %v1149, %v1145
    %v1358 = vpack.c.b16 %v1150, %v1146
    %v1359 = vpack.c.b16 %v1155, %v1151
    %v1360 = vpack.c.b16 %v1156, %v1152
    %v1361 = vpack.c.b16 %v1157, %v1153
    %v1362 = vpack.c.b16 %v1158, %v1154
    %v1363 = vpack.c.b16 %v1163, %v1159
    %v1364 = vpack.c.b16 %v1164, %v1160
    %v1365 = vpack.c.b16 %v1165, %v1161
    %v1366 = vpack.c.b16 %v1166, %v1162
    %v1367 = vpack.c.b16 %v1171, %v1167
    %v1368 = vpack.c.b16 %v1172, %v1168
    %v1369 = vpack.c.b16 %v1173, %v1169
    %v1370 = vpack.c.b16 %v1174, %v1170
    %v1371 = vpack.c.b16 %v1179, %v1175
    %v1372 = vpack.c.b16 %v1180, %v1176
    %v1373 = vpack.c.b16 %v1181, %v1177
    %v1374 = vpack.c.b16 %v1182, %v1178
    %1567 = vmatprep.subr.bf16.mxu0 %v1212
    %1568 = vmatpush1.bf16.msra.mxu0 %v1211
    %1569 = vmatprep.subr.bf16.mxu0 %v1208
    %1570 = vmatpush1.bf16.msra.mxu0 %v1207
    %1571 = vmatprep.subr.bf16.mxu0 %v1204
    %1572 = vmatpush1.bf16.msra.mxu0 %v1203
    %1573 = vmatprep.subr.bf16.mxu0 %v1200
    %1574 = vmatpush1.bf16.msra.mxu0 %v1199
    %1575 = vmatprep.subr.bf16.mxu0 %v1196
    %1576 = vmatpush1.bf16.msra.mxu0 %v1195
    %1577 = vmatprep.subr.bf16.mxu0 %v1192
    %1578 = vmatpush1.bf16.msra.mxu0 %v1191
    %1579 = vmatprep.subr.bf16.mxu0 %v1188
    %1580 = vmatpush1.bf16.msra.mxu0 %v1187
    %1581 = vmatprep.subr.bf16.mxu0 %v1184
    %1582 = vmatpush1.bf16.msra.mxu0 %v1183
    %1583 = vmatprep.subr.bf16.mxu0 %v1244
    %1584 = vmatpush2.bf16.msra.mxu0 %v1243
    %1585 = vmatprep.subr.bf16.mxu0 %v1240
    %1586 = vmatpush2.bf16.msra.mxu0 %v1239
    %1587 = vmatprep.subr.bf16.mxu0 %v1236
    %1588 = vmatpush2.bf16.msra.mxu0 %v1235
    %1589 = vmatprep.subr.bf16.mxu0 %v1232
    %1590 = vmatpush2.bf16.msra.mxu0 %v1231
    %1591 = vmatprep.subr.bf16.mxu0 %v1228
    %1592 = vmatpush2.bf16.msra.mxu0 %v1227
    %1593 = vmatprep.subr.bf16.mxu0 %v1224
    %1594 = vmatpush2.bf16.msra.mxu0 %v1223
    %1595 = vmatprep.subr.bf16.mxu0 %v1220
    %1596 = vmatpush2.bf16.msra.mxu0 %v1219
    %1597 = vmatprep.subr.bf16.mxu0 %v1216
    %1598 = vmatpush2.bf16.msra.mxu0 %v1215
    %1599 = vmatprep.mubr.bf16.mxu0 %v382
    %1600 = vmatmul.mubr.bf16.gmra.mxu0 %v381
    %v1601 = vpop.f32.mrf.mxu0
    %v1602 = vadd.f32 %v590, %v1601
    %v1603 = vpop.f32.mrf.mxu0
    %v1604 = vadd.f32 %v594, %v1603
    %v1605 = vpop.f32.mrf.mxu0
    %v1606 = vadd.f32 %v590, %v1605
    %v1607 = vpop.f32.mrf.mxu0
    %v1608 = vadd.f32 %v594, %v1607
    %1609 = vmatprep.mubr.bf16.mxu0 %v388
    %1610 = vmatmul.mubr.bf16.gmra.mxu0 %v387
    %v1611 = vpop.f32.mrf.mxu0
    %v1612 = vadd.f32 %v590, %v1611
    %v1613 = vpop.f32.mrf.mxu0
    %v1614 = vadd.f32 %v594, %v1613
    %v1615 = vpop.f32.mrf.mxu0
    %v1616 = vpop.f32.mrf.mxu0
    %1617 = vdwg.mxu0
    %1618 = vmatprep.subr.bf16.mxu0 %v1276
    %1619 = vmatpush1.bf16.msra.mxu0 %v1275
    %1620 = vmatprep.subr.bf16.mxu0 %v1272
    %1621 = vmatpush1.bf16.msra.mxu0 %v1271
    %1622 = vmatprep.subr.bf16.mxu0 %v1268
    %1623 = vmatpush1.bf16.msra.mxu0 %v1267
    %1624 = vmatprep.subr.bf16.mxu0 %v1264
    %1625 = vmatpush1.bf16.msra.mxu0 %v1263
    %1626 = vmatprep.subr.bf16.mxu0 %v1260
    %1627 = vmatpush1.bf16.msra.mxu0 %v1259
    %1628 = vmatprep.subr.bf16.mxu0 %v1256
    %1629 = vmatpush1.bf16.msra.mxu0 %v1255
    %1630 = vmatprep.subr.bf16.mxu0 %v1252
    %1631 = vmatpush1.bf16.msra.mxu0 %v1251
    %1632 = vmatprep.subr.bf16.mxu0 %v1248
    %1633 = vmatpush1.bf16.msra.mxu0 %v1247
    %1634 = vmatprep.subr.bf16.mxu0 %v1308
    %1635 = vmatpush2.bf16.msra.mxu0 %v1307
    %1636 = vmatprep.subr.bf16.mxu0 %v1304
    %1637 = vmatpush2.bf16.msra.mxu0 %v1303
    %1638 = vmatprep.subr.bf16.mxu0 %v1300
    %1639 = vmatpush2.bf16.msra.mxu0 %v1299
    %1640 = vmatprep.subr.bf16.mxu0 %v1296
    %1641 = vmatpush2.bf16.msra.mxu0 %v1295
    %1642 = vmatprep.subr.bf16.mxu0 %v1292
    %1643 = vmatpush2.bf16.msra.mxu0 %v1291
    %1644 = vmatprep.subr.bf16.mxu0 %v1288
    %1645 = vmatpush2.bf16.msra.mxu0 %v1287
    %1646 = vmatprep.subr.bf16.mxu0 %v1284
    %1647 = vmatpush2.bf16.msra.mxu0 %v1283
    %1648 = vmatprep.subr.bf16.mxu0 %v1280
    %1649 = vmatpush2.bf16.msra.mxu0 %v1279
    %1650 = vmatprep.mubr.bf16.mxu0 %v384
    %1651 = vmatmul.mubr.bf16.gmra.mxu0 %v383
    %v1652 = vpop.f32.mrf.mxu0
    %v1653 = vadd.f32 %v1602, %v1652
    %v1654 = vpop.f32.mrf.mxu0
    %v1655 = vadd.f32 %v1604, %v1654
    %v1656 = vpop.f32.mrf.mxu0
    %v1657 = vadd.f32 %v1606, %v1656
    %v1658 = vpop.f32.mrf.mxu0
    %v1659 = vadd.f32 %v1608, %v1658
    %1660 = vmatprep.mubr.bf16.mxu0 %v390
    %1661 = vmatmul.mubr.bf16.gmra.mxu0 %v389
    %v1662 = vpop.f32.mrf.mxu0
    %v1663 = vadd.f32 %v1612, %v1662
    %v1664 = vpop.f32.mrf.mxu0
    %v1665 = vadd.f32 %v1614, %v1664
    %v1666 = vpop.f32.mrf.mxu0
    %v1667 = vpop.f32.mrf.mxu0
    %1668 = vdwg.mxu0
    %1669 = vmatprep.subr.bf16.mxu0 %v1340
    %1670 = vmatpush1.bf16.msra.mxu0 %v1339
    %1671 = vmatprep.subr.bf16.mxu0 %v1336
    %1672 = vmatpush1.bf16.msra.mxu0 %v1335
    %1673 = vmatprep.subr.bf16.mxu0 %v1332
    %1674 = vmatpush1.bf16.msra.mxu0 %v1331
    %1675 = vmatprep.subr.bf16.mxu0 %v1328
    %1676 = vmatpush1.bf16.msra.mxu0 %v1327
    %1677 = vmatprep.subr.bf16.mxu0 %v1324
    %1678 = vmatpush1.bf16.msra.mxu0 %v1323
    %1679 = vmatprep.subr.bf16.mxu0 %v1320
    %1680 = vmatpush1.bf16.msra.mxu0 %v1319
    %1681 = vmatprep.subr.bf16.mxu0 %v1316
    %1682 = vmatpush1.bf16.msra.mxu0 %v1315
    %1683 = vmatprep.subr.bf16.mxu0 %v1312
    %1684 = vmatpush1.bf16.msra.mxu0 %v1311
    %1685 = vmatprep.subr.bf16.mxu0 %v1372
    %1686 = vmatpush2.bf16.msra.mxu0 %v1371
    %1687 = vmatprep.subr.bf16.mxu0 %v1368
    %1688 = vmatpush2.bf16.msra.mxu0 %v1367
    %1689 = vmatprep.subr.bf16.mxu0 %v1364
    %1690 = vmatpush2.bf16.msra.mxu0 %v1363
    %1691 = vmatprep.subr.bf16.mxu0 %v1360
    %1692 = vmatpush2.bf16.msra.mxu0 %v1359
    %1693 = vmatprep.subr.bf16.mxu0 %v1356
    %1694 = vmatpush2.bf16.msra.mxu0 %v1355
    %1695 = vmatprep.subr.bf16.mxu0 %v1352
    %1696 = vmatpush2.bf16.msra.mxu0 %v1351
    %1697 = vmatprep.subr.bf16.mxu0 %v1348
    %1698 = vmatpush2.bf16.msra.mxu0 %v1347
    %1699 = vmatprep.subr.bf16.mxu0 %v1344
    %1700 = vmatpush2.bf16.msra.mxu0 %v1343
    %1701 = vmatprep.mubr.bf16.mxu0 %v386
    %1702 = vmatmul.mubr.bf16.gmra.mxu0 %v385
    %v1703 = vpop.f32.mrf.mxu0
    %v1704 = vadd.f32 %v1653, %v1703
    %v1705 = vpop.f32.mrf.mxu0
    %v1706 = vadd.f32 %v1655, %v1705
    %v1707 = vpop.f32.mrf.mxu0
    %v1708 = vadd.f32 %v1657, %v1707
    %v1709 = vpop.f32.mrf.mxu0
    %v1710 = vadd.f32 %v1659, %v1709
    %1711 = vmatprep.mubr.bf16.mxu0 %v392
    %1712 = vmatmul.mubr.bf16.gmra.mxu0 %v391
    %v1713 = vpop.f32.mrf.mxu0
    %v1714 = vadd.f32 %v1663, %v1713
    %v1715 = vpop.f32.mrf.mxu0
    %v1716 = vadd.f32 %v1665, %v1715
    %v1717 = vpop.f32.mrf.mxu0
    %v1718 = vpop.f32.mrf.mxu0
    %1719 = vdwg.mxu0
    %1720 = vmatprep.subr.bf16.mxu0 %v1214
    %1721 = vmatpush1.bf16.msra.mxu0 %v1213
    %1722 = vmatprep.subr.bf16.mxu0 %v1210
    %1723 = vmatpush1.bf16.msra.mxu0 %v1209
    %1724 = vmatprep.subr.bf16.mxu0 %v1206
    %1725 = vmatpush1.bf16.msra.mxu0 %v1205
    %1726 = vmatprep.subr.bf16.mxu0 %v1202
    %1727 = vmatpush1.bf16.msra.mxu0 %v1201
    %1728 = vmatprep.subr.bf16.mxu0 %v1198
    %1729 = vmatpush1.bf16.msra.mxu0 %v1197
    %1730 = vmatprep.subr.bf16.mxu0 %v1194
    %1731 = vmatpush1.bf16.msra.mxu0 %v1193
    %1732 = vmatprep.subr.bf16.mxu0 %v1190
    %1733 = vmatpush1.bf16.msra.mxu0 %v1189
    %1734 = vmatprep.subr.bf16.mxu0 %v1186
    %1735 = vmatpush1.bf16.msra.mxu0 %v1185
    %1736 = vmatprep.subr.bf16.mxu0 %v1246
    %1737 = vmatpush2.bf16.msra.mxu0 %v1245
    %1738 = vmatprep.subr.bf16.mxu0 %v1242
    %1739 = vmatpush2.bf16.msra.mxu0 %v1241
    %1740 = vmatprep.subr.bf16.mxu0 %v1238
    %1741 = vmatpush2.bf16.msra.mxu0 %v1237
    %1742 = vmatprep.subr.bf16.mxu0 %v1234
    %1743 = vmatpush2.bf16.msra.mxu0 %v1233
    %1744 = vmatprep.subr.bf16.mxu0 %v1230
    %1745 = vmatpush2.bf16.msra.mxu0 %v1229
    %1746 = vmatprep.subr.bf16.mxu0 %v1226
    %1747 = vmatpush2.bf16.msra.mxu0 %v1225
    %1748 = vmatprep.subr.bf16.mxu0 %v1222
    %1749 = vmatpush2.bf16.msra.mxu0 %v1221
    %1750 = vmatprep.subr.bf16.mxu0 %v1218
    %1751 = vmatpush2.bf16.msra.mxu0 %v1217
    %1752 = vmatprep.mubr.bf16.mxu0 %v382
    %1753 = vmatmul.mubr.bf16.gmra.mxu0 %v381
    %v1754 = vpop.f32.mrf.mxu0
    %v1755 = vadd.f32 %v598, %v1754
    %v1756 = vpop.f32.mrf.mxu0
    %v1757 = vadd.f32 %v602, %v1756
    %v1758 = vpop.f32.mrf.mxu0
    %v1759 = vadd.f32 %v598, %v1758
    %v1760 = vpop.f32.mrf.mxu0
    %v1761 = vadd.f32 %v602, %v1760
    %1762 = vmatprep.mubr.bf16.mxu0 %v388
    %1763 = vmatmul.mubr.bf16.gmra.mxu0 %v387
    %v1764 = vpop.f32.mrf.mxu0
    %v1765 = vadd.f32 %v598, %v1764
    %v1766 = vpop.f32.mrf.mxu0
    %v1767 = vadd.f32 %v602, %v1766
    %v1768 = vpop.f32.mrf.mxu0
    %v1769 = vpop.f32.mrf.mxu0
    %1770 = vdwg.mxu0
    %1771 = vmatprep.subr.bf16.mxu0 %v1278
    %1772 = vmatpush1.bf16.msra.mxu0 %v1277
    %1773 = vmatprep.subr.bf16.mxu0 %v1274
    %1774 = vmatpush1.bf16.msra.mxu0 %v1273
    %1775 = vmatprep.subr.bf16.mxu0 %v1270
    %1776 = vmatpush1.bf16.msra.mxu0 %v1269
    %1777 = vmatprep.subr.bf16.mxu0 %v1266
    %1778 = vmatpush1.bf16.msra.mxu0 %v1265
    %1779 = vmatprep.subr.bf16.mxu0 %v1262
    %1780 = vmatpush1.bf16.msra.mxu0 %v1261
    %1781 = vmatprep.subr.bf16.mxu0 %v1258
    %1782 = vmatpush1.bf16.msra.mxu0 %v1257
    %1783 = vmatprep.subr.bf16.mxu0 %v1254
    %1784 = vmatpush1.bf16.msra.mxu0 %v1253
    %1785 = vmatprep.subr.bf16.mxu0 %v1250
    %1786 = vmatpush1.bf16.msra.mxu0 %v1249
    %1787 = vmatprep.subr.bf16.mxu0 %v1310
    %1788 = vmatpush2.bf16.msra.mxu0 %v1309
    %1789 = vmatprep.subr.bf16.mxu0 %v1306
    %1790 = vmatpush2.bf16.msra.mxu0 %v1305
    %1791 = vmatprep.subr.bf16.mxu0 %v1302
    %1792 = vmatpush2.bf16.msra.mxu0 %v1301
    %1793 = vmatprep.subr.bf16.mxu0 %v1298
    %1794 = vmatpush2.bf16.msra.mxu0 %v1297
    %1795 = vmatprep.subr.bf16.mxu0 %v1294
    %1796 = vmatpush2.bf16.msra.mxu0 %v1293
    %1797 = vmatprep.subr.bf16.mxu0 %v1290
    %1798 = vmatpush2.bf16.msra.mxu0 %v1289
    %1799 = vmatprep.subr.bf16.mxu0 %v1286
    %1800 = vmatpush2.bf16.msra.mxu0 %v1285
    %1801 = vmatprep.subr.bf16.mxu0 %v1282
    %1802 = vmatpush2.bf16.msra.mxu0 %v1281
    %1803 = vmatprep.mubr.bf16.mxu0 %v384
    %1804 = vmatmul.mubr.bf16.gmra.mxu0 %v383
    %v1805 = vpop.f32.mrf.mxu0
    %v1806 = vadd.f32 %v1755, %v1805
    %v1807 = vpop.f32.mrf.mxu0
    %v1808 = vadd.f32 %v1757, %v1807
    %v1809 = vpop.f32.mrf.mxu0
    %v1810 = vadd.f32 %v1759, %v1809
    %v1811 = vpop.f32.mrf.mxu0
    %v1812 = vadd.f32 %v1761, %v1811
    %1813 = vmatprep.mubr.bf16.mxu0 %v390
    %1814 = vmatmul.mubr.bf16.gmra.mxu0 %v389
    %v1815 = vpop.f32.mrf.mxu0
    %v1816 = vadd.f32 %v1765, %v1815
    %v1817 = vpop.f32.mrf.mxu0
    %v1818 = vadd.f32 %v1767, %v1817
    %v1819 = vpop.f32.mrf.mxu0
    %v1820 = vpop.f32.mrf.mxu0
    %1821 = vdwg.mxu0
    %1822 = vmatprep.subr.bf16.mxu0 %v1342
    %1823 = vmatpush1.bf16.msra.mxu0 %v1341
    %1824 = vmatprep.subr.bf16.mxu0 %v1338
    %1825 = vmatpush1.bf16.msra.mxu0 %v1337
    %1826 = vmatprep.subr.bf16.mxu0 %v1334
    %1827 = vmatpush1.bf16.msra.mxu0 %v1333
    %1828 = vmatprep.subr.bf16.mxu0 %v1330
    %1829 = vmatpush1.bf16.msra.mxu0 %v1329
    %1830 = vmatprep.subr.bf16.mxu0 %v1326
    %1831 = vmatpush1.bf16.msra.mxu0 %v1325
    %1832 = vmatprep.subr.bf16.mxu0 %v1322
    %1833 = vmatpush1.bf16.msra.mxu0 %v1321
    %1834 = vmatprep.subr.bf16.mxu0 %v1318
    %1835 = vmatpush1.bf16.msra.mxu0 %v1317
    %1836 = vmatprep.subr.bf16.mxu0 %v1314
    %1837 = vmatpush1.bf16.msra.mxu0 %v1313
    %1838 = vmatprep.subr.bf16.mxu0 %v1374
    %1839 = vmatpush2.bf16.msra.mxu0 %v1373
    %1840 = vmatprep.subr.bf16.mxu0 %v1370
    %1841 = vmatpush2.bf16.msra.mxu0 %v1369
    %1842 = vmatprep.subr.bf16.mxu0 %v1366
    %1843 = vmatpush2.bf16.msra.mxu0 %v1365
    %1844 = vmatprep.subr.bf16.mxu0 %v1362
    %1845 = vmatpush2.bf16.msra.mxu0 %v1361
    %1846 = vmatprep.subr.bf16.mxu0 %v1358
    %1847 = vmatpush2.bf16.msra.mxu0 %v1357
    %1848 = vmatprep.subr.bf16.mxu0 %v1354
    %1849 = vmatpush2.bf16.msra.mxu0 %v1353
    %1850 = vmatprep.subr.bf16.mxu0 %v1350
    %1851 = vmatpush2.bf16.msra.mxu0 %v1349
    %1852 = vmatprep.subr.bf16.mxu0 %v1346
    %1853 = vmatpush2.bf16.msra.mxu0 %v1345
    %1854 = vmatprep.mubr.bf16.mxu0 %v386
    %1855 = vmatmul.mubr.bf16.gmra.mxu0 %v385
    %v1856 = vpop.f32.mrf.mxu0
    %v1857 = vadd.f32 %v1806, %v1856
    %v1858 = vpop.f32.mrf.mxu0
    %v1859 = vadd.f32 %v1808, %v1858
    %v1860 = vpop.f32.mrf.mxu0
    %v1861 = vadd.f32 %v1810, %v1860
    %v1862 = vpop.f32.mrf.mxu0
    %v1863 = vadd.f32 %v1812, %v1862
    %1864 = vmatprep.mubr.bf16.mxu0 %v392
    %1865 = vmatmul.mubr.bf16.gmra.mxu0 %v391
    %v1866 = vpop.f32.mrf.mxu0
    %v1867 = vadd.f32 %v1816, %v1866
    %v1868 = vpop.f32.mrf.mxu0
    %v1869 = vadd.f32 %v1818, %v1868
    %v1870 = vpop.f32.mrf.mxu0
    %v1871 = vpop.f32.mrf.mxu0
    %1872 = vdwg.mxu0
    %v1873 = vmax.f32 %v1704, 0.0
    %v1874 = vmax.f32 %v1706, 0.0
    %v1875 = vmax.f32 %v1857, 0.0
    %v1876 = vmax.f32 %v1859, 0.0
    %v1877 = vmax.f32 %v1708, 0.0
    %v1878 = vmax.f32 %v1710, 0.0
    %v1879 = vmax.f32 %v1861, 0.0
    %v1880 = vmax.f32 %v1863, 0.0
    %v1881 = vmax.f32 %v1714, 0.0
    %v1882 = vmax.f32 %v1716, 0.0
    %v1883 = vmax.f32 %v1867, 0.0
    %v1884 = vmax.f32 %v1869, 0.0
    %v1885 = vpack.c.bf16 %v1877, %v1873
    %v1886 = vpack.c.bf16 %v1878, %v1874
    %v1887 = vpack.c.bf16 %v1879, %v1875
    %v1888 = vpack.c.bf16 %v1880, %v1876
    %v1889 = vpack.c.bf16 %v1881, %v1881
    %v1890 = vpack.c.bf16 %v1882, %v1882
    %v1891 = vpack.c.bf16 %v1883, %v1883
    %v1892 = vpack.c.bf16 %v1884, %v1884
    %v1893 = vld [vmem:[#allocation10] sm:$0xff]
    %v1894 = vld [vmem:[#allocation10 + $0x8] sm:$0xff]
    %v1895 = vld [vmem:[#allocation10 + $0x10] sm:$0xff]
    %v1896 = vld [vmem:[#allocation10 + $0x18] sm:$0xff]
    %v1897 = vld [vmem:[#allocation10 + $0x20] sm:$0xff]
    %v1898 = vld [vmem:[#allocation10 + $0x28] sm:$0xff]
    %v1899 = vld [vmem:[#allocation10 + $0x30] sm:$0xff]
    %v1900 = vld [vmem:[#allocation10 + $0x38] sm:$0xff]
    %v1901 = vld [vmem:[#allocation10 + $0x40] sm:$0xff]
    %v1902 = vld [vmem:[#allocation10 + $0x48] sm:$0xff]
    %v1903 = vld [vmem:[#allocation10 + $0x50] sm:$0xff]
    %v1904 = vld [vmem:[#allocation10 + $0x58] sm:$0xff]
    %v1905 = vld [vmem:[#allocation10 + $0x60] sm:$0xff]
    %v1906 = vld [vmem:[#allocation10 + $0x68] sm:$0xff]
    %v1907 = vld [vmem:[#allocation10 + $0x70] sm:$0xff]
    %v1908 = vld [vmem:[#allocation10 + $0x78] sm:$0xff]
    %v1909 = vld [vmem:[#allocation10 + $0x80] sm:$0xff]
    %v1910 = vld [vmem:[#allocation10 + $0x88] sm:$0xff]
    %v1911 = vld [vmem:[#allocation10 + $0x90] sm:$0xff]
    %v1912 = vld [vmem:[#allocation10 + $0x98] sm:$0xff]
    %v1913 = vld [vmem:[#allocation10 + $0xa0] sm:$0xff]
    %v1914 = vld [vmem:[#allocation10 + $0xa8] sm:$0xff]
    %v1915 = vld [vmem:[#allocation10 + $0xb0] sm:$0xff]
    %v1916 = vld [vmem:[#allocation10 + $0xb8] sm:$0xff]
    %v1917 = vld [vmem:[#allocation10 + $0xc0] sm:$0xff]
    %v1918 = vld [vmem:[#allocation10 + $0xc8] sm:$0xff]
    %v1919 = vld [vmem:[#allocation10 + $0xd0] sm:$0xff]
    %v1920 = vld [vmem:[#allocation10 + $0xd8] sm:$0xff]
    %v1921 = vld [vmem:[#allocation10 + $0xe0] sm:$0xff]
    %v1922 = vld [vmem:[#allocation10 + $0xe8] sm:$0xff]
    %v1923 = vld [vmem:[#allocation10 + $0xf0] sm:$0xff]
    %v1924 = vld [vmem:[#allocation10 + $0xf8] sm:$0xff]
    %v1925 = vld [vmem:[#allocation10 + $0x100] sm:$0xff]
    %v1926 = vld [vmem:[#allocation10 + $0x108] sm:$0xff]
    %v1927 = vld [vmem:[#allocation10 + $0x110] sm:$0xff]
    %v1928 = vld [vmem:[#allocation10 + $0x118] sm:$0xff]
    %v1929 = vld [vmem:[#allocation10 + $0x120] sm:$0xff]
    %v1930 = vld [vmem:[#allocation10 + $0x128] sm:$0xff]
    %v1931 = vld [vmem:[#allocation10 + $0x130] sm:$0xff]
    %v1932 = vld [vmem:[#allocation10 + $0x138] sm:$0xff]
    %v1933 = vld [vmem:[#allocation10 + $0x140] sm:$0xff]
    %v1934 = vld [vmem:[#allocation10 + $0x148] sm:$0xff]
    %v1935 = vld [vmem:[#allocation10 + $0x150] sm:$0xff]
    %v1936 = vld [vmem:[#allocation10 + $0x158] sm:$0xff]
    %v1937 = vld [vmem:[#allocation10 + $0x160] sm:$0xff]
    %v1938 = vld [vmem:[#allocation10 + $0x168] sm:$0xff]
    %v1939 = vld [vmem:[#allocation10 + $0x170] sm:$0xff]
    %v1940 = vld [vmem:[#allocation10 + $0x178] sm:$0xff]
    %v1941 = vld [vmem:[#allocation10 + $0x180] sm:$0xff]
    %v1942 = vld [vmem:[#allocation10 + $0x188] sm:$0xff]
    %v1943 = vld [vmem:[#allocation10 + $0x190] sm:$0xff]
    %v1944 = vld [vmem:[#allocation10 + $0x198] sm:$0xff]
    %v1945 = vld [vmem:[#allocation10 + $0x1a0] sm:$0xff]
    %v1946 = vld [vmem:[#allocation10 + $0x1a8] sm:$0xff]
    %v1947 = vld [vmem:[#allocation10 + $0x1b0] sm:$0xff]
    %v1948 = vld [vmem:[#allocation10 + $0x1b8] sm:$0xff]
    %v1949 = vld [vmem:[#allocation10 + $0x1c0] sm:$0xff]
    %v1950 = vld [vmem:[#allocation10 + $0x1c8] sm:$0xff]
    %v1951 = vld [vmem:[#allocation10 + $0x1d0] sm:$0xff]
    %v1952 = vld [vmem:[#allocation10 + $0x1d8] sm:$0xff]
    %v1953 = vld [vmem:[#allocation10 + $0x1e0] sm:$0xff]
    %v1954 = vld [vmem:[#allocation10 + $0x1e8] sm:$0xff]
    %v1955 = vld [vmem:[#allocation10 + $0x1f0] sm:$0xff]
    %v1956 = vld [vmem:[#allocation10 + $0x1f8] sm:$0xff]
    %v1957 = vld [vmem:[#allocation10 + $0x200] sm:$0xff]
    %v1958 = vld [vmem:[#allocation10 + $0x208] sm:$0xff]
    %v1959 = vld [vmem:[#allocation10 + $0x210] sm:$0xff]
    %v1960 = vld [vmem:[#allocation10 + $0x218] sm:$0xff]
    %v1961 = vld [vmem:[#allocation10 + $0x220] sm:$0xff]
    %v1962 = vld [vmem:[#allocation10 + $0x228] sm:$0xff]
    %v1963 = vld [vmem:[#allocation10 + $0x230] sm:$0xff]
    %v1964 = vld [vmem:[#allocation10 + $0x238] sm:$0xff]
    %v1965 = vld [vmem:[#allocation10 + $0x240] sm:$0xff]
    %v1966 = vld [vmem:[#allocation10 + $0x248] sm:$0xff]
    %v1967 = vld [vmem:[#allocation10 + $0x250] sm:$0xff]
    %v1968 = vld [vmem:[#allocation10 + $0x258] sm:$0xff]
    %v1969 = vld [vmem:[#allocation10 + $0x260] sm:$0xff]
    %v1970 = vld [vmem:[#allocation10 + $0x268] sm:$0xff]
    %v1971 = vld [vmem:[#allocation10 + $0x270] sm:$0xff]
    %v1972 = vld [vmem:[#allocation10 + $0x278] sm:$0xff]
    %v1973 = vld [vmem:[#allocation10 + $0x280] sm:$0xff]
    %v1974 = vld [vmem:[#allocation10 + $0x288] sm:$0xff]
    %v1975 = vld [vmem:[#allocation10 + $0x290] sm:$0xff]
    %v1976 = vld [vmem:[#allocation10 + $0x298] sm:$0xff]
    %v1977 = vld [vmem:[#allocation10 + $0x2a0] sm:$0xff]
    %v1978 = vld [vmem:[#allocation10 + $0x2a8] sm:$0xff]
    %v1979 = vld [vmem:[#allocation10 + $0x2b0] sm:$0xff]
    %v1980 = vld [vmem:[#allocation10 + $0x2b8] sm:$0xff]
    %v1981 = vld [vmem:[#allocation10 + $0x2c0] sm:$0xff]
    %v1982 = vld [vmem:[#allocation10 + $0x2c8] sm:$0xff]
    %v1983 = vld [vmem:[#allocation10 + $0x2d0] sm:$0xff]
    %v1984 = vld [vmem:[#allocation10 + $0x2d8] sm:$0xff]
    %v1985 = vld [vmem:[#allocation10 + $0x2e0] sm:$0xff]
    %v1986 = vld [vmem:[#allocation10 + $0x2e8] sm:$0xff]
    %v1987 = vld [vmem:[#allocation10 + $0x2f0] sm:$0xff]
    %v1988 = vld [vmem:[#allocation10 + $0x2f8] sm:$0xff]
    %v1989 = vld [vmem:[#allocation10 + $0x300] sm:$0xff]
    %v1990 = vld [vmem:[#allocation10 + $0x308] sm:$0xff]
    %v1991 = vld [vmem:[#allocation10 + $0x310] sm:$0xff]
    %v1992 = vld [vmem:[#allocation10 + $0x318] sm:$0xff]
    %v1993 = vld [vmem:[#allocation10 + $0x320] sm:$0xff]
    %v1994 = vld [vmem:[#allocation10 + $0x328] sm:$0xff]
    %v1995 = vld [vmem:[#allocation10 + $0x330] sm:$0xff]
    %v1996 = vld [vmem:[#allocation10 + $0x338] sm:$0xff]
    %v1997 = vld [vmem:[#allocation10 + $0x340] sm:$0xff]
    %v1998 = vld [vmem:[#allocation10 + $0x348] sm:$0xff]
    %v1999 = vld [vmem:[#allocation10 + $0x350] sm:$0xff]
    %v2000 = vld [vmem:[#allocation10 + $0x358] sm:$0xff]
    %v2001 = vld [vmem:[#allocation10 + $0x360] sm:$0xff]
    %v2002 = vld [vmem:[#allocation10 + $0x368] sm:$0xff]
    %v2003 = vld [vmem:[#allocation10 + $0x370] sm:$0xff]
    %v2004 = vld [vmem:[#allocation10 + $0x378] sm:$0xff]
    %v2005 = vld [vmem:[#allocation10 + $0x380] sm:$0xff]
    %v2006 = vld [vmem:[#allocation10 + $0x388] sm:$0xff]
    %v2007 = vld [vmem:[#allocation10 + $0x390] sm:$0xff]
    %v2008 = vld [vmem:[#allocation10 + $0x398] sm:$0xff]
    %v2009 = vld [vmem:[#allocation10 + $0x3a0] sm:$0xff]
    %v2010 = vld [vmem:[#allocation10 + $0x3a8] sm:$0xff]
    %v2011 = vld [vmem:[#allocation10 + $0x3b0] sm:$0xff]
    %v2012 = vld [vmem:[#allocation10 + $0x3b8] sm:$0xff]
    %v2013 = vld [vmem:[#allocation10 + $0x3c0] sm:$0xff]
    %v2014 = vld [vmem:[#allocation10 + $0x3c8] sm:$0xff]
    %v2015 = vld [vmem:[#allocation10 + $0x3d0] sm:$0xff]
    %v2016 = vld [vmem:[#allocation10 + $0x3d8] sm:$0xff]
    %v2017 = vld [vmem:[#allocation10 + $0x3e0] sm:$0xff]
    %v2018 = vld [vmem:[#allocation10 + $0x3e8] sm:$0xff]
    %v2019 = vld [vmem:[#allocation10 + $0x3f0] sm:$0xff]
    %v2020 = vld [vmem:[#allocation10 + $0x3f8] sm:$0xff]
    %v2021 = vld [vmem:[#allocation10 + $0x400] sm:$0xff]
    %v2022 = vld [vmem:[#allocation10 + $0x408] sm:$0xff]
    %v2023 = vld [vmem:[#allocation10 + $0x410] sm:$0xff]
    %v2024 = vld [vmem:[#allocation10 + $0x418] sm:$0xff]
    %v2025 = vld [vmem:[#allocation10 + $0x420] sm:$0xff]
    %v2026 = vld [vmem:[#allocation10 + $0x428] sm:$0xff]
    %v2027 = vld [vmem:[#allocation10 + $0x430] sm:$0xff]
    %v2028 = vld [vmem:[#allocation10 + $0x438] sm:$0xff]
    %v2029 = vld [vmem:[#allocation10 + $0x440] sm:$0xff]
    %v2030 = vld [vmem:[#allocation10 + $0x448] sm:$0xff]
    %v2031 = vld [vmem:[#allocation10 + $0x450] sm:$0xff]
    %v2032 = vld [vmem:[#allocation10 + $0x458] sm:$0xff]
    %v2033 = vld [vmem:[#allocation10 + $0x460] sm:$0xff]
    %v2034 = vld [vmem:[#allocation10 + $0x468] sm:$0xff]
    %v2035 = vld [vmem:[#allocation10 + $0x470] sm:$0xff]
    %v2036 = vld [vmem:[#allocation10 + $0x478] sm:$0xff]
    %v2037 = vld [vmem:[#allocation10 + $0x480] sm:$0xff]
    %v2038 = vld [vmem:[#allocation10 + $0x488] sm:$0xff]
    %v2039 = vld [vmem:[#allocation10 + $0x490] sm:$0xff]
    %v2040 = vld [vmem:[#allocation10 + $0x498] sm:$0xff]
    %v2041 = vld [vmem:[#allocation10 + $0x4a0] sm:$0xff]
    %v2042 = vld [vmem:[#allocation10 + $0x4a8] sm:$0xff]
    %v2043 = vld [vmem:[#allocation10 + $0x4b0] sm:$0xff]
    %v2044 = vld [vmem:[#allocation10 + $0x4b8] sm:$0xff]
    %v2045 = vld [vmem:[#allocation10 + $0x4c0] sm:$0xff]
    %v2046 = vld [vmem:[#allocation10 + $0x4c8] sm:$0xff]
    %v2047 = vld [vmem:[#allocation10 + $0x4d0] sm:$0xff]
    %v2048 = vld [vmem:[#allocation10 + $0x4d8] sm:$0xff]
    %v2049 = vld [vmem:[#allocation10 + $0x4e0] sm:$0xff]
    %v2050 = vld [vmem:[#allocation10 + $0x4e8] sm:$0xff]
    %v2051 = vld [vmem:[#allocation10 + $0x4f0] sm:$0xff]
    %v2052 = vld [vmem:[#allocation10 + $0x4f8] sm:$0xff]
    %v2053 = vld [vmem:[#allocation10 + $0x500] sm:$0xff]
    %v2054 = vld [vmem:[#allocation10 + $0x508] sm:$0xff]
    %v2055 = vld [vmem:[#allocation10 + $0x510] sm:$0xff]
    %v2056 = vld [vmem:[#allocation10 + $0x518] sm:$0xff]
    %v2057 = vld [vmem:[#allocation10 + $0x520] sm:$0xff]
    %v2058 = vld [vmem:[#allocation10 + $0x528] sm:$0xff]
    %v2059 = vld [vmem:[#allocation10 + $0x530] sm:$0xff]
    %v2060 = vld [vmem:[#allocation10 + $0x538] sm:$0xff]
    %v2061 = vld [vmem:[#allocation10 + $0x540] sm:$0xff]
    %v2062 = vld [vmem:[#allocation10 + $0x548] sm:$0xff]
    %v2063 = vld [vmem:[#allocation10 + $0x550] sm:$0xff]
    %v2064 = vld [vmem:[#allocation10 + $0x558] sm:$0xff]
    %v2065 = vld [vmem:[#allocation10 + $0x560] sm:$0xff]
    %v2066 = vld [vmem:[#allocation10 + $0x568] sm:$0xff]
    %v2067 = vld [vmem:[#allocation10 + $0x570] sm:$0xff]
    %v2068 = vld [vmem:[#allocation10 + $0x578] sm:$0xff]
    %v2069 = vld [vmem:[#allocation10 + $0x580] sm:$0xff]
    %v2070 = vld [vmem:[#allocation10 + $0x588] sm:$0xff]
    %v2071 = vld [vmem:[#allocation10 + $0x590] sm:$0xff]
    %v2072 = vld [vmem:[#allocation10 + $0x598] sm:$0xff]
    %v2073 = vld [vmem:[#allocation10 + $0x5a0] sm:$0xff]
    %v2074 = vld [vmem:[#allocation10 + $0x5a8] sm:$0xff]
    %v2075 = vld [vmem:[#allocation10 + $0x5b0] sm:$0xff]
    %v2076 = vld [vmem:[#allocation10 + $0x5b8] sm:$0xff]
    %v2077 = vld [vmem:[#allocation10 + $0x5c0] sm:$0xff]
    %v2078 = vld [vmem:[#allocation10 + $0x5c8] sm:$0xff]
    %v2079 = vld [vmem:[#allocation10 + $0x5d0] sm:$0xff]
    %v2080 = vld [vmem:[#allocation10 + $0x5d8] sm:$0xff]
    %v2081 = vld [vmem:[#allocation10 + $0x5e0] sm:$0xff]
    %v2082 = vld [vmem:[#allocation10 + $0x5e8] sm:$0xff]
    %v2083 = vld [vmem:[#allocation10 + $0x5f0] sm:$0xff]
    %v2084 = vld [vmem:[#allocation10 + $0x5f8] sm:$0xff]
    %v2085 = vld [vmem:[%s6] sm:$0x3f]
    %v2087 = vlaneseq
    %v2088 = vshrl.u32 %v2087, 7
    %v2089 = vsub.s32 0, %v2088
    %v2090 = vrot.slane %v2085, %v2089
    %v2091 = vlaneseq
    %v2092 = vshrl.u32 %v2091, 7
    %v2093 = vsub.s32 1, %v2092
    %v2094 = vrot.slane %v2085, %v2093
    %v2095 = vlaneseq
    %v2096 = vshrl.u32 %v2095, 7
    %v2097 = vsub.s32 2, %v2096
    %v2098 = vrot.slane %v2085, %v2097
    %v2099 = vlaneseq
    %v2100 = vshrl.u32 %v2099, 7
    %v2101 = vsub.s32 3, %v2100
    %v2102 = vrot.slane %v2085, %v2101
    %v2103 = vlaneseq
    %v2104 = vshrl.u32 %v2103, 7
    %v2105 = vsub.s32 4, %v2104
    %v2106 = vrot.slane %v2085, %v2105
    %v2107 = vlaneseq
    %v2108 = vshrl.u32 %v2107, 7
    %v2109 = vsub.s32 5, %v2108
    %v2110 = vrot.slane %v2085, %v2109
    %v2309 = vunpack.c.l.b16 %v1893
    %v2310 = vunpack.c.h.b16 %v1893
    %v2311 = vunpack.c.l.b16 %v1894
    %v2312 = vunpack.c.h.b16 %v1894
    %v2313 = vunpack.c.l.b16 %v1895
    %v2314 = vunpack.c.h.b16 %v1895
    %v2315 = vunpack.c.l.b16 %v1896
    %v2316 = vunpack.c.h.b16 %v1896
    %v2317 = vunpack.c.l.b16 %v1897
    %v2318 = vunpack.c.h.b16 %v1897
    %v2319 = vunpack.c.l.b16 %v1898
    %v2320 = vunpack.c.h.b16 %v1898
    %v2321 = vunpack.c.l.b16 %v1899
    %v2322 = vunpack.c.h.b16 %v1899
    %v2323 = vunpack.c.l.b16 %v1900
    %v2324 = vunpack.c.h.b16 %v1900
    %v2325 = vunpack.c.l.b16 %v1901
    %v2326 = vunpack.c.h.b16 %v1901
    %v2327 = vunpack.c.l.b16 %v1902
    %v2328 = vunpack.c.h.b16 %v1902
    %v2329 = vunpack.c.l.b16 %v1903
    %v2330 = vunpack.c.h.b16 %v1903
    %v2331 = vunpack.c.l.b16 %v1904
    %v2332 = vunpack.c.h.b16 %v1904
    %v2333 = vunpack.c.l.b16 %v1905
    %v2334 = vunpack.c.h.b16 %v1905
    %v2335 = vunpack.c.l.b16 %v1906
    %v2336 = vunpack.c.h.b16 %v1906
    %v2337 = vunpack.c.l.b16 %v1907
    %v2338 = vunpack.c.h.b16 %v1907
    %v2339 = vunpack.c.l.b16 %v1908
    %v2340 = vunpack.c.h.b16 %v1908
    %v2341 = vunpack.c.l.b16 %v1909
    %v2342 = vunpack.c.h.b16 %v1909
    %v2343 = vunpack.c.l.b16 %v1910
    %v2344 = vunpack.c.h.b16 %v1910
    %v2345 = vunpack.c.l.b16 %v1911
    %v2346 = vunpack.c.h.b16 %v1911
    %v2347 = vunpack.c.l.b16 %v1912
    %v2348 = vunpack.c.h.b16 %v1912
    %v2349 = vunpack.c.l.b16 %v1913
    %v2350 = vunpack.c.h.b16 %v1913
    %v2351 = vunpack.c.l.b16 %v1914
    %v2352 = vunpack.c.h.b16 %v1914
    %v2353 = vunpack.c.l.b16 %v1915
    %v2354 = vunpack.c.h.b16 %v1915
    %v2355 = vunpack.c.l.b16 %v1916
    %v2356 = vunpack.c.h.b16 %v1916
    %v2357 = vunpack.c.l.b16 %v1917
    %v2358 = vunpack.c.h.b16 %v1917
    %v2359 = vunpack.c.l.b16 %v1918
    %v2360 = vunpack.c.h.b16 %v1918
    %v2361 = vunpack.c.l.b16 %v1919
    %v2362 = vunpack.c.h.b16 %v1919
    %v2363 = vunpack.c.l.b16 %v1920
    %v2364 = vunpack.c.h.b16 %v1920
    %v2365 = vunpack.c.l.b16 %v1921
    %v2366 = vunpack.c.h.b16 %v1921
    %v2367 = vunpack.c.l.b16 %v1922
    %v2368 = vunpack.c.h.b16 %v1922
    %v2369 = vunpack.c.l.b16 %v1923
    %v2370 = vunpack.c.h.b16 %v1923
    %v2371 = vunpack.c.l.b16 %v1924
    %v2372 = vunpack.c.h.b16 %v1924
    %v2373 = vunpack.c.l.b16 %v1925
    %v2374 = vunpack.c.h.b16 %v1925
    %v2375 = vunpack.c.l.b16 %v1926
    %v2376 = vunpack.c.h.b16 %v1926
    %v2377 = vunpack.c.l.b16 %v1927
    %v2378 = vunpack.c.h.b16 %v1927
    %v2379 = vunpack.c.l.b16 %v1928
    %v2380 = vunpack.c.h.b16 %v1928
    %v2381 = vunpack.c.l.b16 %v1929
    %v2382 = vunpack.c.h.b16 %v1929
    %v2383 = vunpack.c.l.b16 %v1930
    %v2384 = vunpack.c.h.b16 %v1930
    %v2385 = vunpack.c.l.b16 %v1931
    %v2386 = vunpack.c.h.b16 %v1931
    %v2387 = vunpack.c.l.b16 %v1932
    %v2388 = vunpack.c.h.b16 %v1932
    %v2389 = vunpack.c.l.b16 %v1933
    %v2390 = vunpack.c.h.b16 %v1933
    %v2391 = vunpack.c.l.b16 %v1934
    %v2392 = vunpack.c.h.b16 %v1934
    %v2393 = vunpack.c.l.b16 %v1935
    %v2394 = vunpack.c.h.b16 %v1935
    %v2395 = vunpack.c.l.b16 %v1936
    %v2396 = vunpack.c.h.b16 %v1936
    %v2397 = vunpack.c.l.b16 %v1937
    %v2398 = vunpack.c.h.b16 %v1937
    %v2399 = vunpack.c.l.b16 %v1938
    %v2400 = vunpack.c.h.b16 %v1938
    %v2401 = vunpack.c.l.b16 %v1939
    %v2402 = vunpack.c.h.b16 %v1939
    %v2403 = vunpack.c.l.b16 %v1940
    %v2404 = vunpack.c.h.b16 %v1940
    %v2405 = vunpack.c.l.b16 %v1941
    %v2406 = vunpack.c.h.b16 %v1941
    %v2407 = vunpack.c.l.b16 %v1942
    %v2408 = vunpack.c.h.b16 %v1942
    %v2409 = vunpack.c.l.b16 %v1943
    %v2410 = vunpack.c.h.b16 %v1943
    %v2411 = vunpack.c.l.b16 %v1944
    %v2412 = vunpack.c.h.b16 %v1944
    %v2413 = vunpack.c.l.b16 %v1945
    %v2414 = vunpack.c.h.b16 %v1945
    %v2415 = vunpack.c.l.b16 %v1946
    %v2416 = vunpack.c.h.b16 %v1946
    %v2417 = vunpack.c.l.b16 %v1947
    %v2418 = vunpack.c.h.b16 %v1947
    %v2419 = vunpack.c.l.b16 %v1948
    %v2420 = vunpack.c.h.b16 %v1948
    %v2421 = vunpack.c.l.b16 %v1949
    %v2422 = vunpack.c.h.b16 %v1949
    %v2423 = vunpack.c.l.b16 %v1950
    %v2424 = vunpack.c.h.b16 %v1950
    %v2425 = vunpack.c.l.b16 %v1951
    %v2426 = vunpack.c.h.b16 %v1951
    %v2427 = vunpack.c.l.b16 %v1952
    %v2428 = vunpack.c.h.b16 %v1952
    %v2429 = vunpack.c.l.b16 %v1953
    %v2430 = vunpack.c.h.b16 %v1953
    %v2431 = vunpack.c.l.b16 %v1954
    %v2432 = vunpack.c.h.b16 %v1954
    %v2433 = vunpack.c.l.b16 %v1955
    %v2434 = vunpack.c.h.b16 %v1955
    %v2435 = vunpack.c.l.b16 %v1956
    %v2436 = vunpack.c.h.b16 %v1956
    %v2437 = vunpack.c.l.b16 %v1957
    %v2438 = vunpack.c.h.b16 %v1957
    %v2439 = vunpack.c.l.b16 %v1958
    %v2440 = vunpack.c.h.b16 %v1958
    %v2441 = vunpack.c.l.b16 %v1959
    %v2442 = vunpack.c.h.b16 %v1959
    %v2443 = vunpack.c.l.b16 %v1960
    %v2444 = vunpack.c.h.b16 %v1960
    %v2445 = vunpack.c.l.b16 %v1961
    %v2446 = vunpack.c.h.b16 %v1961
    %v2447 = vunpack.c.l.b16 %v1962
    %v2448 = vunpack.c.h.b16 %v1962
    %v2449 = vunpack.c.l.b16 %v1963
    %v2450 = vunpack.c.h.b16 %v1963
    %v2451 = vunpack.c.l.b16 %v1964
    %v2452 = vunpack.c.h.b16 %v1964
    %v2453 = vunpack.c.l.b16 %v1965
    %v2454 = vunpack.c.h.b16 %v1965
    %v2455 = vunpack.c.l.b16 %v1966
    %v2456 = vunpack.c.h.b16 %v1966
    %v2457 = vunpack.c.l.b16 %v1967
    %v2458 = vunpack.c.h.b16 %v1967
    %v2459 = vunpack.c.l.b16 %v1968
    %v2460 = vunpack.c.h.b16 %v1968
    %v2461 = vunpack.c.l.b16 %v1969
    %v2462 = vunpack.c.h.b16 %v1969
    %v2463 = vunpack.c.l.b16 %v1970
    %v2464 = vunpack.c.h.b16 %v1970
    %v2465 = vunpack.c.l.b16 %v1971
    %v2466 = vunpack.c.h.b16 %v1971
    %v2467 = vunpack.c.l.b16 %v1972
    %v2468 = vunpack.c.h.b16 %v1972
    %v2469 = vunpack.c.l.b16 %v1973
    %v2470 = vunpack.c.h.b16 %v1973
    %v2471 = vunpack.c.l.b16 %v1974
    %v2472 = vunpack.c.h.b16 %v1974
    %v2473 = vunpack.c.l.b16 %v1975
    %v2474 = vunpack.c.h.b16 %v1975
    %v2475 = vunpack.c.l.b16 %v1976
    %v2476 = vunpack.c.h.b16 %v1976
    %v2477 = vunpack.c.l.b16 %v1977
    %v2478 = vunpack.c.h.b16 %v1977
    %v2479 = vunpack.c.l.b16 %v1978
    %v2480 = vunpack.c.h.b16 %v1978
    %v2481 = vunpack.c.l.b16 %v1979
    %v2482 = vunpack.c.h.b16 %v1979
    %v2483 = vunpack.c.l.b16 %v1980
    %v2484 = vunpack.c.h.b16 %v1980
    %v2485 = vunpack.c.l.b16 %v1981
    %v2486 = vunpack.c.h.b16 %v1981
    %v2487 = vunpack.c.l.b16 %v1982
    %v2488 = vunpack.c.h.b16 %v1982
    %v2489 = vunpack.c.l.b16 %v1983
    %v2490 = vunpack.c.h.b16 %v1983
    %v2491 = vunpack.c.l.b16 %v1984
    %v2492 = vunpack.c.h.b16 %v1984
    %v2493 = vunpack.c.l.b16 %v1985
    %v2494 = vunpack.c.h.b16 %v1985
    %v2495 = vunpack.c.l.b16 %v1986
    %v2496 = vunpack.c.h.b16 %v1986
    %v2497 = vunpack.c.l.b16 %v1987
    %v2498 = vunpack.c.h.b16 %v1987
    %v2499 = vunpack.c.l.b16 %v1988
    %v2500 = vunpack.c.h.b16 %v1988
    %v2501 = vunpack.c.l.b16 %v1989
    %v2502 = vunpack.c.h.b16 %v1989
    %v2503 = vunpack.c.l.b16 %v1990
    %v2504 = vunpack.c.h.b16 %v1990
    %v2505 = vunpack.c.l.b16 %v1991
    %v2506 = vunpack.c.h.b16 %v1991
    %v2507 = vunpack.c.l.b16 %v1992
    %v2508 = vunpack.c.h.b16 %v1992
    %v2509 = vunpack.c.l.b16 %v1993
    %v2510 = vunpack.c.h.b16 %v1993
    %v2511 = vunpack.c.l.b16 %v1994
    %v2512 = vunpack.c.h.b16 %v1994
    %v2513 = vunpack.c.l.b16 %v1995
    %v2514 = vunpack.c.h.b16 %v1995
    %v2515 = vunpack.c.l.b16 %v1996
    %v2516 = vunpack.c.h.b16 %v1996
    %v2517 = vunpack.c.l.b16 %v1997
    %v2518 = vunpack.c.h.b16 %v1997
    %v2519 = vunpack.c.l.b16 %v1998
    %v2520 = vunpack.c.h.b16 %v1998
    %v2521 = vunpack.c.l.b16 %v1999
    %v2522 = vunpack.c.h.b16 %v1999
    %v2523 = vunpack.c.l.b16 %v2000
    %v2524 = vunpack.c.h.b16 %v2000
    %v2525 = vunpack.c.l.b16 %v2001
    %v2526 = vunpack.c.h.b16 %v2001
    %v2527 = vunpack.c.l.b16 %v2002
    %v2528 = vunpack.c.h.b16 %v2002
    %v2529 = vunpack.c.l.b16 %v2003
    %v2530 = vunpack.c.h.b16 %v2003
    %v2531 = vunpack.c.l.b16 %v2004
    %v2532 = vunpack.c.h.b16 %v2004
    %v2533 = vunpack.c.l.b16 %v2005
    %v2534 = vunpack.c.h.b16 %v2005
    %v2535 = vunpack.c.l.b16 %v2006
    %v2536 = vunpack.c.h.b16 %v2006
    %v2537 = vunpack.c.l.b16 %v2007
    %v2538 = vunpack.c.h.b16 %v2007
    %v2539 = vunpack.c.l.b16 %v2008
    %v2540 = vunpack.c.h.b16 %v2008
    %v2541 = vunpack.c.l.b16 %v2009
    %v2542 = vunpack.c.h.b16 %v2009
    %v2543 = vunpack.c.l.b16 %v2010
    %v2544 = vunpack.c.h.b16 %v2010
    %v2545 = vunpack.c.l.b16 %v2011
    %v2546 = vunpack.c.h.b16 %v2011
    %v2547 = vunpack.c.l.b16 %v2012
    %v2548 = vunpack.c.h.b16 %v2012
    %v2549 = vunpack.c.l.b16 %v2013
    %v2550 = vunpack.c.h.b16 %v2013
    %v2551 = vunpack.c.l.b16 %v2014
    %v2552 = vunpack.c.h.b16 %v2014
    %v2553 = vunpack.c.l.b16 %v2015
    %v2554 = vunpack.c.h.b16 %v2015
    %v2555 = vunpack.c.l.b16 %v2016
    %v2556 = vunpack.c.h.b16 %v2016
    %v2557 = vunpack.c.l.b16 %v2017
    %v2558 = vunpack.c.h.b16 %v2017
    %v2559 = vunpack.c.l.b16 %v2018
    %v2560 = vunpack.c.h.b16 %v2018
    %v2561 = vunpack.c.l.b16 %v2019
    %v2562 = vunpack.c.h.b16 %v2019
    %v2563 = vunpack.c.l.b16 %v2020
    %v2564 = vunpack.c.h.b16 %v2020
    %v2565 = vunpack.c.l.b16 %v2021
    %v2566 = vunpack.c.h.b16 %v2021
    %v2567 = vunpack.c.l.b16 %v2022
    %v2568 = vunpack.c.h.b16 %v2022
    %v2569 = vunpack.c.l.b16 %v2023
    %v2570 = vunpack.c.h.b16 %v2023
    %v2571 = vunpack.c.l.b16 %v2024
    %v2572 = vunpack.c.h.b16 %v2024
    %v2573 = vunpack.c.l.b16 %v2025
    %v2574 = vunpack.c.h.b16 %v2025
    %v2575 = vunpack.c.l.b16 %v2026
    %v2576 = vunpack.c.h.b16 %v2026
    %v2577 = vunpack.c.l.b16 %v2027
    %v2578 = vunpack.c.h.b16 %v2027
    %v2579 = vunpack.c.l.b16 %v2028
    %v2580 = vunpack.c.h.b16 %v2028
    %v2581 = vunpack.c.l.b16 %v2029
    %v2582 = vunpack.c.h.b16 %v2029
    %v2583 = vunpack.c.l.b16 %v2030
    %v2584 = vunpack.c.h.b16 %v2030
    %v2585 = vunpack.c.l.b16 %v2031
    %v2586 = vunpack.c.h.b16 %v2031
    %v2587 = vunpack.c.l.b16 %v2032
    %v2588 = vunpack.c.h.b16 %v2032
    %v2589 = vunpack.c.l.b16 %v2033
    %v2590 = vunpack.c.h.b16 %v2033
    %v2591 = vunpack.c.l.b16 %v2034
    %v2592 = vunpack.c.h.b16 %v2034
    %v2593 = vunpack.c.l.b16 %v2035
    %v2594 = vunpack.c.h.b16 %v2035
    %v2595 = vunpack.c.l.b16 %v2036
    %v2596 = vunpack.c.h.b16 %v2036
    %v2597 = vunpack.c.l.b16 %v2037
    %v2598 = vunpack.c.h.b16 %v2037
    %v2599 = vunpack.c.l.b16 %v2038
    %v2600 = vunpack.c.h.b16 %v2038
    %v2601 = vunpack.c.l.b16 %v2039
    %v2602 = vunpack.c.h.b16 %v2039
    %v2603 = vunpack.c.l.b16 %v2040
    %v2604 = vunpack.c.h.b16 %v2040
    %v2605 = vunpack.c.l.b16 %v2041
    %v2606 = vunpack.c.h.b16 %v2041
    %v2607 = vunpack.c.l.b16 %v2042
    %v2608 = vunpack.c.h.b16 %v2042
    %v2609 = vunpack.c.l.b16 %v2043
    %v2610 = vunpack.c.h.b16 %v2043
    %v2611 = vunpack.c.l.b16 %v2044
    %v2612 = vunpack.c.h.b16 %v2044
    %v2613 = vunpack.c.l.b16 %v2045
    %v2614 = vunpack.c.h.b16 %v2045
    %v2615 = vunpack.c.l.b16 %v2046
    %v2616 = vunpack.c.h.b16 %v2046
    %v2617 = vunpack.c.l.b16 %v2047
    %v2618 = vunpack.c.h.b16 %v2047
    %v2619 = vunpack.c.l.b16 %v2048
    %v2620 = vunpack.c.h.b16 %v2048
    %v2621 = vunpack.c.l.b16 %v2049
    %v2622 = vunpack.c.h.b16 %v2049
    %v2623 = vunpack.c.l.b16 %v2050
    %v2624 = vunpack.c.h.b16 %v2050
    %v2625 = vunpack.c.l.b16 %v2051
    %v2626 = vunpack.c.h.b16 %v2051
    %v2627 = vunpack.c.l.b16 %v2052
    %v2628 = vunpack.c.h.b16 %v2052
    %v2629 = vunpack.c.l.b16 %v2053
    %v2630 = vunpack.c.h.b16 %v2053
    %v2631 = vunpack.c.l.b16 %v2054
    %v2632 = vunpack.c.h.b16 %v2054
    %v2633 = vunpack.c.l.b16 %v2055
    %v2634 = vunpack.c.h.b16 %v2055
    %v2635 = vunpack.c.l.b16 %v2056
    %v2636 = vunpack.c.h.b16 %v2056
    %v2637 = vunpack.c.l.b16 %v2057
    %v2638 = vunpack.c.h.b16 %v2057
    %v2639 = vunpack.c.l.b16 %v2058
    %v2640 = vunpack.c.h.b16 %v2058
    %v2641 = vunpack.c.l.b16 %v2059
    %v2642 = vunpack.c.h.b16 %v2059
    %v2643 = vunpack.c.l.b16 %v2060
    %v2644 = vunpack.c.h.b16 %v2060
    %v2645 = vunpack.c.l.b16 %v2061
    %v2646 = vunpack.c.h.b16 %v2061
    %v2647 = vunpack.c.l.b16 %v2062
    %v2648 = vunpack.c.h.b16 %v2062
    %v2649 = vunpack.c.l.b16 %v2063
    %v2650 = vunpack.c.h.b16 %v2063
    %v2651 = vunpack.c.l.b16 %v2064
    %v2652 = vunpack.c.h.b16 %v2064
    %v2653 = vunpack.c.l.b16 %v2065
    %v2654 = vunpack.c.h.b16 %v2065
    %v2655 = vunpack.c.l.b16 %v2066
    %v2656 = vunpack.c.h.b16 %v2066
    %v2657 = vunpack.c.l.b16 %v2067
    %v2658 = vunpack.c.h.b16 %v2067
    %v2659 = vunpack.c.l.b16 %v2068
    %v2660 = vunpack.c.h.b16 %v2068
    %v2661 = vunpack.c.l.b16 %v2069
    %v2662 = vunpack.c.h.b16 %v2069
    %v2663 = vunpack.c.l.b16 %v2070
    %v2664 = vunpack.c.h.b16 %v2070
    %v2665 = vunpack.c.l.b16 %v2071
    %v2666 = vunpack.c.h.b16 %v2071
    %v2667 = vunpack.c.l.b16 %v2072
    %v2668 = vunpack.c.h.b16 %v2072
    %v2669 = vunpack.c.l.b16 %v2073
    %v2670 = vunpack.c.h.b16 %v2073
    %v2671 = vunpack.c.l.b16 %v2074
    %v2672 = vunpack.c.h.b16 %v2074
    %v2673 = vunpack.c.l.b16 %v2075
    %v2674 = vunpack.c.h.b16 %v2075
    %v2675 = vunpack.c.l.b16 %v2076
    %v2676 = vunpack.c.h.b16 %v2076
    %v2677 = vunpack.c.l.b16 %v2077
    %v2678 = vunpack.c.h.b16 %v2077
    %v2679 = vunpack.c.l.b16 %v2078
    %v2680 = vunpack.c.h.b16 %v2078
    %v2681 = vunpack.c.l.b16 %v2079
    %v2682 = vunpack.c.h.b16 %v2079
    %v2683 = vunpack.c.l.b16 %v2080
    %v2684 = vunpack.c.h.b16 %v2080
    %v2685 = vunpack.c.l.b16 %v2081
    %v2686 = vunpack.c.h.b16 %v2081
    %v2687 = vunpack.c.l.b16 %v2082
    %v2688 = vunpack.c.h.b16 %v2082
    %v2689 = vunpack.c.l.b16 %v2083
    %v2690 = vunpack.c.h.b16 %v2083
    %v2691 = vunpack.c.l.b16 %v2084
    %v2692 = vunpack.c.h.b16 %v2084
    %v2693 = vpack.c.b16 %v2315, %v2309
    %v2694 = vpack.c.b16 %v2316, %v2310
    %v2695 = vpack.c.b16 %v2317, %v2311
    %v2696 = vpack.c.b16 %v2318, %v2312
    %v2697 = vpack.c.b16 %v2319, %v2313
    %v2698 = vpack.c.b16 %v2320, %v2314
    %v2699 = vpack.c.b16 %v2327, %v2321
    %v2700 = vpack.c.b16 %v2328, %v2322
    %v2701 = vpack.c.b16 %v2329, %v2323
    %v2702 = vpack.c.b16 %v2330, %v2324
    %v2703 = vpack.c.b16 %v2331, %v2325
    %v2704 = vpack.c.b16 %v2332, %v2326
    %v2705 = vpack.c.b16 %v2339, %v2333
    %v2706 = vpack.c.b16 %v2340, %v2334
    %v2707 = vpack.c.b16 %v2341, %v2335
    %v2708 = vpack.c.b16 %v2342, %v2336
    %v2709 = vpack.c.b16 %v2343, %v2337
    %v2710 = vpack.c.b16 %v2344, %v2338
    %v2711 = vpack.c.b16 %v2351, %v2345
    %v2712 = vpack.c.b16 %v2352, %v2346
    %v2713 = vpack.c.b16 %v2353, %v2347
    %v2714 = vpack.c.b16 %v2354, %v2348
    %v2715 = vpack.c.b16 %v2355, %v2349
    %v2716 = vpack.c.b16 %v2356, %v2350
    %v2717 = vpack.c.b16 %v2363, %v2357
    %v2718 = vpack.c.b16 %v2364, %v2358
    %v2719 = vpack.c.b16 %v2365, %v2359
    %v2720 = vpack.c.b16 %v2366, %v2360
    %v2721 = vpack.c.b16 %v2367, %v2361
    %v2722 = vpack.c.b16 %v2368, %v2362
    %v2723 = vpack.c.b16 %v2375, %v2369
    %v2724 = vpack.c.b16 %v2376, %v2370
    %v2725 = vpack.c.b16 %v2377, %v2371
    %v2726 = vpack.c.b16 %v2378, %v2372
    %v2727 = vpack.c.b16 %v2379, %v2373
    %v2728 = vpack.c.b16 %v2380, %v2374
    %v2729 = vpack.c.b16 %v2387, %v2381
    %v2730 = vpack.c.b16 %v2388, %v2382
    %v2731 = vpack.c.b16 %v2389, %v2383
    %v2732 = vpack.c.b16 %v2390, %v2384
    %v2733 = vpack.c.b16 %v2391, %v2385
    %v2734 = vpack.c.b16 %v2392, %v2386
    %v2735 = vpack.c.b16 %v2399, %v2393
    %v2736 = vpack.c.b16 %v2400, %v2394
    %v2737 = vpack.c.b16 %v2401, %v2395
    %v2738 = vpack.c.b16 %v2402, %v2396
    %v2739 = vpack.c.b16 %v2403, %v2397
    %v2740 = vpack.c.b16 %v2404, %v2398
    %v2741 = vpack.c.b16 %v2411, %v2405
    %v2742 = vpack.c.b16 %v2412, %v2406
    %v2743 = vpack.c.b16 %v2413, %v2407
    %v2744 = vpack.c.b16 %v2414, %v2408
    %v2745 = vpack.c.b16 %v2415, %v2409
    %v2746 = vpack.c.b16 %v2416, %v2410
    %v2747 = vpack.c.b16 %v2423, %v2417
    %v2748 = vpack.c.b16 %v2424, %v2418
    %v2749 = vpack.c.b16 %v2425, %v2419
    %v2750 = vpack.c.b16 %v2426, %v2420
    %v2751 = vpack.c.b16 %v2427, %v2421
    %v2752 = vpack.c.b16 %v2428, %v2422
    %v2753 = vpack.c.b16 %v2435, %v2429
    %v2754 = vpack.c.b16 %v2436, %v2430
    %v2755 = vpack.c.b16 %v2437, %v2431
    %v2756 = vpack.c.b16 %v2438, %v2432
    %v2757 = vpack.c.b16 %v2439, %v2433
    %v2758 = vpack.c.b16 %v2440, %v2434
    %v2759 = vpack.c.b16 %v2447, %v2441
    %v2760 = vpack.c.b16 %v2448, %v2442
    %v2761 = vpack.c.b16 %v2449, %v2443
    %v2762 = vpack.c.b16 %v2450, %v2444
    %v2763 = vpack.c.b16 %v2451, %v2445
    %v2764 = vpack.c.b16 %v2452, %v2446
    %v2765 = vpack.c.b16 %v2459, %v2453
    %v2766 = vpack.c.b16 %v2460, %v2454
    %v2767 = vpack.c.b16 %v2461, %v2455
    %v2768 = vpack.c.b16 %v2462, %v2456
    %v2769 = vpack.c.b16 %v2463, %v2457
    %v2770 = vpack.c.b16 %v2464, %v2458
    %v2771 = vpack.c.b16 %v2471, %v2465
    %v2772 = vpack.c.b16 %v2472, %v2466
    %v2773 = vpack.c.b16 %v2473, %v2467
    %v2774 = vpack.c.b16 %v2474, %v2468
    %v2775 = vpack.c.b16 %v2475, %v2469
    %v2776 = vpack.c.b16 %v2476, %v2470
    %v2777 = vpack.c.b16 %v2483, %v2477
    %v2778 = vpack.c.b16 %v2484, %v2478
    %v2779 = vpack.c.b16 %v2485, %v2479
    %v2780 = vpack.c.b16 %v2486, %v2480
    %v2781 = vpack.c.b16 %v2487, %v2481
    %v2782 = vpack.c.b16 %v2488, %v2482
    %v2783 = vpack.c.b16 %v2495, %v2489
    %v2784 = vpack.c.b16 %v2496, %v2490
    %v2785 = vpack.c.b16 %v2497, %v2491
    %v2786 = vpack.c.b16 %v2498, %v2492
    %v2787 = vpack.c.b16 %v2499, %v2493
    %v2788 = vpack.c.b16 %v2500, %v2494
    %v2789 = vpack.c.b16 %v2507, %v2501
    %v2790 = vpack.c.b16 %v2508, %v2502
    %v2791 = vpack.c.b16 %v2509, %v2503
    %v2792 = vpack.c.b16 %v2510, %v2504
    %v2793 = vpack.c.b16 %v2511, %v2505
    %v2794 = vpack.c.b16 %v2512, %v2506
    %v2795 = vpack.c.b16 %v2519, %v2513
    %v2796 = vpack.c.b16 %v2520, %v2514
    %v2797 = vpack.c.b16 %v2521, %v2515
    %v2798 = vpack.c.b16 %v2522, %v2516
    %v2799 = vpack.c.b16 %v2523, %v2517
    %v2800 = vpack.c.b16 %v2524, %v2518
    %v2801 = vpack.c.b16 %v2531, %v2525
    %v2802 = vpack.c.b16 %v2532, %v2526
    %v2803 = vpack.c.b16 %v2533, %v2527
    %v2804 = vpack.c.b16 %v2534, %v2528
    %v2805 = vpack.c.b16 %v2535, %v2529
    %v2806 = vpack.c.b16 %v2536, %v2530
    %v2807 = vpack.c.b16 %v2543, %v2537
    %v2808 = vpack.c.b16 %v2544, %v2538
    %v2809 = vpack.c.b16 %v2545, %v2539
    %v2810 = vpack.c.b16 %v2546, %v2540
    %v2811 = vpack.c.b16 %v2547, %v2541
    %v2812 = vpack.c.b16 %v2548, %v2542
    %v2813 = vpack.c.b16 %v2555, %v2549
    %v2814 = vpack.c.b16 %v2556, %v2550
    %v2815 = vpack.c.b16 %v2557, %v2551
    %v2816 = vpack.c.b16 %v2558, %v2552
    %v2817 = vpack.c.b16 %v2559, %v2553
    %v2818 = vpack.c.b16 %v2560, %v2554
    %v2819 = vpack.c.b16 %v2567, %v2561
    %v2820 = vpack.c.b16 %v2568, %v2562
    %v2821 = vpack.c.b16 %v2569, %v2563
    %v2822 = vpack.c.b16 %v2570, %v2564
    %v2823 = vpack.c.b16 %v2571, %v2565
    %v2824 = vpack.c.b16 %v2572, %v2566
    %v2825 = vpack.c.b16 %v2579, %v2573
    %v2826 = vpack.c.b16 %v2580, %v2574
    %v2827 = vpack.c.b16 %v2581, %v2575
    %v2828 = vpack.c.b16 %v2582, %v2576
    %v2829 = vpack.c.b16 %v2583, %v2577
    %v2830 = vpack.c.b16 %v2584, %v2578
    %v2831 = vpack.c.b16 %v2591, %v2585
    %v2832 = vpack.c.b16 %v2592, %v2586
    %v2833 = vpack.c.b16 %v2593, %v2587
    %v2834 = vpack.c.b16 %v2594, %v2588
    %v2835 = vpack.c.b16 %v2595, %v2589
    %v2836 = vpack.c.b16 %v2596, %v2590
    %v2837 = vpack.c.b16 %v2603, %v2597
    %v2838 = vpack.c.b16 %v2604, %v2598
    %v2839 = vpack.c.b16 %v2605, %v2599
    %v2840 = vpack.c.b16 %v2606, %v2600
    %v2841 = vpack.c.b16 %v2607, %v2601
    %v2842 = vpack.c.b16 %v2608, %v2602
    %v2843 = vpack.c.b16 %v2615, %v2609
    %v2844 = vpack.c.b16 %v2616, %v2610
    %v2845 = vpack.c.b16 %v2617, %v2611
    %v2846 = vpack.c.b16 %v2618, %v2612
    %v2847 = vpack.c.b16 %v2619, %v2613
    %v2848 = vpack.c.b16 %v2620, %v2614
    %v2849 = vpack.c.b16 %v2627, %v2621
    %v2850 = vpack.c.b16 %v2628, %v2622
    %v2851 = vpack.c.b16 %v2629, %v2623
    %v2852 = vpack.c.b16 %v2630, %v2624
    %v2853 = vpack.c.b16 %v2631, %v2625
    %v2854 = vpack.c.b16 %v2632, %v2626
    %v2855 = vpack.c.b16 %v2639, %v2633
    %v2856 = vpack.c.b16 %v2640, %v2634
    %v2857 = vpack.c.b16 %v2641, %v2635
    %v2858 = vpack.c.b16 %v2642, %v2636
    %v2859 = vpack.c.b16 %v2643, %v2637
    %v2860 = vpack.c.b16 %v2644, %v2638
    %v2861 = vpack.c.b16 %v2651, %v2645
    %v2862 = vpack.c.b16 %v2652, %v2646
    %v2863 = vpack.c.b16 %v2653, %v2647
    %v2864 = vpack.c.b16 %v2654, %v2648
    %v2865 = vpack.c.b16 %v2655, %v2649
    %v2866 = vpack.c.b16 %v2656, %v2650
    %v2867 = vpack.c.b16 %v2663, %v2657
    %v2868 = vpack.c.b16 %v2664, %v2658
    %v2869 = vpack.c.b16 %v2665, %v2659
    %v2870 = vpack.c.b16 %v2666, %v2660
    %v2871 = vpack.c.b16 %v2667, %v2661
    %v2872 = vpack.c.b16 %v2668, %v2662
    %v2873 = vpack.c.b16 %v2675, %v2669
    %v2874 = vpack.c.b16 %v2676, %v2670
    %v2875 = vpack.c.b16 %v2677, %v2671
    %v2876 = vpack.c.b16 %v2678, %v2672
    %v2877 = vpack.c.b16 %v2679, %v2673
    %v2878 = vpack.c.b16 %v2680, %v2674
    %v2879 = vpack.c.b16 %v2687, %v2681
    %v2880 = vpack.c.b16 %v2688, %v2682
    %v2881 = vpack.c.b16 %v2689, %v2683
    %v2882 = vpack.c.b16 %v2690, %v2684
    %v2883 = vpack.c.b16 %v2691, %v2685
    %v2884 = vpack.c.b16 %v2692, %v2686
    %3077 = vmatprep.subr.bf16.mxu0 %v2736
    %3078 = vmatpush1.bf16.msra.mxu0 %v2735
    %3079 = vmatprep.subr.bf16.mxu0 %v2730
    %3080 = vmatpush1.bf16.msra.mxu0 %v2729
    %3081 = vmatprep.subr.bf16.mxu0 %v2724
    %3082 = vmatpush1.bf16.msra.mxu0 %v2723
    %3083 = vmatprep.subr.bf16.mxu0 %v2718
    %3084 = vmatpush1.bf16.msra.mxu0 %v2717
    %3085 = vmatprep.subr.bf16.mxu0 %v2712
    %3086 = vmatpush1.bf16.msra.mxu0 %v2711
    %3087 = vmatprep.subr.bf16.mxu0 %v2706
    %3088 = vmatpush1.bf16.msra.mxu0 %v2705
    %3089 = vmatprep.subr.bf16.mxu0 %v2700
    %3090 = vmatpush1.bf16.msra.mxu0 %v2699
    %3091 = vmatprep.subr.bf16.mxu0 %v2694
    %3092 = vmatpush1.bf16.msra.mxu0 %v2693
    %3093 = vmatprep.subr.bf16.mxu0 %v2784
    %3094 = vmatpush2.bf16.msra.mxu0 %v2783
    %3095 = vmatprep.subr.bf16.mxu0 %v2778
    %3096 = vmatpush2.bf16.msra.mxu0 %v2777
    %3097 = vmatprep.subr.bf16.mxu0 %v2772
    %3098 = vmatpush2.bf16.msra.mxu0 %v2771
    %3099 = vmatprep.subr.bf16.mxu0 %v2766
    %3100 = vmatpush2.bf16.msra.mxu0 %v2765
    %3101 = vmatprep.subr.bf16.mxu0 %v2760
    %3102 = vmatpush2.bf16.msra.mxu0 %v2759
    %3103 = vmatprep.subr.bf16.mxu0 %v2754
    %3104 = vmatpush2.bf16.msra.mxu0 %v2753
    %3105 = vmatprep.subr.bf16.mxu0 %v2748
    %3106 = vmatpush2.bf16.msra.mxu0 %v2747
    %3107 = vmatprep.subr.bf16.mxu0 %v2742
    %3108 = vmatpush2.bf16.msra.mxu0 %v2741
    %3109 = vmatprep.mubr.bf16.mxu0 %v1886
    %3110 = vmatmul.mubr.bf16.gmra.mxu0 %v1885
    %v3111 = vpop.f32.mrf.mxu0
    %v3112 = vadd.f32 %v2090, %v3111
    %v3113 = vpop.f32.mrf.mxu0
    %v3114 = vadd.f32 %v2094, %v3113
    %v3115 = vpop.f32.mrf.mxu0
    %v3116 = vadd.f32 %v2090, %v3115
    %v3117 = vpop.f32.mrf.mxu0
    %v3118 = vadd.f32 %v2094, %v3117
    %3119 = vmatprep.mubr.bf16.mxu0 %v1890
    %3120 = vmatmul.mubr.bf16.gmra.mxu0 %v1889
    %v3121 = vpop.f32.mrf.mxu0
    %v3122 = vadd.f32 %v2090, %v3121
    %v3123 = vpop.f32.mrf.mxu0
    %v3124 = vadd.f32 %v2094, %v3123
    %v3125 = vpop.f32.mrf.mxu0
    %v3126 = vpop.f32.mrf.mxu0
    %3127 = vdwg.mxu0
    %3128 = vmatprep.subr.bf16.mxu0 %v2832
    %3129 = vmatpush1.bf16.msra.mxu0 %v2831
    %3130 = vmatprep.subr.bf16.mxu0 %v2826
    %3131 = vmatpush1.bf16.msra.mxu0 %v2825
    %3132 = vmatprep.subr.bf16.mxu0 %v2820
    %3133 = vmatpush1.bf16.msra.mxu0 %v2819
    %3134 = vmatprep.subr.bf16.mxu0 %v2814
    %3135 = vmatpush1.bf16.msra.mxu0 %v2813
    %3136 = vmatprep.subr.bf16.mxu0 %v2808
    %3137 = vmatpush1.bf16.msra.mxu0 %v2807
    %3138 = vmatprep.subr.bf16.mxu0 %v2802
    %3139 = vmatpush1.bf16.msra.mxu0 %v2801
    %3140 = vmatprep.subr.bf16.mxu0 %v2796
    %3141 = vmatpush1.bf16.msra.mxu0 %v2795
    %3142 = vmatprep.subr.bf16.mxu0 %v2790
    %3143 = vmatpush1.bf16.msra.mxu0 %v2789
    %3144 = vmatprep.subr.bf16.mxu0 %v2880
    %3145 = vmatpush2.bf16.msra.mxu0 %v2879
    %3146 = vmatprep.subr.bf16.mxu0 %v2874
    %3147 = vmatpush2.bf16.msra.mxu0 %v2873
    %3148 = vmatprep.subr.bf16.mxu0 %v2868
    %3149 = vmatpush2.bf16.msra.mxu0 %v2867
    %3150 = vmatprep.subr.bf16.mxu0 %v2862
    %3151 = vmatpush2.bf16.msra.mxu0 %v2861
    %3152 = vmatprep.subr.bf16.mxu0 %v2856
    %3153 = vmatpush2.bf16.msra.mxu0 %v2855
    %3154 = vmatprep.subr.bf16.mxu0 %v2850
    %3155 = vmatpush2.bf16.msra.mxu0 %v2849
    %3156 = vmatprep.subr.bf16.mxu0 %v2844
    %3157 = vmatpush2.bf16.msra.mxu0 %v2843
    %3158 = vmatprep.subr.bf16.mxu0 %v2838
    %3159 = vmatpush2.bf16.msra.mxu0 %v2837
    %3160 = vmatprep.mubr.bf16.mxu0 %v1888
    %3161 = vmatmul.mubr.bf16.gmra.mxu0 %v1887
    %v3162 = vpop.f32.mrf.mxu0
    %v3163 = vadd.f32 %v3112, %v3162
    %v3164 = vpop.f32.mrf.mxu0
    %v3165 = vadd.f32 %v3114, %v3164
    %v3166 = vpop.f32.mrf.mxu0
    %v3167 = vadd.f32 %v3116, %v3166
    %v3168 = vpop.f32.mrf.mxu0
    %v3169 = vadd.f32 %v3118, %v3168
    %3170 = vmatprep.mubr.bf16.mxu0 %v1892
    %3171 = vmatmul.mubr.bf16.gmra.mxu0 %v1891
    %v3172 = vpop.f32.mrf.mxu0
    %v3173 = vadd.f32 %v3122, %v3172
    %v3174 = vpop.f32.mrf.mxu0
    %v3175 = vadd.f32 %v3124, %v3174
    %v3176 = vpop.f32.mrf.mxu0
    %v3177 = vpop.f32.mrf.mxu0
    %3178 = vdwg.mxu0
    %3179 = vmatprep.subr.bf16.mxu0 %v2738
    %3180 = vmatpush1.bf16.msra.mxu0 %v2737
    %3181 = vmatprep.subr.bf16.mxu0 %v2732
    %3182 = vmatpush1.bf16.msra.mxu0 %v2731
    %3183 = vmatprep.subr.bf16.mxu0 %v2726
    %3184 = vmatpush1.bf16.msra.mxu0 %v2725
    %3185 = vmatprep.subr.bf16.mxu0 %v2720
    %3186 = vmatpush1.bf16.msra.mxu0 %v2719
    %3187 = vmatprep.subr.bf16.mxu0 %v2714
    %3188 = vmatpush1.bf16.msra.mxu0 %v2713
    %3189 = vmatprep.subr.bf16.mxu0 %v2708
    %3190 = vmatpush1.bf16.msra.mxu0 %v2707
    %3191 = vmatprep.subr.bf16.mxu0 %v2702
    %3192 = vmatpush1.bf16.msra.mxu0 %v2701
    %3193 = vmatprep.subr.bf16.mxu0 %v2696
    %3194 = vmatpush1.bf16.msra.mxu0 %v2695
    %3195 = vmatprep.subr.bf16.mxu0 %v2786
    %3196 = vmatpush2.bf16.msra.mxu0 %v2785
    %3197 = vmatprep.subr.bf16.mxu0 %v2780
    %3198 = vmatpush2.bf16.msra.mxu0 %v2779
    %3199 = vmatprep.subr.bf16.mxu0 %v2774
    %3200 = vmatpush2.bf16.msra.mxu0 %v2773
    %3201 = vmatprep.subr.bf16.mxu0 %v2768
    %3202 = vmatpush2.bf16.msra.mxu0 %v2767
    %3203 = vmatprep.subr.bf16.mxu0 %v2762
    %3204 = vmatpush2.bf16.msra.mxu0 %v2761
    %3205 = vmatprep.subr.bf16.mxu0 %v2756
    %3206 = vmatpush2.bf16.msra.mxu0 %v2755
    %3207 = vmatprep.subr.bf16.mxu0 %v2750
    %3208 = vmatpush2.bf16.msra.mxu0 %v2749
    %3209 = vmatprep.subr.bf16.mxu0 %v2744
    %3210 = vmatpush2.bf16.msra.mxu0 %v2743
    %3211 = vmatprep.mubr.bf16.mxu0 %v1886
    %3212 = vmatmul.mubr.bf16.gmra.mxu0 %v1885
    %v3213 = vpop.f32.mrf.mxu0
    %v3214 = vadd.f32 %v2098, %v3213
    %v3215 = vpop.f32.mrf.mxu0
    %v3216 = vadd.f32 %v2102, %v3215
    %v3217 = vpop.f32.mrf.mxu0
    %v3218 = vadd.f32 %v2098, %v3217
    %v3219 = vpop.f32.mrf.mxu0
    %v3220 = vadd.f32 %v2102, %v3219
    %3221 = vmatprep.mubr.bf16.mxu0 %v1890
    %3222 = vmatmul.mubr.bf16.gmra.mxu0 %v1889
    %v3223 = vpop.f32.mrf.mxu0
    %v3224 = vadd.f32 %v2098, %v3223
    %v3225 = vpop.f32.mrf.mxu0
    %v3226 = vadd.f32 %v2102, %v3225
    %v3227 = vpop.f32.mrf.mxu0
    %v3228 = vpop.f32.mrf.mxu0
    %3229 = vdwg.mxu0
    %3230 = vmatprep.subr.bf16.mxu0 %v2834
    %3231 = vmatpush1.bf16.msra.mxu0 %v2833
    %3232 = vmatprep.subr.bf16.mxu0 %v2828
    %3233 = vmatpush1.bf16.msra.mxu0 %v2827
    %3234 = vmatprep.subr.bf16.mxu0 %v2822
    %3235 = vmatpush1.bf16.msra.mxu0 %v2821
    %3236 = vmatprep.subr.bf16.mxu0 %v2816
    %3237 = vmatpush1.bf16.msra.mxu0 %v2815
    %3238 = vmatprep.subr.bf16.mxu0 %v2810
    %3239 = vmatpush1.bf16.msra.mxu0 %v2809
    %3240 = vmatprep.subr.bf16.mxu0 %v2804
    %3241 = vmatpush1.bf16.msra.mxu0 %v2803
    %3242 = vmatprep.subr.bf16.mxu0 %v2798
    %3243 = vmatpush1.bf16.msra.mxu0 %v2797
    %3244 = vmatprep.subr.bf16.mxu0 %v2792
    %3245 = vmatpush1.bf16.msra.mxu0 %v2791
    %3246 = vmatprep.subr.bf16.mxu0 %v2882
    %3247 = vmatpush2.bf16.msra.mxu0 %v2881
    %3248 = vmatprep.subr.bf16.mxu0 %v2876
    %3249 = vmatpush2.bf16.msra.mxu0 %v2875
    %3250 = vmatprep.subr.bf16.mxu0 %v2870
    %3251 = vmatpush2.bf16.msra.mxu0 %v2869
    %3252 = vmatprep.subr.bf16.mxu0 %v2864
    %3253 = vmatpush2.bf16.msra.mxu0 %v2863
    %3254 = vmatprep.subr.bf16.mxu0 %v2858
    %3255 = vmatpush2.bf16.msra.mxu0 %v2857
    %3256 = vmatprep.subr.bf16.mxu0 %v2852
    %3257 = vmatpush2.bf16.msra.mxu0 %v2851
    %3258 = vmatprep.subr.bf16.mxu0 %v2846
    %3259 = vmatpush2.bf16.msra.mxu0 %v2845
    %3260 = vmatprep.subr.bf16.mxu0 %v2840
    %3261 = vmatpush2.bf16.msra.mxu0 %v2839
    %3262 = vmatprep.mubr.bf16.mxu0 %v1888
    %3263 = vmatmul.mubr.bf16.gmra.mxu0 %v1887
    %v3264 = vpop.f32.mrf.mxu0
    %v3265 = vadd.f32 %v3214, %v3264
    %v3266 = vpop.f32.mrf.mxu0
    %v3267 = vadd.f32 %v3216, %v3266
    %v3268 = vpop.f32.mrf.mxu0
    %v3269 = vadd.f32 %v3218, %v3268
    %v3270 = vpop.f32.mrf.mxu0
    %v3271 = vadd.f32 %v3220, %v3270
    %3272 = vmatprep.mubr.bf16.mxu0 %v1892
    %3273 = vmatmul.mubr.bf16.gmra.mxu0 %v1891
    %v3274 = vpop.f32.mrf.mxu0
    %v3275 = vadd.f32 %v3224, %v3274
    %v3276 = vpop.f32.mrf.mxu0
    %v3277 = vadd.f32 %v3226, %v3276
    %v3278 = vpop.f32.mrf.mxu0
    %v3279 = vpop.f32.mrf.mxu0
    %3280 = vdwg.mxu0
    %3281 = vmatprep.subr.bf16.mxu0 %v2740
    %3282 = vmatpush1.bf16.msra.mxu0 %v2739
    %3283 = vmatprep.subr.bf16.mxu0 %v2734
    %3284 = vmatpush1.bf16.msra.mxu0 %v2733
    %3285 = vmatprep.subr.bf16.mxu0 %v2728
    %3286 = vmatpush1.bf16.msra.mxu0 %v2727
    %3287 = vmatprep.subr.bf16.mxu0 %v2722
    %3288 = vmatpush1.bf16.msra.mxu0 %v2721
    %3289 = vmatprep.subr.bf16.mxu0 %v2716
    %3290 = vmatpush1.bf16.msra.mxu0 %v2715
    %3291 = vmatprep.subr.bf16.mxu0 %v2710
    %3292 = vmatpush1.bf16.msra.mxu0 %v2709
    %3293 = vmatprep.subr.bf16.mxu0 %v2704
    %3294 = vmatpush1.bf16.msra.mxu0 %v2703
    %3295 = vmatprep.subr.bf16.mxu0 %v2698
    %3296 = vmatpush1.bf16.msra.mxu0 %v2697
    %3297 = vmatprep.subr.bf16.mxu0 %v2788
    %3298 = vmatpush2.bf16.msra.mxu0 %v2787
    %3299 = vmatprep.subr.bf16.mxu0 %v2782
    %3300 = vmatpush2.bf16.msra.mxu0 %v2781
    %3301 = vmatprep.subr.bf16.mxu0 %v2776
    %3302 = vmatpush2.bf16.msra.mxu0 %v2775
    %3303 = vmatprep.subr.bf16.mxu0 %v2770
    %3304 = vmatpush2.bf16.msra.mxu0 %v2769
    %3305 = vmatprep.subr.bf16.mxu0 %v2764
    %3306 = vmatpush2.bf16.msra.mxu0 %v2763
    %3307 = vmatprep.subr.bf16.mxu0 %v2758
    %3308 = vmatpush2.bf16.msra.mxu0 %v2757
    %3309 = vmatprep.subr.bf16.mxu0 %v2752
    %3310 = vmatpush2.bf16.msra.mxu0 %v2751
    %3311 = vmatprep.subr.bf16.mxu0 %v2746
    %3312 = vmatpush2.bf16.msra.mxu0 %v2745
    %3313 = vmatprep.mubr.bf16.mxu0 %v1886
    %3314 = vmatmul.mubr.bf16.gmra.mxu0 %v1885
    %v3315 = vpop.f32.mrf.mxu0
    %v3316 = vadd.f32 %v2106, %v3315
    %v3317 = vpop.f32.mrf.mxu0
    %v3318 = vadd.f32 %v2110, %v3317
    %v3319 = vpop.f32.mrf.mxu0
    %v3320 = vadd.f32 %v2106, %v3319
    %v3321 = vpop.f32.mrf.mxu0
    %v3322 = vadd.f32 %v2110, %v3321
    %3323 = vmatprep.mubr.bf16.mxu0 %v1890
    %3324 = vmatmul.mubr.bf16.gmra.mxu0 %v1889
    %v3325 = vpop.f32.mrf.mxu0
    %v3326 = vadd.f32 %v2106, %v3325
    %v3327 = vpop.f32.mrf.mxu0
    %v3328 = vadd.f32 %v2110, %v3327
    %v3329 = vpop.f32.mrf.mxu0
    %v3330 = vpop.f32.mrf.mxu0
    %3331 = vdwg.mxu0
    %3332 = vmatprep.subr.bf16.mxu0 %v2836
    %3333 = vmatpush1.bf16.msra.mxu0 %v2835
    %3334 = vmatprep.subr.bf16.mxu0 %v2830
    %3335 = vmatpush1.bf16.msra.mxu0 %v2829
    %3336 = vmatprep.subr.bf16.mxu0 %v2824
    %3337 = vmatpush1.bf16.msra.mxu0 %v2823
    %3338 = vmatprep.subr.bf16.mxu0 %v2818
    %3339 = vmatpush1.bf16.msra.mxu0 %v2817
    %3340 = vmatprep.subr.bf16.mxu0 %v2812
    %3341 = vmatpush1.bf16.msra.mxu0 %v2811
    %3342 = vmatprep.subr.bf16.mxu0 %v2806
    %3343 = vmatpush1.bf16.msra.mxu0 %v2805
    %3344 = vmatprep.subr.bf16.mxu0 %v2800
    %3345 = vmatpush1.bf16.msra.mxu0 %v2799
    %3346 = vmatprep.subr.bf16.mxu0 %v2794
    %3347 = vmatpush1.bf16.msra.mxu0 %v2793
    %3348 = vmatprep.subr.bf16.mxu0 %v2884
    %3349 = vmatpush2.bf16.msra.mxu0 %v2883
    %3350 = vmatprep.subr.bf16.mxu0 %v2878
    %3351 = vmatpush2.bf16.msra.mxu0 %v2877
    %3352 = vmatprep.subr.bf16.mxu0 %v2872
    %3353 = vmatpush2.bf16.msra.mxu0 %v2871
    %3354 = vmatprep.subr.bf16.mxu0 %v2866
    %3355 = vmatpush2.bf16.msra.mxu0 %v2865
    %3356 = vmatprep.subr.bf16.mxu0 %v2860
    %3357 = vmatpush2.bf16.msra.mxu0 %v2859
    %3358 = vmatprep.subr.bf16.mxu0 %v2854
    %3359 = vmatpush2.bf16.msra.mxu0 %v2853
    %3360 = vmatprep.subr.bf16.mxu0 %v2848
    %3361 = vmatpush2.bf16.msra.mxu0 %v2847
    %3362 = vmatprep.subr.bf16.mxu0 %v2842
    %3363 = vmatpush2.bf16.msra.mxu0 %v2841
    %3364 = vmatprep.mubr.bf16.mxu0 %v1888
    %3365 = vmatmul.mubr.bf16.gmra.mxu0 %v1887
    %v3366 = vpop.f32.mrf.mxu0
    %v3367 = vadd.f32 %v3316, %v3366
    %v3368 = vpop.f32.mrf.mxu0
    %v3369 = vadd.f32 %v3318, %v3368
    %v3370 = vpop.f32.mrf.mxu0
    %v3371 = vadd.f32 %v3320, %v3370
    %v3372 = vpop.f32.mrf.mxu0
    %v3373 = vadd.f32 %v3322, %v3372
    %3374 = vmatprep.mubr.bf16.mxu0 %v1892
    %3375 = vmatmul.mubr.bf16.gmra.mxu0 %v1891
    %v3376 = vpop.f32.mrf.mxu0
    %v3377 = vadd.f32 %v3326, %v3376
    %v3378 = vpop.f32.mrf.mxu0
    %v3379 = vadd.f32 %v3328, %v3378
    %v3380 = vpop.f32.mrf.mxu0
    %v3381 = vpop.f32.mrf.mxu0
    %3382 = vdwg.mxu0
    %3383 = vst [vmem:[#allocation11] sm:$0xff] %v3163
    %3384 = vst [vmem:[#allocation11 + $0x8] sm:$0xff] %v3165
    %3385 = vst [vmem:[#allocation11 + $0x10] sm:$0xff] %v3265
    %3386 = vst [vmem:[#allocation11 + $0x18] sm:$0xff] %v3267
    %3387 = vst [vmem:[#allocation11 + $0x20] sm:$0xff] %v3367
    %3388 = vst [vmem:[#allocation11 + $0x28] sm:$0xff] %v3369
    %3389 = vst [vmem:[#allocation11 + $0x30] sm:$0xff] %v3167
    %3390 = vst [vmem:[#allocation11 + $0x38] sm:$0xff] %v3169
    %3391 = vst [vmem:[#allocation11 + $0x40] sm:$0xff] %v3269
    %3392 = vst [vmem:[#allocation11 + $0x48] sm:$0xff] %v3271
    %3393 = vst [vmem:[#allocation11 + $0x50] sm:$0xff] %v3371
    %3394 = vst [vmem:[#allocation11 + $0x58] sm:$0xff] %v3373
    %3395 = vst [vmem:[#allocation11 + $0x60] sm:$0xf] %v3173
    %3396 = vst [vmem:[#allocation11 + $0x68] sm:$0xf] %v3175
    %3397 = vst [vmem:[#allocation11 + $0x70] sm:$0xf] %v3275
    %3398 = vst [vmem:[#allocation11 + $0x78] sm:$0xf] %v3277
    %3399 = vst [vmem:[#allocation11 + $0x80] sm:$0xf] %v3377
    %3400 = vst [vmem:[#allocation11 + $0x88] sm:$0xf] %v3379
    // Predicated region
    $region50: #{tpu_custom_call.1} parent=1 // pred_check
      _
    $region51: #{tpu_custom_call.1} parent=1 // pred_check_branch
      %3402 = sbr.rel (0) target = $region53
    $region52: #{tpu_custom_call.1} parent=1 // pred_region
      %s3404 = ssub.s32 2304, 2304
      %3405 = vsyncadd [#allocation4], %s3404
      %s3406 = sshll.u32 [#allocation11], 4
      %s3407 = int_to_ptr.vmem [resolvable:$true] %s3406
      %3412 = dma.vmem_to_hbm [thread:$0]  %s3407, 2304, %s7, [#allocation4], 768, 768, 48
    $region53: #{tpu_custom_call.1} parent=1 // pred_fallthru
      _
    // Predicated region
    $region54: #{tpu_custom_call.1} parent=1 // pred_check
      _
    $region55: #{tpu_custom_call.1} parent=1 // pred_check_branch
      %3414 = sbr.rel (0) target = $region57
    $region56: #{tpu_custom_call.1} parent=1 // pred_region
      %3415 = dma.done [#allocation4], 2304
    $region57: #{tpu_custom_call.1} parent=1 // pred_fallthru
      _
    %3416 = vsyncpa [#allocation3], 1
    %3417 = vsyncpa [#allocation6], 1
    %3418 = vsyncpa [#allocation9], 1
    %3419 = vsyncpa [#allocation4], 1

// kernel: tpu_custom_call.1
$region0: #{tpu_custom_call.1}
  #allocation0 [shape = 'u32[]', space=smem, size = 0x4, offset = 0x4, fixed_abs, tag = 'smem constant byte address 0x4 - core index']
  #allocation1 [shape = 'u32[144,128]{1,0:T(1,128)}', space=vmem, size = 0x12000, scoped, tag = 'internal scratch']
  %s0 = inlined_call_operand.hbm [shape: f32[20,32], index: 0, kind: input, shape index: {}]
  %s1 = inlined_call_operand.hbm [shape: bf16[32,768], index: 1, kind: input, shape index: {}]
  %s2 = inlined_call_operand.hbm [shape: f32[1,768], index: 2, kind: input, shape index: {}]
  %s3 = inlined_call_operand.hbm [shape: bf16[768,512], index: 3, kind: input, shape index: {}]
  %s4 = inlined_call_operand.vmem [shape: f32[1,512], index: 4, kind: input, shape index: {}]
  %s5 = inlined_call_operand.hbm [shape: bf16[512,768], index: 5, kind: input, shape index: {}]
  %s6 = inlined_call_operand.vmem [shape: f32[1,768], index: 6, kind: input, shape index: {}]
  %s7 = inlined_call_operand.hbm [shape: f32[20,768], index: 7, kind: output, shape index: {}]
  %s8 = sld [smem:[#allocation0]]
  $region58: #{tpu_custom_call.1} parent=0
    _
  %s10 = ssub.s32 1, %s8
  %s11 = scalar_select 0, %s10, %s8
  $region1: #{tpu_custom_call.1} parent=0
    #allocation2 [shape = 'u8[12288]{0}', space=vmem, size = 0x3000, scoped, tag = 'input window, operand 0, single buffered']
    #allocation3 [shape = 's32[1]{0}', space=sflag, size = 0x4, scoped, tag = 'scoped memory for tpu_custom_call.1']
    #allocation4 [shape = 's32[1]{0}', space=sflag, size = 0x4, scoped, tag = 'scoped memory for tpu_custom_call.1']
    #allocation5 [shape = 'u8[49152]{0}', space=vmem, size = 0xc000, scoped, tag = 'input window, operand 1, single buffered']
    #allocation6 [shape = 's32[1]{0}', space=sflag, size = 0x4, scoped, tag = 'scoped memory for tpu_custom_call.1']
    #allocation7 [shape = 'u8[3072]{0}', space=vmem, size = 0xc00, scoped, tag = 'input window, operand 2, single buffered']
    #allocation8 [shape = 'u8[786432]{0}', space=vmem, size = 0xc0000, scoped, tag = 'input window, operand 3, single buffered']
    #allocation9 [shape = 's32[1]{0}', space=sflag, size = 0x4, scoped, tag = 'scoped memory for tpu_custom_call.1']
    #allocation10 [shape = 'u8[786432]{0}', space=vmem, size = 0xc0000, scoped, tag = 'input window, operand 5, single buffered']
    #allocation11 [shape = 'u8[73728]{0}', space=vmem, size = 0x12000, scoped, tag = 'output window, operand 0, single buffered']
    %12 = vsyncpa [#allocation3], 0
    %13 = vsyncpa [#allocation6], 0
    %14 = vsyncpa [#allocation9], 0
    %15 = vsyncpa [#allocation4], 0
    // Predicated region
    $region2: #{tpu_custom_call.1} parent=1 // pred_check
      _
    $region3: #{tpu_custom_call.1} parent=1 // pred_check_branch
      %17 = sbr.rel (0) target = $region5
    $region4: #{tpu_custom_call.1} parent=1 // pred_region
      %s19 = ssub.s32 384, 384
      %20 = vsyncadd [#allocation3], %s19
      %s21 = sshll.u32 [#allocation2], 4
      %s22 = int_to_ptr.vmem [resolvable:$true] %s21
      %27 = dma.hbm_to_vmem [thread:$0]  %s0, 384, %s22, [#allocation3], 128, 128, 8
    $region5: #{tpu_custom_call.1} parent=1 // pred_fallthru
      _
    // Predicated region
    $region6: #{tpu_custom_call.1} parent=1 // pred_check
      _
    $region7: #{tpu_custom_call.1} parent=1 // pred_check_branch
      %29 = sbr.rel (0) target = $region9
    $region8: #{tpu_custom_call.1} parent=1 // pred_region
      %s31 = ssub.s32 1536, 1536
      %32 = vsyncadd [#allocation6], %s31
      %s33 = sshll.u32 [#allocation5], 4
      %s34 = int_to_ptr.vmem [resolvable:$true] %s33
      %39 = dma.hbm_to_vmem [thread:$0]  %s1, 1536, %s34, [#allocation6], 384, 384, 24
    $region9: #{tpu_custom_call.1} parent=1 // pred_fallthru
      _
    // Predicated region
    $region10: #{tpu_custom_call.1} parent=1 // pred_check
      _
    $region11: #{tpu_custom_call.1} parent=1 // pred_check_branch
      %41 = sbr.rel (0) target = $region13
    $region12: #{tpu_custom_call.1} parent=1 // pred_region
      %s43 = ssub.s32 96, 96
      %44 = vsyncadd [#allocation6], %s43
      %s46 = sshll.u32 [#allocation7], 4
      %s47 = int_to_ptr.vmem [resolvable:$true] %s46
      %49 = dma.hbm_to_vmem [thread:$0]  %s2, 96, %s47, [#allocation6]
    $region13: #{tpu_custom_call.1} parent=1 // pred_fallthru
      _
    // Predicated region
    $region14: #{tpu_custom_call.1} parent=1 // pred_check
      _
    $region15: #{tpu_custom_call.1} parent=1 // pred_check_branch
      %51 = sbr.rel (0) target = $region17
    $region16: #{tpu_custom_call.1} parent=1 // pred_region
      %s53 = ssub.s32 24576, 24576
      %54 = vsyncadd [#allocation9], %s53
      %s55 = sshll.u32 [#allocation8], 4
      %s56 = int_to_ptr.vmem [resolvable:$true] %s55
      %61 = dma.hbm_to_vmem [thread:$0]  %s3, 24576, %s56, [#allocation9], 256, 256, 16
    $region17: #{tpu_custom_call.1} parent=1 // pred_fallthru
      _
    // Predicated region
    $region18: #{tpu_custom_call.1} parent=1 // pred_check
      _
    $region19: #{tpu_custom_call.1} parent=1 // pred_check_branch
      %63 = sbr.rel (0) target = $region21
    $region20: #{tpu_custom_call.1} parent=1 // pred_region
      _
    $region21: #{tpu_custom_call.1} parent=1 // pred_fallthru
      _
    // Predicated region
    $region22: #{tpu_custom_call.1} parent=1 // pred_check
      _
    $region23: #{tpu_custom_call.1} parent=1 // pred_check_branch
      %65 = sbr.rel (0) target = $region25
    $region24: #{tpu_custom_call.1} parent=1 // pred_region
      %s67 = ssub.s32 24576, 24576
      %68 = vsyncadd [#allocation9], %s67
      %s69 = sshll.u32 [#allocation10], 4
      %s70 = int_to_ptr.vmem [resolvable:$true] %s69
      %75 = dma.hbm_to_vmem [thread:$0]  %s5, 24576, %s70, [#allocation9], 384, 384, 24
    $region25: #{tpu_custom_call.1} parent=1 // pred_fallthru
      _
    // Predicated region
    $region26: #{tpu_custom_call.1} parent=1 // pred_check
      _
    $region27: #{tpu_custom_call.1} parent=1 // pred_check_branch
      %77 = sbr.rel (0) target = $region29
    $region28: #{tpu_custom_call.1} parent=1 // pred_region
      _
    $region29: #{tpu_custom_call.1} parent=1 // pred_fallthru
      _
    // Predicated region
    $region30: #{tpu_custom_call.1} parent=1 // pred_check
      _
    $region31: #{tpu_custom_call.1} parent=1 // pred_check_branch
      %79 = sbr.rel (0) target = $region33
    $region32: #{tpu_custom_call.1} parent=1 // pred_region
      %80 = dma.done [#allocation3], 384
    $region33: #{tpu_custom_call.1} parent=1 // pred_fallthru
      _
    // Predicated region
    $region34: #{tpu_custom_call.1} parent=1 // pred_check
      _
    $region35: #{tpu_custom_call.1} parent=1 // pred_check_branch
      %82 = sbr.rel (0) target = $region37
    $region36: #{tpu_custom_call.1} parent=1 // pred_region
      %83 = dma.done [#allocation6], 1536
    $region37: #{tpu_custom_call.1} parent=1 // pred_fallthru
      _
    // Predicated region
    $region38: #{tpu_custom_call.1} parent=1 // pred_check
      _
    $region39: #{tpu_custom_call.1} parent=1 // pred_check_branch
      %85 = sbr.rel (0) target = $region41
    $region40: #{tpu_custom_call.1} parent=1 // pred_region
      %86 = dma.done [#allocation6], 96
    $region41: #{tpu_custom_call.1} parent=1 // pred_fallthru
      _
    // Predicated region
    $region42: #{tpu_custom_call.1} parent=1 // pred_check
      _
    $region43: #{tpu_custom_call.1} parent=1 // pred_check_branch
      %88 = sbr.rel (0) target = $region45
    $region44: #{tpu_custom_call.1} parent=1 // pred_region
      %89 = dma.done [#allocation9], 24576
    $region45: #{tpu_custom_call.1} parent=1 // pred_fallthru
      _
    // Predicated region
    $region46: #{tpu_custom_call.1} parent=1 // pred_check
      _
    $region47: #{tpu_custom_call.1} parent=1 // pred_check_branch
      %91 = sbr.rel (0) target = $region49
    $region48: #{tpu_custom_call.1} parent=1 // pred_region
      %92 = dma.done [#allocation9], 24576
    $region49: #{tpu_custom_call.1} parent=1 // pred_fallthru
      _
    %v94 = vld [vmem:[#allocation2] sm:$0xff]
    %v95 = vld [vmem:[#allocation2 + $0x8] sm:$0xff]
    %v96 = vld [vmem:[#allocation2 + $0x10] sm:$0xf]
    %v97 = vpack.c.bf16 %v95, %v94
    %v98 = vpack.c.bf16 %v96, %v96
    %v99 = vld [vmem:[#allocation5] sm:$0xff]
    %v100 = vld [vmem:[#allocation5 + $0x8] sm:$0xff]
    %v101 = vld [vmem:[#allocation5 + $0x10] sm:$0xff]
    %v102 = vld [vmem:[#allocation5 + $0x18] sm:$0xff]
    %v103 = vld [vmem:[#allocation5 + $0x20] sm:$0xff]
    %v104 = vld [vmem:[#allocation5 + $0x28] sm:$0xff]
    %v105 = vld [vmem:[#allocation5 + $0x30] sm:$0xff]
    %v106 = vld [vmem:[#allocation5 + $0x38] sm:$0xff]
    %v107 = vld [vmem:[#allocation5 + $0x40] sm:$0xff]
    %v108 = vld [vmem:[#allocation5 + $0x48] sm:$0xff]
    %v109 = vld [vmem:[#allocation5 + $0x50] sm:$0xff]
    %v110 = vld [vmem:[#allocation5 + $0x58] sm:$0xff]
    %v111 = vld [vmem:[#allocation7] sm:$0x3f]
    %v113 = vlaneseq
    %v114 = vshrl.u32 %v113, 7
    %v115 = vsub.s32 0, %v114
    %v116 = vrot.slane %v111, %v115
    %v117 = vlaneseq
    %v118 = vshrl.u32 %v117, 7
    %v119 = vsub.s32 1, %v118
    %v120 = vrot.slane %v111, %v119
    %v121 = vlaneseq
    %v122 = vshrl.u32 %v121, 7
    %v123 = vsub.s32 2, %v122
    %v124 = vrot.slane %v111, %v123
    %v125 = vlaneseq
    %v126 = vshrl.u32 %v125, 7
    %v127 = vsub.s32 3, %v126
    %v128 = vrot.slane %v111, %v127
    %v129 = vlaneseq
    %v130 = vshrl.u32 %v129, 7
    %v131 = vsub.s32 4, %v130
    %v132 = vrot.slane %v111, %v131
    %v133 = vlaneseq
    %v134 = vshrl.u32 %v133, 7
    %v135 = vsub.s32 5, %v134
    %v136 = vrot.slane %v111, %v135
    %v155 = vunpack.c.l.b16 %v99
    %v156 = vunpack.c.h.b16 %v99
    %v157 = vunpack.c.l.b16 %v100
    %v158 = vunpack.c.h.b16 %v100
    %v159 = vunpack.c.l.b16 %v101
    %v160 = vunpack.c.h.b16 %v101
    %v161 = vunpack.c.l.b16 %v102
    %v162 = vunpack.c.h.b16 %v102
    %v163 = vunpack.c.l.b16 %v103
    %v164 = vunpack.c.h.b16 %v103
    %v165 = vunpack.c.l.b16 %v104
    %v166 = vunpack.c.h.b16 %v104
    %v167 = vunpack.c.l.b16 %v105
    %v168 = vunpack.c.h.b16 %v105
    %v169 = vunpack.c.l.b16 %v106
    %v170 = vunpack.c.h.b16 %v106
    %v171 = vunpack.c.l.b16 %v107
    %v172 = vunpack.c.h.b16 %v107
    %v173 = vunpack.c.l.b16 %v108
    %v174 = vunpack.c.h.b16 %v108
    %v175 = vunpack.c.l.b16 %v109
    %v176 = vunpack.c.h.b16 %v109
    %v177 = vunpack.c.l.b16 %v110
    %v178 = vunpack.c.h.b16 %v110
    %v179 = vpack.c.b16 %v161, %v155
    %v180 = vpack.c.b16 %v162, %v156
    %v181 = vpack.c.b16 %v163, %v157
    %v182 = vpack.c.b16 %v164, %v158
    %v183 = vpack.c.b16 %v165, %v159
    %v184 = vpack.c.b16 %v166, %v160
    %v185 = vpack.c.b16 %v173, %v167
    %v186 = vpack.c.b16 %v174, %v168
    %v187 = vpack.c.b16 %v175, %v169
    %v188 = vpack.c.b16 %v176, %v170
    %v189 = vpack.c.b16 %v177, %v171
    %v190 = vpack.c.b16 %v178, %v172
    %vm203 = vcmask 261120
    %v205 = vsel %vm203, %v97, 0
    %v208 = vsel %vm203, %v98, 0
    %210 = vmatprep.subr.bf16.mxu0 0
    %211 = vmatpush1.bf16.msra.mxu0 0
    %212 = vmatprep.subr.bf16.mxu0 0
    %213 = vmatpush1.bf16.msra.mxu0 0
    %214 = vmatprep.subr.bf16.mxu0 0
    %215 = vmatpush1.bf16.msra.mxu0 0
    %216 = vmatprep.subr.bf16.mxu0 0
    %217 = vmatpush1.bf16.msra.mxu0 0
    %218 = vmatprep.subr.bf16.mxu0 0
    %219 = vmatpush1.bf16.msra.mxu0 0
    %220 = vmatprep.subr.bf16.mxu0 0
    %221 = vmatpush1.bf16.msra.mxu0 0
    %222 = vmatprep.subr.bf16.mxu0 %v186
    %223 = vmatpush1.bf16.msra.mxu0 %v185
    %224 = vmatprep.subr.bf16.mxu0 %v180
    %225 = vmatpush1.bf16.msra.mxu0 %v179
    %226 = vmatprep.subr.bf16.mxu0 0
    %227 = vmatpush2.bf16.msra.mxu0 0
    %228 = vmatprep.subr.bf16.mxu0 0
    %229 = vmatpush2.bf16.msra.mxu0 0
    %230 = vmatprep.subr.bf16.mxu0 0
    %231 = vmatpush2.bf16.msra.mxu0 0
    %232 = vmatprep.subr.bf16.mxu0 0
    %233 = vmatpush2.bf16.msra.mxu0 0
    %234 = vmatprep.subr.bf16.mxu0 0
    %235 = vmatpush2.bf16.msra.mxu0 0
    %236 = vmatprep.subr.bf16.mxu0 0
    %237 = vmatpush2.bf16.msra.mxu0 0
    %238 = vmatprep.subr.bf16.mxu0 0
    %239 = vmatpush2.bf16.msra.mxu0 0
    %240 = vmatprep.subr.bf16.mxu0 0
    %241 = vmatpush2.bf16.msra.mxu0 0
    %242 = vmatprep.mubr.bf16.mxu0 0
    %243 = vmatmul.mubr.bf16.gmra.mxu0 %v205
    %v244 = vpop.f32.mrf.mxu0
    %v245 = vadd.f32 %v116, %v244
    %v246 = vpop.f32.mrf.mxu0
    %v247 = vadd.f32 %v120, %v246
    %v248 = vpop.f32.mrf.mxu0
    %v249 = vadd.f32 %v116, %v248
    %v250 = vpop.f32.mrf.mxu0
    %v251 = vadd.f32 %v120, %v250
    %252 = vmatprep.mubr.bf16.mxu0 0
    %253 = vmatmul.mubr.bf16.gmra.mxu0 %v208
    %v254 = vpop.f32.mrf.mxu0
    %v255 = vadd.f32 %v116, %v254
    %v256 = vpop.f32.mrf.mxu0
    %v257 = vadd.f32 %v120, %v256
    %v258 = vpop.f32.mrf.mxu0
    %v259 = vpop.f32.mrf.mxu0
    %260 = vdwg.mxu0
    %261 = vmatprep.subr.bf16.mxu0 0
    %262 = vmatpush1.bf16.msra.mxu0 0
    %263 = vmatprep.subr.bf16.mxu0 0
    %264 = vmatpush1.bf16.msra.mxu0 0
    %265 = vmatprep.subr.bf16.mxu0 0
    %266 = vmatpush1.bf16.msra.mxu0 0
    %267 = vmatprep.subr.bf16.mxu0 0
    %268 = vmatpush1.bf16.msra.mxu0 0
    %269 = vmatprep.subr.bf16.mxu0 0
    %270 = vmatpush1.bf16.msra.mxu0 0
    %271 = vmatprep.subr.bf16.mxu0 0
    %272 = vmatpush1.bf16.msra.mxu0 0
    %273 = vmatprep.subr.bf16.mxu0 %v188
    %274 = vmatpush1.bf16.msra.mxu0 %v187
    %275 = vmatprep.subr.bf16.mxu0 %v182
    %276 = vmatpush1.bf16.msra.mxu0 %v181
    %277 = vmatprep.subr.bf16.mxu0 0
    %278 = vmatpush2.bf16.msra.mxu0 0
    %279 = vmatprep.subr.bf16.mxu0 0
    %280 = vmatpush2.bf16.msra.mxu0 0
    %281 = vmatprep.subr.bf16.mxu0 0
    %282 = vmatpush2.bf16.msra.mxu0 0
    %283 = vmatprep.subr.bf16.mxu0 0
    %284 = vmatpush2.bf16.msra.mxu0 0
    %285 = vmatprep.subr.bf16.mxu0 0
    %286 = vmatpush2.bf16.msra.mxu0 0
    %287 = vmatprep.subr.bf16.mxu0 0
    %288 = vmatpush2.bf16.msra.mxu0 0
    %289 = vmatprep.subr.bf16.mxu0 0
    %290 = vmatpush2.bf16.msra.mxu0 0
    %291 = vmatprep.subr.bf16.mxu0 0
    %292 = vmatpush2.bf16.msra.mxu0 0
    %293 = vmatprep.mubr.bf16.mxu0 0
    %294 = vmatmul.mubr.bf16.gmra.mxu0 %v205
    %v295 = vpop.f32.mrf.mxu0
    %v296 = vadd.f32 %v124, %v295
    %v297 = vpop.f32.mrf.mxu0
    %v298 = vadd.f32 %v128, %v297
    %v299 = vpop.f32.mrf.mxu0
    %v300 = vadd.f32 %v124, %v299
    %v301 = vpop.f32.mrf.mxu0
    %v302 = vadd.f32 %v128, %v301
    %303 = vmatprep.mubr.bf16.mxu0 0
    %304 = vmatmul.mubr.bf16.gmra.mxu0 %v208
    %v305 = vpop.f32.mrf.mxu0
    %v306 = vadd.f32 %v124, %v305
    %v307 = vpop.f32.mrf.mxu0
    %v308 = vadd.f32 %v128, %v307
    %v309 = vpop.f32.mrf.mxu0
    %v310 = vpop.f32.mrf.mxu0
    %311 = vdwg.mxu0
    %312 = vmatprep.subr.bf16.mxu0 0
    %313 = vmatpush1.bf16.msra.mxu0 0
    %314 = vmatprep.subr.bf16.mxu0 0
    %315 = vmatpush1.bf16.msra.mxu0 0
    %316 = vmatprep.subr.bf16.mxu0 0
    %317 = vmatpush1.bf16.msra.mxu0 0
    %318 = vmatprep.subr.bf16.mxu0 0
    %319 = vmatpush1.bf16.msra.mxu0 0
    %320 = vmatprep.subr.bf16.mxu0 0
    %321 = vmatpush1.bf16.msra.mxu0 0
    %322 = vmatprep.subr.bf16.mxu0 0
    %323 = vmatpush1.bf16.msra.mxu0 0
    %324 = vmatprep.subr.bf16.mxu0 %v190
    %325 = vmatpush1.bf16.msra.mxu0 %v189
    %326 = vmatprep.subr.bf16.mxu0 %v184
    %327 = vmatpush1.bf16.msra.mxu0 %v183
    %328 = vmatprep.subr.bf16.mxu0 0
    %329 = vmatpush2.bf16.msra.mxu0 0
    %330 = vmatprep.subr.bf16.mxu0 0
    %331 = vmatpush2.bf16.msra.mxu0 0
    %332 = vmatprep.subr.bf16.mxu0 0
    %333 = vmatpush2.bf16.msra.mxu0 0
    %334 = vmatprep.subr.bf16.mxu0 0
    %335 = vmatpush2.bf16.msra.mxu0 0
    %336 = vmatprep.subr.bf16.mxu0 0
    %337 = vmatpush2.bf16.msra.mxu0 0
    %338 = vmatprep.subr.bf16.mxu0 0
    %339 = vmatpush2.bf16.msra.mxu0 0
    %340 = vmatprep.subr.bf16.mxu0 0
    %341 = vmatpush2.bf16.msra.mxu0 0
    %342 = vmatprep.subr.bf16.mxu0 0
    %343 = vmatpush2.bf16.msra.mxu0 0
    %344 = vmatprep.mubr.bf16.mxu0 0
    %345 = vmatmul.mubr.bf16.gmra.mxu0 %v205
    %v346 = vpop.f32.mrf.mxu0
    %v347 = vadd.f32 %v132, %v346
    %v348 = vpop.f32.mrf.mxu0
    %v349 = vadd.f32 %v136, %v348
    %v350 = vpop.f32.mrf.mxu0
    %v351 = vadd.f32 %v132, %v350
    %v352 = vpop.f32.mrf.mxu0
    %v353 = vadd.f32 %v136, %v352
    %354 = vmatprep.mubr.bf16.mxu0 0
    %355 = vmatmul.mubr.bf16.gmra.mxu0 %v208
    %v356 = vpop.f32.mrf.mxu0
    %v357 = vadd.f32 %v132, %v356
    %v358 = vpop.f32.mrf.mxu0
    %v359 = vadd.f32 %v136, %v358
    %v360 = vpop.f32.mrf.mxu0
    %v361 = vpop.f32.mrf.mxu0
    %362 = vdwg.mxu0
    %v363 = vmax.f32 %v245, 0.0
    %v364 = vmax.f32 %v247, 0.0
    %v365 = vmax.f32 %v296, 0.0
    %v366 = vmax.f32 %v298, 0.0
    %v367 = vmax.f32 %v347, 0.0
    %v368 = vmax.f32 %v349, 0.0
    %v369 = vmax.f32 %v249, 0.0
    %v370 = vmax.f32 %v251, 0.0
    %v371 = vmax.f32 %v300, 0.0
    %v372 = vmax.f32 %v302, 0.0
    %v373 = vmax.f32 %v351, 0.0
    %v374 = vmax.f32 %v353, 0.0
    %v375 = vmax.f32 %v255, 0.0
    %v376 = vmax.f32 %v257, 0.0
    %v377 = vmax.f32 %v306, 0.0
    %v378 = vmax.f32 %v308, 0.0
    %v379 = vmax.f32 %v357, 0.0
    %v380 = vmax.f32 %v359, 0.0
    %v381 = vpack.c.bf16 %v369, %v363
    %v382 = vpack.c.bf16 %v370, %v364
    %v383 = vpack.c.bf16 %v371, %v365
    %v384 = vpack.c.bf16 %v372, %v366
    %v385 = vpack.c.bf16 %v373, %v367
    %v386 = vpack.c.bf16 %v374, %v368
    %v387 = vpack.c.bf16 %v375, %v375
    %v388 = vpack.c.bf16 %v376, %v376
    %v389 = vpack.c.bf16 %v377, %v377
    %v390 = vpack.c.bf16 %v378, %v378
    %v391 = vpack.c.bf16 %v379, %v379
    %v392 = vpack.c.bf16 %v380, %v380
    %v393 = vld [vmem:[#allocation8] sm:$0xff]
    %v394 = vld [vmem:[#allocation8 + $0x8] sm:$0xff]
    %v395 = vld [vmem:[#allocation8 + $0x10] sm:$0xff]
    %v396 = vld [vmem:[#allocation8 + $0x18] sm:$0xff]
    %v397 = vld [vmem:[#allocation8 + $0x20] sm:$0xff]
    %v398 = vld [vmem:[#allocation8 + $0x28] sm:$0xff]
    %v399 = vld [vmem:[#allocation8 + $0x30] sm:$0xff]
    %v400 = vld [vmem:[#allocation8 + $0x38] sm:$0xff]
    %v401 = vld [vmem:[#allocation8 + $0x40] sm:$0xff]
    %v402 = vld [vmem:[#allocation8 + $0x48] sm:$0xff]
    %v403 = vld [vmem:[#allocation8 + $0x50] sm:$0xff]
    %v404 = vld [vmem:[#allocation8 + $0x58] sm:$0xff]
    %v405 = vld [vmem:[#allocation8 + $0x60] sm:$0xff]
    %v406 = vld [vmem:[#allocation8 + $0x68] sm:$0xff]
    %v407 = vld [vmem:[#allocation8 + $0x70] sm:$0xff]
    %v408 = vld [vmem:[#allocation8 + $0x78] sm:$0xff]
    %v409 = vld [vmem:[#allocation8 + $0x80] sm:$0xff]
    %v410 = vld [vmem:[#allocation8 + $0x88] sm:$0xff]
    %v411 = vld [vmem:[#allocation8 + $0x90] sm:$0xff]
    %v412 = vld [vmem:[#allocation8 + $0x98] sm:$0xff]
    %v413 = vld [vmem:[#allocation8 + $0xa0] sm:$0xff]
    %v414 = vld [vmem:[#allocation8 + $0xa8] sm:$0xff]
    %v415 = vld [vmem:[#allocation8 + $0xb0] sm:$0xff]
    %v416 = vld [vmem:[#allocation8 + $0xb8] sm:$0xff]
    %v417 = vld [vmem:[#allocation8 + $0xc0] sm:$0xff]
    %v418 = vld [vmem:[#allocation8 + $0xc8] sm:$0xff]
    %v419 = vld [vmem:[#allocation8 + $0xd0] sm:$0xff]
    %v420 = vld [vmem:[#allocation8 + $0xd8] sm:$0xff]
    %v421 = vld [vmem:[#allocation8 + $0xe0] sm:$0xff]
    %v422 = vld [vmem:[#allocation8 + $0xe8] sm:$0xff]
    %v423 = vld [vmem:[#allocation8 + $0xf0] sm:$0xff]
    %v424 = vld [vmem:[#allocation8 + $0xf8] sm:$0xff]
    %v425 = vld [vmem:[#allocation8 + $0x100] sm:$0xff]
    %v426 = vld [vmem:[#allocation8 + $0x108] sm:$0xff]
    %v427 = vld [vmem:[#allocation8 + $0x110] sm:$0xff]
    %v428 = vld [vmem:[#allocation8 + $0x118] sm:$0xff]
    %v429 = vld [vmem:[#allocation8 + $0x120] sm:$0xff]
    %v430 = vld [vmem:[#allocation8 + $0x128] sm:$0xff]
    %v431 = vld [vmem:[#allocation8 + $0x130] sm:$0xff]
    %v432 = vld [vmem:[#allocation8 + $0x138] sm:$0xff]
    %v433 = vld [vmem:[#allocation8 + $0x140] sm:$0xff]
    %v434 = vld [vmem:[#allocation8 + $0x148] sm:$0xff]
    %v435 = vld [vmem:[#allocation8 + $0x150] sm:$0xff]
    %v436 = vld [vmem:[#allocation8 + $0x158] sm:$0xff]
    %v437 = vld [vmem:[#allocation8 + $0x160] sm:$0xff]
    %v438 = vld [vmem:[#allocation8 + $0x168] sm:$0xff]
    %v439 = vld [vmem:[#allocation8 + $0x170] sm:$0xff]
    %v440 = vld [vmem:[#allocation8 + $0x178] sm:$0xff]
    %v441 = vld [vmem:[#allocation8 + $0x180] sm:$0xff]
    %v442 = vld [vmem:[#allocation8 + $0x188] sm:$0xff]
    %v443 = vld [vmem:[#allocation8 + $0x190] sm:$0xff]
    %v444 = vld [vmem:[#allocation8 + $0x198] sm:$0xff]
    %v445 = vld [vmem:[#allocation8 + $0x1a0] sm:$0xff]
    %v446 = vld [vmem:[#allocation8 + $0x1a8] sm:$0xff]
    %v447 = vld [vmem:[#allocation8 + $0x1b0] sm:$0xff]
    %v448 = vld [vmem:[#allocation8 + $0x1b8] sm:$0xff]
    %v449 = vld [vmem:[#allocation8 + $0x1c0] sm:$0xff]
    %v450 = vld [vmem:[#allocation8 + $0x1c8] sm:$0xff]
    %v451 = vld [vmem:[#allocation8 + $0x1d0] sm:$0xff]
    %v452 = vld [vmem:[#allocation8 + $0x1d8] sm:$0xff]
    %v453 = vld [vmem:[#allocation8 + $0x1e0] sm:$0xff]
    %v454 = vld [vmem:[#allocation8 + $0x1e8] sm:$0xff]
    %v455 = vld [vmem:[#allocation8 + $0x1f0] sm:$0xff]
    %v456 = vld [vmem:[#allocation8 + $0x1f8] sm:$0xff]
    %v457 = vld [vmem:[#allocation8 + $0x200] sm:$0xff]
    %v458 = vld [vmem:[#allocation8 + $0x208] sm:$0xff]
    %v459 = vld [vmem:[#allocation8 + $0x210] sm:$0xff]
    %v460 = vld [vmem:[#allocation8 + $0x218] sm:$0xff]
    %v461 = vld [vmem:[#allocation8 + $0x220] sm:$0xff]
    %v462 = vld [vmem:[#allocation8 + $0x228] sm:$0xff]
    %v463 = vld [vmem:[#allocation8 + $0x230] sm:$0xff]
    %v464 = vld [vmem:[#allocation8 + $0x238] sm:$0xff]
    %v465 = vld [vmem:[#allocation8 + $0x240] sm:$0xff]
    %v466 = vld [vmem:[#allocation8 + $0x248] sm:$0xff]
    %v467 = vld [vmem:[#allocation8 + $0x250] sm:$0xff]
    %v468 = vld [vmem:[#allocation8 + $0x258] sm:$0xff]
    %v469 = vld [vmem:[#allocation8 + $0x260] sm:$0xff]
    %v470 = vld [vmem:[#allocation8 + $0x268] sm:$0xff]
    %v471 = vld [vmem:[#allocation8 + $0x270] sm:$0xff]
    %v472 = vld [vmem:[#allocation8 + $0x278] sm:$0xff]
    %v473 = vld [vmem:[#allocation8 + $0x280] sm:$0xff]
    %v474 = vld [vmem:[#allocation8 + $0x288] sm:$0xff]
    %v475 = vld [vmem:[#allocation8 + $0x290] sm:$0xff]
    %v476 = vld [vmem:[#allocation8 + $0x298] sm:$0xff]
    %v477 = vld [vmem:[#allocation8 + $0x2a0] sm:$0xff]
    %v478 = vld [vmem:[#allocation8 + $0x2a8] sm:$0xff]
    %v479 = vld [vmem:[#allocation8 + $0x2b0] sm:$0xff]
    %v480 = vld [vmem:[#allocation8 + $0x2b8] sm:$0xff]
    %v481 = vld [vmem:[#allocation8 + $0x2c0] sm:$0xff]
    %v482 = vld [vmem:[#allocation8 + $0x2c8] sm:$0xff]
    %v483 = vld [vmem:[#allocation8 + $0x2d0] sm:$0xff]
    %v484 = vld [vmem:[#allocation8 + $0x2d8] sm:$0xff]
    %v485 = vld [vmem:[#allocation8 + $0x2e0] sm:$0xff]
    %v486 = vld [vmem:[#allocation8 + $0x2e8] sm:$0xff]
    %v487 = vld [vmem:[#allocation8 + $0x2f0] sm:$0xff]
    %v488 = vld [vmem:[#allocation8 + $0x2f8] sm:$0xff]
    %v489 = vld [vmem:[#allocation8 + $0x300] sm:$0xff]
    %v490 = vld [vmem:[#allocation8 + $0x308] sm:$0xff]
    %v491 = vld [vmem:[#allocation8 + $0x310] sm:$0xff]
    %v492 = vld [vmem:[#allocation8 + $0x318] sm:$0xff]
    %v493 = vld [vmem:[#allocation8 + $0x320] sm:$0xff]
    %v494 = vld [vmem:[#allocation8 + $0x328] sm:$0xff]
    %v495 = vld [vmem:[#allocation8 + $0x330] sm:$0xff]
    %v496 = vld [vmem:[#allocation8 + $0x338] sm:$0xff]
    %v497 = vld [vmem:[#allocation8 + $0x340] sm:$0xff]
    %v498 = vld [vmem:[#allocation8 + $0x348] sm:$0xff]
    %v499 = vld [vmem:[#allocation8 + $0x350] sm:$0xff]
    %v500 = vld [vmem:[#allocation8 + $0x358] sm:$0xff]
    %v501 = vld [vmem:[#allocation8 + $0x360] sm:$0xff]
    %v502 = vld [vmem:[#allocation8 + $0x368] sm:$0xff]
    %v503 = vld [vmem:[#allocation8 + $0x370] sm:$0xff]
    %v504 = vld [vmem:[#allocation8 + $0x378] sm:$0xff]
    %v505 = vld [vmem:[#allocation8 + $0x380] sm:$0xff]
    %v506 = vld [vmem:[#allocation8 + $0x388] sm:$0xff]
    %v507 = vld [vmem:[#allocation8 + $0x390] sm:$0xff]
    %v508 = vld [vmem:[#allocation8 + $0x398] sm:$0xff]
    %v509 = vld [vmem:[#allocation8 + $0x3a0] sm:$0xff]
    %v510 = vld [vmem:[#allocation8 + $0x3a8] sm:$0xff]
    %v511 = vld [vmem:[#allocation8 + $0x3b0] sm:$0xff]
    %v512 = vld [vmem:[#allocation8 + $0x3b8] sm:$0xff]
    %v513 = vld [vmem:[#allocation8 + $0x3c0] sm:$0xff]
    %v514 = vld [vmem:[#allocation8 + $0x3c8] sm:$0xff]
    %v515 = vld [vmem:[#allocation8 + $0x3d0] sm:$0xff]
    %v516 = vld [vmem:[#allocation8 + $0x3d8] sm:$0xff]
    %v517 = vld [vmem:[#allocation8 + $0x3e0] sm:$0xff]
    %v518 = vld [vmem:[#allocation8 + $0x3e8] sm:$0xff]
    %v519 = vld [vmem:[#allocation8 + $0x3f0] sm:$0xff]
    %v520 = vld [vmem:[#allocation8 + $0x3f8] sm:$0xff]
    %v521 = vld [vmem:[#allocation8 + $0x400] sm:$0xff]
    %v522 = vld [vmem:[#allocation8 + $0x408] sm:$0xff]
    %v523 = vld [vmem:[#allocation8 + $0x410] sm:$0xff]
    %v524 = vld [vmem:[#allocation8 + $0x418] sm:$0xff]
    %v525 = vld [vmem:[#allocation8 + $0x420] sm:$0xff]
    %v526 = vld [vmem:[#allocation8 + $0x428] sm:$0xff]
    %v527 = vld [vmem:[#allocation8 + $0x430] sm:$0xff]
    %v528 = vld [vmem:[#allocation8 + $0x438] sm:$0xff]
    %v529 = vld [vmem:[#allocation8 + $0x440] sm:$0xff]
    %v530 = vld [vmem:[#allocation8 + $0x448] sm:$0xff]
    %v531 = vld [vmem:[#allocation8 + $0x450] sm:$0xff]
    %v532 = vld [vmem:[#allocation8 + $0x458] sm:$0xff]
    %v533 = vld [vmem:[#allocation8 + $0x460] sm:$0xff]
    %v534 = vld [vmem:[#allocation8 + $0x468] sm:$0xff]
    %v535 = vld [vmem:[#allocation8 + $0x470] sm:$0xff]
    %v536 = vld [vmem:[#allocation8 + $0x478] sm:$0xff]
    %v537 = vld [vmem:[#allocation8 + $0x480] sm:$0xff]
    %v538 = vld [vmem:[#allocation8 + $0x488] sm:$0xff]
    %v539 = vld [vmem:[#allocation8 + $0x490] sm:$0xff]
    %v540 = vld [vmem:[#allocation8 + $0x498] sm:$0xff]
    %v541 = vld [vmem:[#allocation8 + $0x4a0] sm:$0xff]
    %v542 = vld [vmem:[#allocation8 + $0x4a8] sm:$0xff]
    %v543 = vld [vmem:[#allocation8 + $0x4b0] sm:$0xff]
    %v544 = vld [vmem:[#allocation8 + $0x4b8] sm:$0xff]
    %v545 = vld [vmem:[#allocation8 + $0x4c0] sm:$0xff]
    %v546 = vld [vmem:[#allocation8 + $0x4c8] sm:$0xff]
    %v547 = vld [vmem:[#allocation8 + $0x4d0] sm:$0xff]
    %v548 = vld [vmem:[#allocation8 + $0x4d8] sm:$0xff]
    %v549 = vld [vmem:[#allocation8 + $0x4e0] sm:$0xff]
    %v550 = vld [vmem:[#allocation8 + $0x4e8] sm:$0xff]
    %v551 = vld [vmem:[#allocation8 + $0x4f0] sm:$0xff]
    %v552 = vld [vmem:[#allocation8 + $0x4f8] sm:$0xff]
    %v553 = vld [vmem:[#allocation8 + $0x500] sm:$0xff]
    %v554 = vld [vmem:[#allocation8 + $0x508] sm:$0xff]
    %v555 = vld [vmem:[#allocation8 + $0x510] sm:$0xff]
    %v556 = vld [vmem:[#allocation8 + $0x518] sm:$0xff]
    %v557 = vld [vmem:[#allocation8 + $0x520] sm:$0xff]
    %v558 = vld [vmem:[#allocation8 + $0x528] sm:$0xff]
    %v559 = vld [vmem:[#allocation8 + $0x530] sm:$0xff]
    %v560 = vld [vmem:[#allocation8 + $0x538] sm:$0xff]
    %v561 = vld [vmem:[#allocation8 + $0x540] sm:$0xff]
    %v562 = vld [vmem:[#allocation8 + $0x548] sm:$0xff]
    %v563 = vld [vmem:[#allocation8 + $0x550] sm:$0xff]
    %v564 = vld [vmem:[#allocation8 + $0x558] sm:$0xff]
    %v565 = vld [vmem:[#allocation8 + $0x560] sm:$0xff]
    %v566 = vld [vmem:[#allocation8 + $0x568] sm:$0xff]
    %v567 = vld [vmem:[#allocation8 + $0x570] sm:$0xff]
    %v568 = vld [vmem:[#allocation8 + $0x578] sm:$0xff]
    %v569 = vld [vmem:[#allocation8 + $0x580] sm:$0xff]
    %v570 = vld [vmem:[#allocation8 + $0x588] sm:$0xff]
    %v571 = vld [vmem:[#allocation8 + $0x590] sm:$0xff]
    %v572 = vld [vmem:[#allocation8 + $0x598] sm:$0xff]
    %v573 = vld [vmem:[#allocation8 + $0x5a0] sm:$0xff]
    %v574 = vld [vmem:[#allocation8 + $0x5a8] sm:$0xff]
    %v575 = vld [vmem:[#allocation8 + $0x5b0] sm:$0xff]
    %v576 = vld [vmem:[#allocation8 + $0x5b8] sm:$0xff]
    %v577 = vld [vmem:[#allocation8 + $0x5c0] sm:$0xff]
    %v578 = vld [vmem:[#allocation8 + $0x5c8] sm:$0xff]
    %v579 = vld [vmem:[#allocation8 + $0x5d0] sm:$0xff]
    %v580 = vld [vmem:[#allocation8 + $0x5d8] sm:$0xff]
    %v581 = vld [vmem:[#allocation8 + $0x5e0] sm:$0xff]
    %v582 = vld [vmem:[#allocation8 + $0x5e8] sm:$0xff]
    %v583 = vld [vmem:[#allocation8 + $0x5f0] sm:$0xff]
    %v584 = vld [vmem:[#allocation8 + $0x5f8] sm:$0xff]
    %v585 = vld [vmem:[%s4] sm:$0xf]
    %v587 = vlaneseq
    %v588 = vshrl.u32 %v587, 7
    %v589 = vsub.s32 0, %v588
    %v590 = vrot.slane %v585, %v589
    %v591 = vlaneseq
    %v592 = vshrl.u32 %v591, 7
    %v593 = vsub.s32 1, %v592
    %v594 = vrot.slane %v585, %v593
    %v595 = vlaneseq
    %v596 = vshrl.u32 %v595, 7
    %v597 = vsub.s32 2, %v596
    %v598 = vrot.slane %v585, %v597
    %v599 = vlaneseq
    %v600 = vshrl.u32 %v599, 7
    %v601 = vsub.s32 3, %v600
    %v602 = vrot.slane %v585, %v601
    %v799 = vunpack.c.l.b16 %v393
    %v800 = vunpack.c.h.b16 %v393
    %v801 = vunpack.c.l.b16 %v394
    %v802 = vunpack.c.h.b16 %v394
    %v803 = vunpack.c.l.b16 %v395
    %v804 = vunpack.c.h.b16 %v395
    %v805 = vunpack.c.l.b16 %v396
    %v806 = vunpack.c.h.b16 %v396
    %v807 = vunpack.c.l.b16 %v397
    %v808 = vunpack.c.h.b16 %v397
    %v809 = vunpack.c.l.b16 %v398
    %v810 = vunpack.c.h.b16 %v398
    %v811 = vunpack.c.l.b16 %v399
    %v812 = vunpack.c.h.b16 %v399
    %v813 = vunpack.c.l.b16 %v400
    %v814 = vunpack.c.h.b16 %v400
    %v815 = vunpack.c.l.b16 %v401
    %v816 = vunpack.c.h.b16 %v401
    %v817 = vunpack.c.l.b16 %v402
    %v818 = vunpack.c.h.b16 %v402
    %v819 = vunpack.c.l.b16 %v403
    %v820 = vunpack.c.h.b16 %v403
    %v821 = vunpack.c.l.b16 %v404
    %v822 = vunpack.c.h.b16 %v404
    %v823 = vunpack.c.l.b16 %v405
    %v824 = vunpack.c.h.b16 %v405
    %v825 = vunpack.c.l.b16 %v406
    %v826 = vunpack.c.h.b16 %v406
    %v827 = vunpack.c.l.b16 %v407
    %v828 = vunpack.c.h.b16 %v407
    %v829 = vunpack.c.l.b16 %v408
    %v830 = vunpack.c.h.b16 %v408
    %v831 = vunpack.c.l.b16 %v409
    %v832 = vunpack.c.h.b16 %v409
    %v833 = vunpack.c.l.b16 %v410
    %v834 = vunpack.c.h.b16 %v410
    %v835 = vunpack.c.l.b16 %v411
    %v836 = vunpack.c.h.b16 %v411
    %v837 = vunpack.c.l.b16 %v412
    %v838 = vunpack.c.h.b16 %v412
    %v839 = vunpack.c.l.b16 %v413
    %v840 = vunpack.c.h.b16 %v413
    %v841 = vunpack.c.l.b16 %v414
    %v842 = vunpack.c.h.b16 %v414
    %v843 = vunpack.c.l.b16 %v415
    %v844 = vunpack.c.h.b16 %v415
    %v845 = vunpack.c.l.b16 %v416
    %v846 = vunpack.c.h.b16 %v416
    %v847 = vunpack.c.l.b16 %v417
    %v848 = vunpack.c.h.b16 %v417
    %v849 = vunpack.c.l.b16 %v418
    %v850 = vunpack.c.h.b16 %v418
    %v851 = vunpack.c.l.b16 %v419
    %v852 = vunpack.c.h.b16 %v419
    %v853 = vunpack.c.l.b16 %v420
    %v854 = vunpack.c.h.b16 %v420
    %v855 = vunpack.c.l.b16 %v421
    %v856 = vunpack.c.h.b16 %v421
    %v857 = vunpack.c.l.b16 %v422
    %v858 = vunpack.c.h.b16 %v422
    %v859 = vunpack.c.l.b16 %v423
    %v860 = vunpack.c.h.b16 %v423
    %v861 = vunpack.c.l.b16 %v424
    %v862 = vunpack.c.h.b16 %v424
    %v863 = vunpack.c.l.b16 %v425
    %v864 = vunpack.c.h.b16 %v425
    %v865 = vunpack.c.l.b16 %v426
    %v866 = vunpack.c.h.b16 %v426
    %v867 = vunpack.c.l.b16 %v427
    %v868 = vunpack.c.h.b16 %v427
    %v869 = vunpack.c.l.b16 %v428
    %v870 = vunpack.c.h.b16 %v428
    %v871 = vunpack.c.l.b16 %v429
    %v872 = vunpack.c.h.b16 %v429
    %v873 = vunpack.c.l.b16 %v430
    %v874 = vunpack.c.h.b16 %v430
    %v875 = vunpack.c.l.b16 %v431
    %v876 = vunpack.c.h.b16 %v431
    %v877 = vunpack.c.l.b16 %v432
    %v878 = vunpack.c.h.b16 %v432
    %v879 = vunpack.c.l.b16 %v433
    %v880 = vunpack.c.h.b16 %v433
    %v881 = vunpack.c.l.b16 %v434
    %v882 = vunpack.c.h.b16 %v434
    %v883 = vunpack.c.l.b16 %v435
    %v884 = vunpack.c.h.b16 %v435
    %v885 = vunpack.c.l.b16 %v436
    %v886 = vunpack.c.h.b16 %v436
    %v887 = vunpack.c.l.b16 %v437
    %v888 = vunpack.c.h.b16 %v437
    %v889 = vunpack.c.l.b16 %v438
    %v890 = vunpack.c.h.b16 %v438
    %v891 = vunpack.c.l.b16 %v439
    %v892 = vunpack.c.h.b16 %v439
    %v893 = vunpack.c.l.b16 %v440
    %v894 = vunpack.c.h.b16 %v440
    %v895 = vunpack.c.l.b16 %v441
    %v896 = vunpack.c.h.b16 %v441
    %v897 = vunpack.c.l.b16 %v442
    %v898 = vunpack.c.h.b16 %v442
    %v899 = vunpack.c.l.b16 %v443
    %v900 = vunpack.c.h.b16 %v443
    %v901 = vunpack.c.l.b16 %v444
    %v902 = vunpack.c.h.b16 %v444
    %v903 = vunpack.c.l.b16 %v445
    %v904 = vunpack.c.h.b16 %v445
    %v905 = vunpack.c.l.b16 %v446
    %v906 = vunpack.c.h.b16 %v446
    %v907 = vunpack.c.l.b16 %v447
    %v908 = vunpack.c.h.b16 %v447
    %v909 = vunpack.c.l.b16 %v448
    %v910 = vunpack.c.h.b16 %v448
    %v911 = vunpack.c.l.b16 %v449
    %v912 = vunpack.c.h.b16 %v449
    %v913 = vunpack.c.l.b16 %v450
    %v914 = vunpack.c.h.b16 %v450
    %v915 = vunpack.c.l.b16 %v451
    %v916 = vunpack.c.h.b16 %v451
    %v917 = vunpack.c.l.b16 %v452
    %v918 = vunpack.c.h.b16 %v452
    %v919 = vunpack.c.l.b16 %v453
    %v920 = vunpack.c.h.b16 %v453
    %v921 = vunpack.c.l.b16 %v454
    %v922 = vunpack.c.h.b16 %v454
    %v923 = vunpack.c.l.b16 %v455
    %v924 = vunpack.c.h.b16 %v455
    %v925 = vunpack.c.l.b16 %v456
    %v926 = vunpack.c.h.b16 %v456
    %v927 = vunpack.c.l.b16 %v457
    %v928 = vunpack.c.h.b16 %v457
    %v929 = vunpack.c.l.b16 %v458
    %v930 = vunpack.c.h.b16 %v458
    %v931 = vunpack.c.l.b16 %v459
    %v932 = vunpack.c.h.b16 %v459
    %v933 = vunpack.c.l.b16 %v460
    %v934 = vunpack.c.h.b16 %v460
    %v935 = vunpack.c.l.b16 %v461
    %v936 = vunpack.c.h.b16 %v461
    %v937 = vunpack.c.l.b16 %v462
    %v938 = vunpack.c.h.b16 %v462
    %v939 = vunpack.c.l.b16 %v463
    %v940 = vunpack.c.h.b16 %v463
    %v941 = vunpack.c.l.b16 %v464
    %v942 = vunpack.c.h.b16 %v464
    %v943 = vunpack.c.l.b16 %v465
    %v944 = vunpack.c.h.b16 %v465
    %v945 = vunpack.c.l.b16 %v466
    %v946 = vunpack.c.h.b16 %v466
    %v947 = vunpack.c.l.b16 %v467
    %v948 = vunpack.c.h.b16 %v467
    %v949 = vunpack.c.l.b16 %v468
    %v950 = vunpack.c.h.b16 %v468
    %v951 = vunpack.c.l.b16 %v469
    %v952 = vunpack.c.h.b16 %v469
    %v953 = vunpack.c.l.b16 %v470
    %v954 = vunpack.c.h.b16 %v470
    %v955 = vunpack.c.l.b16 %v471
    %v956 = vunpack.c.h.b16 %v471
    %v957 = vunpack.c.l.b16 %v472
    %v958 = vunpack.c.h.b16 %v472
    %v959 = vunpack.c.l.b16 %v473
    %v960 = vunpack.c.h.b16 %v473
    %v961 = vunpack.c.l.b16 %v474
    %v962 = vunpack.c.h.b16 %v474
    %v963 = vunpack.c.l.b16 %v475
    %v964 = vunpack.c.h.b16 %v475
    %v965 = vunpack.c.l.b16 %v476
    %v966 = vunpack.c.h.b16 %v476
    %v967 = vunpack.c.l.b16 %v477
    %v968 = vunpack.c.h.b16 %v477
    %v969 = vunpack.c.l.b16 %v478
    %v970 = vunpack.c.h.b16 %v478
    %v971 = vunpack.c.l.b16 %v479
    %v972 = vunpack.c.h.b16 %v479
    %v973 = vunpack.c.l.b16 %v480
    %v974 = vunpack.c.h.b16 %v480
    %v975 = vunpack.c.l.b16 %v481
    %v976 = vunpack.c.h.b16 %v481
    %v977 = vunpack.c.l.b16 %v482
    %v978 = vunpack.c.h.b16 %v482
    %v979 = vunpack.c.l.b16 %v483
    %v980 = vunpack.c.h.b16 %v483
    %v981 = vunpack.c.l.b16 %v484
    %v982 = vunpack.c.h.b16 %v484
    %v983 = vunpack.c.l.b16 %v485
    %v984 = vunpack.c.h.b16 %v485
    %v985 = vunpack.c.l.b16 %v486
    %v986 = vunpack.c.h.b16 %v486
    %v987 = vunpack.c.l.b16 %v487
    %v988 = vunpack.c.h.b16 %v487
    %v989 = vunpack.c.l.b16 %v488
    %v990 = vunpack.c.h.b16 %v488
    %v991 = vunpack.c.l.b16 %v489
    %v992 = vunpack.c.h.b16 %v489
    %v993 = vunpack.c.l.b16 %v490
    %v994 = vunpack.c.h.b16 %v490
    %v995 = vunpack.c.l.b16 %v491
    %v996 = vunpack.c.h.b16 %v491
    %v997 = vunpack.c.l.b16 %v492
    %v998 = vunpack.c.h.b16 %v492
    %v999 = vunpack.c.l.b16 %v493
    %v1000 = vunpack.c.h.b16 %v493
    %v1001 = vunpack.c.l.b16 %v494
    %v1002 = vunpack.c.h.b16 %v494
    %v1003 = vunpack.c.l.b16 %v495
    %v1004 = vunpack.c.h.b16 %v495
    %v1005 = vunpack.c.l.b16 %v496
    %v1006 = vunpack.c.h.b16 %v496
    %v1007 = vunpack.c.l.b16 %v497
    %v1008 = vunpack.c.h.b16 %v497
    %v1009 = vunpack.c.l.b16 %v498
    %v1010 = vunpack.c.h.b16 %v498
    %v1011 = vunpack.c.l.b16 %v499
    %v1012 = vunpack.c.h.b16 %v499
    %v1013 = vunpack.c.l.b16 %v500
    %v1014 = vunpack.c.h.b16 %v500
    %v1015 = vunpack.c.l.b16 %v501
    %v1016 = vunpack.c.h.b16 %v501
    %v1017 = vunpack.c.l.b16 %v502
    %v1018 = vunpack.c.h.b16 %v502
    %v1019 = vunpack.c.l.b16 %v503
    %v1020 = vunpack.c.h.b16 %v503
    %v1021 = vunpack.c.l.b16 %v504
    %v1022 = vunpack.c.h.b16 %v504
    %v1023 = vunpack.c.l.b16 %v505
    %v1024 = vunpack.c.h.b16 %v505
    %v1025 = vunpack.c.l.b16 %v506
    %v1026 = vunpack.c.h.b16 %v506
    %v1027 = vunpack.c.l.b16 %v507
    %v1028 = vunpack.c.h.b16 %v507
    %v1029 = vunpack.c.l.b16 %v508
    %v1030 = vunpack.c.h.b16 %v508
    %v1031 = vunpack.c.l.b16 %v509
    %v1032 = vunpack.c.h.b16 %v509
    %v1033 = vunpack.c.l.b16 %v510
    %v1034 = vunpack.c.h.b16 %v510
    %v1035 = vunpack.c.l.b16 %v511
    %v1036 = vunpack.c.h.b16 %v511
    %v1037 = vunpack.c.l.b16 %v512
    %v1038 = vunpack.c.h.b16 %v512
    %v1039 = vunpack.c.l.b16 %v513
    %v1040 = vunpack.c.h.b16 %v513
    %v1041 = vunpack.c.l.b16 %v514
    %v1042 = vunpack.c.h.b16 %v514
    %v1043 = vunpack.c.l.b16 %v515
    %v1044 = vunpack.c.h.b16 %v515
    %v1045 = vunpack.c.l.b16 %v516
    %v1046 = vunpack.c.h.b16 %v516
    %v1047 = vunpack.c.l.b16 %v517
    %v1048 = vunpack.c.h.b16 %v517
    %v1049 = vunpack.c.l.b16 %v518
    %v1050 = vunpack.c.h.b16 %v518
    %v1051 = vunpack.c.l.b16 %v519
    %v1052 = vunpack.c.h.b16 %v519
    %v1053 = vunpack.c.l.b16 %v520
    %v1054 = vunpack.c.h.b16 %v520
    %v1055 = vunpack.c.l.b16 %v521
    %v1056 = vunpack.c.h.b16 %v521
    %v1057 = vunpack.c.l.b16 %v522
    %v1058 = vunpack.c.h.b16 %v522
    %v1059 = vunpack.c.l.b16 %v523
    %v1060 = vunpack.c.h.b16 %v523
    %v1061 = vunpack.c.l.b16 %v524
    %v1062 = vunpack.c.h.b16 %v524
    %v1063 = vunpack.c.l.b16 %v525
    %v1064 = vunpack.c.h.b16 %v525
    %v1065 = vunpack.c.l.b16 %v526
    %v1066 = vunpack.c.h.b16 %v526
    %v1067 = vunpack.c.l.b16 %v527
    %v1068 = vunpack.c.h.b16 %v527
    %v1069 = vunpack.c.l.b16 %v528
    %v1070 = vunpack.c.h.b16 %v528
    %v1071 = vunpack.c.l.b16 %v529
    %v1072 = vunpack.c.h.b16 %v529
    %v1073 = vunpack.c.l.b16 %v530
    %v1074 = vunpack.c.h.b16 %v530
    %v1075 = vunpack.c.l.b16 %v531
    %v1076 = vunpack.c.h.b16 %v531
    %v1077 = vunpack.c.l.b16 %v532
    %v1078 = vunpack.c.h.b16 %v532
    %v1079 = vunpack.c.l.b16 %v533
    %v1080 = vunpack.c.h.b16 %v533
    %v1081 = vunpack.c.l.b16 %v534
    %v1082 = vunpack.c.h.b16 %v534
    %v1083 = vunpack.c.l.b16 %v535
    %v1084 = vunpack.c.h.b16 %v535
    %v1085 = vunpack.c.l.b16 %v536
    %v1086 = vunpack.c.h.b16 %v536
    %v1087 = vunpack.c.l.b16 %v537
    %v1088 = vunpack.c.h.b16 %v537
    %v1089 = vunpack.c.l.b16 %v538
    %v1090 = vunpack.c.h.b16 %v538
    %v1091 = vunpack.c.l.b16 %v539
    %v1092 = vunpack.c.h.b16 %v539
    %v1093 = vunpack.c.l.b16 %v540
    %v1094 = vunpack.c.h.b16 %v540
    %v1095 = vunpack.c.l.b16 %v541
    %v1096 = vunpack.c.h.b16 %v541
    %v1097 = vunpack.c.l.b16 %v542
    %v1098 = vunpack.c.h.b16 %v542
    %v1099 = vunpack.c.l.b16 %v543
    %v1100 = vunpack.c.h.b16 %v543
    %v1101 = vunpack.c.l.b16 %v544
    %v1102 = vunpack.c.h.b16 %v544
    %v1103 = vunpack.c.l.b16 %v545
    %v1104 = vunpack.c.h.b16 %v545
    %v1105 = vunpack.c.l.b16 %v546
    %v1106 = vunpack.c.h.b16 %v546
    %v1107 = vunpack.c.l.b16 %v547
    %v1108 = vunpack.c.h.b16 %v547
    %v1109 = vunpack.c.l.b16 %v548
    %v1110 = vunpack.c.h.b16 %v548
    %v1111 = vunpack.c.l.b16 %v549
    %v1112 = vunpack.c.h.b16 %v549
    %v1113 = vunpack.c.l.b16 %v550
    %v1114 = vunpack.c.h.b16 %v550
    %v1115 = vunpack.c.l.b16 %v551
    %v1116 = vunpack.c.h.b16 %v551
    %v1117 = vunpack.c.l.b16 %v552
    %v1118 = vunpack.c.h.b16 %v552
    %v1119 = vunpack.c.l.b16 %v553
    %v1120 = vunpack.c.h.b16 %v553
    %v1121 = vunpack.c.l.b16 %v554
    %v1122 = vunpack.c.h.b16 %v554
    %v1123 = vunpack.c.l.b16 %v555
    %v1124 = vunpack.c.h.b16 %v555
    %v1125 = vunpack.c.l.b16 %v556
    %v1126 = vunpack.c.h.b16 %v556
    %v1127 = vunpack.c.l.b16 %v557
    %v1128 = vunpack.c.h.b16 %v557
    %v1129 = vunpack.c.l.b16 %v558
    %v1130 = vunpack.c.h.b16 %v558
    %v1131 = vunpack.c.l.b16 %v559
    %v1132 = vunpack.c.h.b16 %v559
    %v1133 = vunpack.c.l.b16 %v560
    %v1134 = vunpack.c.h.b16 %v560
    %v1135 = vunpack.c.l.b16 %v561
    %v1136 = vunpack.c.h.b16 %v561
    %v1137 = vunpack.c.l.b16 %v562
    %v1138 = vunpack.c.h.b16 %v562
    %v1139 = vunpack.c.l.b16 %v563
    %v1140 = vunpack.c.h.b16 %v563
    %v1141 = vunpack.c.l.b16 %v564
    %v1142 = vunpack.c.h.b16 %v564
    %v1143 = vunpack.c.l.b16 %v565
    %v1144 = vunpack.c.h.b16 %v565
    %v1145 = vunpack.c.l.b16 %v566
    %v1146 = vunpack.c.h.b16 %v566
    %v1147 = vunpack.c.l.b16 %v567
    %v1148 = vunpack.c.h.b16 %v567
    %v1149 = vunpack.c.l.b16 %v568
    %v1150 = vunpack.c.h.b16 %v568
    %v1151 = vunpack.c.l.b16 %v569
    %v1152 = vunpack.c.h.b16 %v569
    %v1153 = vunpack.c.l.b16 %v570
    %v1154 = vunpack.c.h.b16 %v570
    %v1155 = vunpack.c.l.b16 %v571
    %v1156 = vunpack.c.h.b16 %v571
    %v1157 = vunpack.c.l.b16 %v572
    %v1158 = vunpack.c.h.b16 %v572
    %v1159 = vunpack.c.l.b16 %v573
    %v1160 = vunpack.c.h.b16 %v573
    %v1161 = vunpack.c.l.b16 %v574
    %v1162 = vunpack.c.h.b16 %v574
    %v1163 = vunpack.c.l.b16 %v575
    %v1164 = vunpack.c.h.b16 %v575
    %v1165 = vunpack.c.l.b16 %v576
    %v1166 = vunpack.c.h.b16 %v576
    %v1167 = vunpack.c.l.b16 %v577
    %v1168 = vunpack.c.h.b16 %v577
    %v1169 = vunpack.c.l.b16 %v578
    %v1170 = vunpack.c.h.b16 %v578
    %v1171 = vunpack.c.l.b16 %v579
    %v1172 = vunpack.c.h.b16 %v579
    %v1173 = vunpack.c.l.b16 %v580
    %v1174 = vunpack.c.h.b16 %v580
    %v1175 = vunpack.c.l.b16 %v581
    %v1176 = vunpack.c.h.b16 %v581
    %v1177 = vunpack.c.l.b16 %v582
    %v1178 = vunpack.c.h.b16 %v582
    %v1179 = vunpack.c.l.b16 %v583
    %v1180 = vunpack.c.h.b16 %v583
    %v1181 = vunpack.c.l.b16 %v584
    %v1182 = vunpack.c.h.b16 %v584
    %v1183 = vpack.c.b16 %v803, %v799
    %v1184 = vpack.c.b16 %v804, %v800
    %v1185 = vpack.c.b16 %v805, %v801
    %v1186 = vpack.c.b16 %v806, %v802
    %v1187 = vpack.c.b16 %v811, %v807
    %v1188 = vpack.c.b16 %v812, %v808
    %v1189 = vpack.c.b16 %v813, %v809
    %v1190 = vpack.c.b16 %v814, %v810
    %v1191 = vpack.c.b16 %v819, %v815
    %v1192 = vpack.c.b16 %v820, %v816
    %v1193 = vpack.c.b16 %v821, %v817
    %v1194 = vpack.c.b16 %v822, %v818
    %v1195 = vpack.c.b16 %v827, %v823
    %v1196 = vpack.c.b16 %v828, %v824
    %v1197 = vpack.c.b16 %v829, %v825
    %v1198 = vpack.c.b16 %v830, %v826
    %v1199 = vpack.c.b16 %v835, %v831
    %v1200 = vpack.c.b16 %v836, %v832
    %v1201 = vpack.c.b16 %v837, %v833
    %v1202 = vpack.c.b16 %v838, %v834
    %v1203 = vpack.c.b16 %v843, %v839
    %v1204 = vpack.c.b16 %v844, %v840
    %v1205 = vpack.c.b16 %v845, %v841
    %v1206 = vpack.c.b16 %v846, %v842
    %v1207 = vpack.c.b16 %v851, %v847
    %v1208 = vpack.c.b16 %v852, %v848
    %v1209 = vpack.c.b16 %v853, %v849
    %v1210 = vpack.c.b16 %v854, %v850
    %v1211 = vpack.c.b16 %v859, %v855
    %v1212 = vpack.c.b16 %v860, %v856
    %v1213 = vpack.c.b16 %v861, %v857
    %v1214 = vpack.c.b16 %v862, %v858
    %v1215 = vpack.c.b16 %v867, %v863
    %v1216 = vpack.c.b16 %v868, %v864
    %v1217 = vpack.c.b16 %v869, %v865
    %v1218 = vpack.c.b16 %v870, %v866
    %v1219 = vpack.c.b16 %v875, %v871
    %v1220 = vpack.c.b16 %v876, %v872
    %v1221 = vpack.c.b16 %v877, %v873
    %v1222 = vpack.c.b16 %v878, %v874
    %v1223 = vpack.c.b16 %v883, %v879
    %v1224 = vpack.c.b16 %v884, %v880
    %v1225 = vpack.c.b16 %v885, %v881
    %v1226 = vpack.c.b16 %v886, %v882
    %v1227 = vpack.c.b16 %v891, %v887
    %v1228 = vpack.c.b16 %v892, %v888
    %v1229 = vpack.c.b16 %v893, %v889
    %v1230 = vpack.c.b16 %v894, %v890
    %v1231 = vpack.c.b16 %v899, %v895
    %v1232 = vpack.c.b16 %v900, %v896
    %v1233 = vpack.c.b16 %v901, %v897
    %v1234 = vpack.c.b16 %v902, %v898
    %v1235 = vpack.c.b16 %v907, %v903
    %v1236 = vpack.c.b16 %v908, %v904
    %v1237 = vpack.c.b16 %v909, %v905
    %v1238 = vpack.c.b16 %v910, %v906
    %v1239 = vpack.c.b16 %v915, %v911
    %v1240 = vpack.c.b16 %v916, %v912
    %v1241 = vpack.c.b16 %v917, %v913
    %v1242 = vpack.c.b16 %v918, %v914
    %v1243 = vpack.c.b16 %v923, %v919
    %v1244 = vpack.c.b16 %v924, %v920
    %v1245 = vpack.c.b16 %v925, %v921
    %v1246 = vpack.c.b16 %v926, %v922
    %v1247 = vpack.c.b16 %v931, %v927
    %v1248 = vpack.c.b16 %v932, %v928
    %v1249 = vpack.c.b16 %v933, %v929
    %v1250 = vpack.c.b16 %v934, %v930
    %v1251 = vpack.c.b16 %v939, %v935
    %v1252 = vpack.c.b16 %v940, %v936
    %v1253 = vpack.c.b16 %v941, %v937
    %v1254 = vpack.c.b16 %v942, %v938
    %v1255 = vpack.c.b16 %v947, %v943
    %v1256 = vpack.c.b16 %v948, %v944
    %v1257 = vpack.c.b16 %v949, %v945
    %v1258 = vpack.c.b16 %v950, %v946
    %v1259 = vpack.c.b16 %v955, %v951
    %v1260 = vpack.c.b16 %v956, %v952
    %v1261 = vpack.c.b16 %v957, %v953
    %v1262 = vpack.c.b16 %v958, %v954
    %v1263 = vpack.c.b16 %v963, %v959
    %v1264 = vpack.c.b16 %v964, %v960
    %v1265 = vpack.c.b16 %v965, %v961
    %v1266 = vpack.c.b16 %v966, %v962
    %v1267 = vpack.c.b16 %v971, %v967
    %v1268 = vpack.c.b16 %v972, %v968
    %v1269 = vpack.c.b16 %v973, %v969
    %v1270 = vpack.c.b16 %v974, %v970
    %v1271 = vpack.c.b16 %v979, %v975
    %v1272 = vpack.c.b16 %v980, %v976
    %v1273 = vpack.c.b16 %v981, %v977
    %v1274 = vpack.c.b16 %v982, %v978
    %v1275 = vpack.c.b16 %v987, %v983
    %v1276 = vpack.c.b16 %v988, %v984
    %v1277 = vpack.c.b16 %v989, %v985
    %v1278 = vpack.c.b16 %v990, %v986
    %v1279 = vpack.c.b16 %v995, %v991
    %v1280 = vpack.c.b16 %v996, %v992
    %v1281 = vpack.c.b16 %v997, %v993
    %v1282 = vpack.c.b16 %v998, %v994
    %v1283 = vpack.c.b16 %v1003, %v999
    %v1284 = vpack.c.b16 %v1004, %v1000
    %v1285 = vpack.c.b16 %v1005, %v1001
    %v1286 = vpack.c.b16 %v1006, %v1002
    %v1287 = vpack.c.b16 %v1011, %v1007
    %v1288 = vpack.c.b16 %v1012, %v1008
    %v1289 = vpack.c.b16 %v1013, %v1009
    %v1290 = vpack.c.b16 %v1014, %v1010
    %v1291 = vpack.c.b16 %v1019, %v1015
    %v1292 = vpack.c.b16 %v1020, %v1016
    %v1293 = vpack.c.b16 %v1021, %v1017
    %v1294 = vpack.c.b16 %v1022, %v1018
    %v1295 = vpack.c.b16 %v1027, %v1023
    %v1296 = vpack.c.b16 %v1028, %v1024
    %v1297 = vpack.c.b16 %v1029, %v1025
    %v1298 = vpack.c.b16 %v1030, %v1026
    %v1299 = vpack.c.b16 %v1035, %v1031
    %v1300 = vpack.c.b16 %v1036, %v1032
    %v1301 = vpack.c.b16 %v1037, %v1033
    %v1302 = vpack.c.b16 %v1038, %v1034
    %v1303 = vpack.c.b16 %v1043, %v1039
    %v1304 = vpack.c.b16 %v1044, %v1040
    %v1305 = vpack.c.b16 %v1045, %v1041
    %v1306 = vpack.c.b16 %v1046, %v1042
    %v1307 = vpack.c.b16 %v1051, %v1047
    %v1308 = vpack.c.b16 %v1052, %v1048
    %v1309 = vpack.c.b16 %v1053, %v1049
    %v1310 = vpack.c.b16 %v1054, %v1050
    %v1311 = vpack.c.b16 %v1059, %v1055
    %v1312 = vpack.c.b16 %v1060, %v1056
    %v1313 = vpack.c.b16 %v1061, %v1057
    %v1314 = vpack.c.b16 %v1062, %v1058
    %v1315 = vpack.c.b16 %v1067, %v1063
    %v1316 = vpack.c.b16 %v1068, %v1064
    %v1317 = vpack.c.b16 %v1069, %v1065
    %v1318 = vpack.c.b16 %v1070, %v1066
    %v1319 = vpack.c.b16 %v1075, %v1071
    %v1320 = vpack.c.b16 %v1076, %v1072
    %v1321 = vpack.c.b16 %v1077, %v1073
    %v1322 = vpack.c.b16 %v1078, %v1074
    %v1323 = vpack.c.b16 %v1083, %v1079
    %v1324 = vpack.c.b16 %v1084, %v1080
    %v1325 = vpack.c.b16 %v1085, %v1081
    %v1326 = vpack.c.b16 %v1086, %v1082
    %v1327 = vpack.c.b16 %v1091, %v1087
    %v1328 = vpack.c.b16 %v1092, %v1088
    %v1329 = vpack.c.b16 %v1093, %v1089
    %v1330 = vpack.c.b16 %v1094, %v1090
    %v1331 = vpack.c.b16 %v1099, %v1095
    %v1332 = vpack.c.b16 %v1100, %v1096
    %v1333 = vpack.c.b16 %v1101, %v1097
    %v1334 = vpack.c.b16 %v1102, %v1098
    %v1335 = vpack.c.b16 %v1107, %v1103
    %v1336 = vpack.c.b16 %v1108, %v1104
    %v1337 = vpack.c.b16 %v1109, %v1105
    %v1338 = vpack.c.b16 %v1110, %v1106
    %v1339 = vpack.c.b16 %v1115, %v1111
    %v1340 = vpack.c.b16 %v1116, %v1112
    %v1341 = vpack.c.b16 %v1117, %v1113
    %v1342 = vpack.c.b16 %v1118, %v1114
    %v1343 = vpack.c.b16 %v1123, %v1119
    %v1344 = vpack.c.b16 %v1124, %v1120
    %v1345 = vpack.c.b16 %v1125, %v1121
    %v1346 = vpack.c.b16 %v1126, %v1122
    %v1347 = vpack.c.b16 %v1131, %v1127
    %v1348 = vpack.c.b16 %v1132, %v1128
    %v1349 = vpack.c.b16 %v1133, %v1129
    %v1350 = vpack.c.b16 %v1134, %v1130
    %v1351 = vpack.c.b16 %v1139, %v1135
    %v1352 = vpack.c.b16 %v1140, %v1136
    %v1353 = vpack.c.b16 %v1141, %v1137
    %v1354 = vpack.c.b16 %v1142, %v1138
    %v1355 = vpack.c.b16 %v1147, %v1143
    %v1356 = vpack.c.b16 %v1148, %v1144
    %v1357 = vpack.c.b16 %v1149, %v1145
    %v1358 = vpack.c.b16 %v1150, %v1146
    %v1359 = vpack.c.b16 %v1155, %v1151
    %v1360 = vpack.c.b16 %v1156, %v1152
    %v1361 = vpack.c.b16 %v1157, %v1153
    %v1362 = vpack.c.b16 %v1158, %v1154
    %v1363 = vpack.c.b16 %v1163, %v1159
    %v1364 = vpack.c.b16 %v1164, %v1160
    %v1365 = vpack.c.b16 %v1165, %v1161
    %v1366 = vpack.c.b16 %v1166, %v1162
    %v1367 = vpack.c.b16 %v1171, %v1167
    %v1368 = vpack.c.b16 %v1172, %v1168
    %v1369 = vpack.c.b16 %v1173, %v1169
    %v1370 = vpack.c.b16 %v1174, %v1170
    %v1371 = vpack.c.b16 %v1179, %v1175
    %v1372 = vpack.c.b16 %v1180, %v1176
    %v1373 = vpack.c.b16 %v1181, %v1177
    %v1374 = vpack.c.b16 %v1182, %v1178
    %1567 = vmatprep.subr.bf16.mxu0 %v1212
    %1568 = vmatpush1.bf16.msra.mxu0 %v1211
    %1569 = vmatprep.subr.bf16.mxu0 %v1208
    %1570 = vmatpush1.bf16.msra.mxu0 %v1207
    %1571 = vmatprep.subr.bf16.mxu0 %v1204
    %1572 = vmatpush1.bf16.msra.mxu0 %v1203
    %1573 = vmatprep.subr.bf16.mxu0 %v1200
    %1574 = vmatpush1.bf16.msra.mxu0 %v1199
    %1575 = vmatprep.subr.bf16.mxu0 %v1196
    %1576 = vmatpush1.bf16.msra.mxu0 %v1195
    %1577 = vmatprep.subr.bf16.mxu0 %v1192
    %1578 = vmatpush1.bf16.msra.mxu0 %v1191
    %1579 = vmatprep.subr.bf16.mxu0 %v1188
    %1580 = vmatpush1.bf16.msra.mxu0 %v1187
    %1581 = vmatprep.subr.bf16.mxu0 %v1184
    %1582 = vmatpush1.bf16.msra.mxu0 %v1183
    %1583 = vmatprep.subr.bf16.mxu0 %v1244
    %1584 = vmatpush2.bf16.msra.mxu0 %v1243
    %1585 = vmatprep.subr.bf16.mxu0 %v1240
    %1586 = vmatpush2.bf16.msra.mxu0 %v1239
    %1587 = vmatprep.subr.bf16.mxu0 %v1236
    %1588 = vmatpush2.bf16.msra.mxu0 %v1235
    %1589 = vmatprep.subr.bf16.mxu0 %v1232
    %1590 = vmatpush2.bf16.msra.mxu0 %v1231
    %1591 = vmatprep.subr.bf16.mxu0 %v1228
    %1592 = vmatpush2.bf16.msra.mxu0 %v1227
    %1593 = vmatprep.subr.bf16.mxu0 %v1224
    %1594 = vmatpush2.bf16.msra.mxu0 %v1223
    %1595 = vmatprep.subr.bf16.mxu0 %v1220
    %1596 = vmatpush2.bf16.msra.mxu0 %v1219
    %1597 = vmatprep.subr.bf16.mxu0 %v1216
    %1598 = vmatpush2.bf16.msra.mxu0 %v1215
    %1599 = vmatprep.mubr.bf16.mxu0 %v382
    %1600 = vmatmul.mubr.bf16.gmra.mxu0 %v381
    %v1601 = vpop.f32.mrf.mxu0
    %v1602 = vadd.f32 %v590, %v1601
    %v1603 = vpop.f32.mrf.mxu0
    %v1604 = vadd.f32 %v594, %v1603
    %v1605 = vpop.f32.mrf.mxu0
    %v1606 = vadd.f32 %v590, %v1605
    %v1607 = vpop.f32.mrf.mxu0
    %v1608 = vadd.f32 %v594, %v1607
    %1609 = vmatprep.mubr.bf16.mxu0 %v388
    %1610 = vmatmul.mubr.bf16.gmra.mxu0 %v387
    %v1611 = vpop.f32.mrf.mxu0
    %v1612 = vadd.f32 %v590, %v1611
    %v1613 = vpop.f32.mrf.mxu0
    %v1614 = vadd.f32 %v594, %v1613
    %v1615 = vpop.f32.mrf.mxu0
    %v1616 = vpop.f32.mrf.mxu0
    %1617 = vdwg.mxu0
    %1618 = vmatprep.subr.bf16.mxu0 %v1276
    %1619 = vmatpush1.bf16.msra.mxu0 %v1275
    %1620 = vmatprep.subr.bf16.mxu0 %v1272
    %1621 = vmatpush1.bf16.msra.mxu0 %v1271
    %1622 = vmatprep.subr.bf16.mxu0 %v1268
    %1623 = vmatpush1.bf16.msra.mxu0 %v1267
    %1624 = vmatprep.subr.bf16.mxu0 %v1264
    %1625 = vmatpush1.bf16.msra.mxu0 %v1263
    %1626 = vmatprep.subr.bf16.mxu0 %v1260
    %1627 = vmatpush1.bf16.msra.mxu0 %v1259
    %1628 = vmatprep.subr.bf16.mxu0 %v1256
    %1629 = vmatpush1.bf16.msra.mxu0 %v1255
    %1630 = vmatprep.subr.bf16.mxu0 %v1252
    %1631 = vmatpush1.bf16.msra.mxu0 %v1251
    %1632 = vmatprep.subr.bf16.mxu0 %v1248
    %1633 = vmatpush1.bf16.msra.mxu0 %v1247
    %1634 = vmatprep.subr.bf16.mxu0 %v1308
    %1635 = vmatpush2.bf16.msra.mxu0 %v1307
    %1636 = vmatprep.subr.bf16.mxu0 %v1304
    %1637 = vmatpush2.bf16.msra.mxu0 %v1303
    %1638 = vmatprep.subr.bf16.mxu0 %v1300
    %1639 = vmatpush2.bf16.msra.mxu0 %v1299
    %1640 = vmatprep.subr.bf16.mxu0 %v1296
    %1641 = vmatpush2.bf16.msra.mxu0 %v1295
    %1642 = vmatprep.subr.bf16.mxu0 %v1292
    %1643 = vmatpush2.bf16.msra.mxu0 %v1291
    %1644 = vmatprep.subr.bf16.mxu0 %v1288
    %1645 = vmatpush2.bf16.msra.mxu0 %v1287
    %1646 = vmatprep.subr.bf16.mxu0 %v1284
    %1647 = vmatpush2.bf16.msra.mxu0 %v1283
    %1648 = vmatprep.subr.bf16.mxu0 %v1280
    %1649 = vmatpush2.bf16.msra.mxu0 %v1279
    %1650 = vmatprep.mubr.bf16.mxu0 %v384
    %1651 = vmatmul.mubr.bf16.gmra.mxu0 %v383
    %v1652 = vpop.f32.mrf.mxu0
    %v1653 = vadd.f32 %v1602, %v1652
    %v1654 = vpop.f32.mrf.mxu0
    %v1655 = vadd.f32 %v1604, %v1654
    %v1656 = vpop.f32.mrf.mxu0
    %v1657 = vadd.f32 %v1606, %v1656
    %v1658 = vpop.f32.mrf.mxu0
    %v1659 = vadd.f32 %v1608, %v1658
    %1660 = vmatprep.mubr.bf16.mxu0 %v390
    %1661 = vmatmul.mubr.bf16.gmra.mxu0 %v389
    %v1662 = vpop.f32.mrf.mxu0
    %v1663 = vadd.f32 %v1612, %v1662
    %v1664 = vpop.f32.mrf.mxu0
    %v1665 = vadd.f32 %v1614, %v1664
    %v1666 = vpop.f32.mrf.mxu0
    %v1667 = vpop.f32.mrf.mxu0
    %1668 = vdwg.mxu0
    %1669 = vmatprep.subr.bf16.mxu0 %v1340
    %1670 = vmatpush1.bf16.msra.mxu0 %v1339
    %1671 = vmatprep.subr.bf16.mxu0 %v1336
    %1672 = vmatpush1.bf16.msra.mxu0 %v1335
    %1673 = vmatprep.subr.bf16.mxu0 %v1332
    %1674 = vmatpush1.bf16.msra.mxu0 %v1331
    %1675 = vmatprep.subr.bf16.mxu0 %v1328
    %1676 = vmatpush1.bf16.msra.mxu0 %v1327
    %1677 = vmatprep.subr.bf16.mxu0 %v1324
    %1678 = vmatpush1.bf16.msra.mxu0 %v1323
    %1679 = vmatprep.subr.bf16.mxu0 %v1320
    %1680 = vmatpush1.bf16.msra.mxu0 %v1319
    %1681 = vmatprep.subr.bf16.mxu0 %v1316
    %1682 = vmatpush1.bf16.msra.mxu0 %v1315
    %1683 = vmatprep.subr.bf16.mxu0 %v1312
    %1684 = vmatpush1.bf16.msra.mxu0 %v1311
    %1685 = vmatprep.subr.bf16.mxu0 %v1372
    %1686 = vmatpush2.bf16.msra.mxu0 %v1371
    %1687 = vmatprep.subr.bf16.mxu0 %v1368
    %1688 = vmatpush2.bf16.msra.mxu0 %v1367
    %1689 = vmatprep.subr.bf16.mxu0 %v1364
    %1690 = vmatpush2.bf16.msra.mxu0 %v1363
    %1691 = vmatprep.subr.bf16.mxu0 %v1360
    %1692 = vmatpush2.bf16.msra.mxu0 %v1359
    %1693 = vmatprep.subr.bf16.mxu0 %v1356
    %1694 = vmatpush2.bf16.msra.mxu0 %v1355
    %1695 = vmatprep.subr.bf16.mxu0 %v1352
    %1696 = vmatpush2.bf16.msra.mxu0 %v1351
    %1697 = vmatprep.subr.bf16.mxu0 %v1348
    %1698 = vmatpush2.bf16.msra.mxu0 %v1347
    %1699 = vmatprep.subr.bf16.mxu0 %v1344
    %1700 = vmatpush2.bf16.msra.mxu0 %v1343
    %1701 = vmatprep.mubr.bf16.mxu0 %v386
    %1702 = vmatmul.mubr.bf16.gmra.mxu0 %v385
    %v1703 = vpop.f32.mrf.mxu0
    %v1704 = vadd.f32 %v1653, %v1703
    %v1705 = vpop.f32.mrf.mxu0
    %v1706 = vadd.f32 %v1655, %v1705
    %v1707 = vpop.f32.mrf.mxu0
    %v1708 = vadd.f32 %v1657, %v1707
    %v1709 = vpop.f32.mrf.mxu0
    %v1710 = vadd.f32 %v1659, %v1709
    %1711 = vmatprep.mubr.bf16.mxu0 %v392
    %1712 = vmatmul.mubr.bf16.gmra.mxu0 %v391
    %v1713 = vpop.f32.mrf.mxu0
    %v1714 = vadd.f32 %v1663, %v1713
    %v1715 = vpop.f32.mrf.mxu0
    %v1716 = vadd.f32 %v1665, %v1715
    %v1717 = vpop.f32.mrf.mxu0
    %v1718 = vpop.f32.mrf.mxu0
    %1719 = vdwg.mxu0
    %1720 = vmatprep.subr.bf16.mxu0 %v1214
    %1721 = vmatpush1.bf16.msra.mxu0 %v1213
    %1722 = vmatprep.subr.bf16.mxu0 %v1210
    %1723 = vmatpush1.bf16.msra.mxu0 %v1209
    %1724 = vmatprep.subr.bf16.mxu0 %v1206
    %1725 = vmatpush1.bf16.msra.mxu0 %v1205
    %1726 = vmatprep.subr.bf16.mxu0 %v1202
    %1727 = vmatpush1.bf16.msra.mxu0 %v1201
    %1728 = vmatprep.subr.bf16.mxu0 %v1198
    %1729 = vmatpush1.bf16.msra.mxu0 %v1197
    %1730 = vmatprep.subr.bf16.mxu0 %v1194
    %1731 = vmatpush1.bf16.msra.mxu0 %v1193
    %1732 = vmatprep.subr.bf16.mxu0 %v1190
    %1733 = vmatpush1.bf16.msra.mxu0 %v1189
    %1734 = vmatprep.subr.bf16.mxu0 %v1186
    %1735 = vmatpush1.bf16.msra.mxu0 %v1185
    %1736 = vmatprep.subr.bf16.mxu0 %v1246
    %1737 = vmatpush2.bf16.msra.mxu0 %v1245
    %1738 = vmatprep.subr.bf16.mxu0 %v1242
    %1739 = vmatpush2.bf16.msra.mxu0 %v1241
    %1740 = vmatprep.subr.bf16.mxu0 %v1238
    %1741 = vmatpush2.bf16.msra.mxu0 %v1237
    %1742 = vmatprep.subr.bf16.mxu0 %v1234
    %1743 = vmatpush2.bf16.msra.mxu0 %v1233
    %1744 = vmatprep.subr.bf16.mxu0 %v1230
    %1745 = vmatpush2.bf16.msra.mxu0 %v1229
    %1746 = vmatprep.subr.bf16.mxu0 %v1226
    %1747 = vmatpush2.bf16.msra.mxu0 %v1225
    %1748 = vmatprep.subr.bf16.mxu0 %v1222
    %1749 = vmatpush2.bf16.msra.mxu0 %v1221
    %1750 = vmatprep.subr.bf16.mxu0 %v1218
    %1751 = vmatpush2.bf16.msra.mxu0 %v1217
    %1752 = vmatprep.mubr.bf16.mxu0 %v382
    %1753 = vmatmul.mubr.bf16.gmra.mxu0 %v381
    %v1754 = vpop.f32.mrf.mxu0
    %v1755 = vadd.f32 %v598, %v1754
    %v1756 = vpop.f32.mrf.mxu0
    %v1757 = vadd.f32 %v602, %v1756
    %v1758 = vpop.f32.mrf.mxu0
    %v1759 = vadd.f32 %v598, %v1758
    %v1760 = vpop.f32.mrf.mxu0
    %v1761 = vadd.f32 %v602, %v1760
    %1762 = vmatprep.mubr.bf16.mxu0 %v388
    %1763 = vmatmul.mubr.bf16.gmra.mxu0 %v387
    %v1764 = vpop.f32.mrf.mxu0
    %v1765 = vadd.f32 %v598, %v1764
    %v1766 = vpop.f32.mrf.mxu0
    %v1767 = vadd.f32 %v602, %v1766
    %v1768 = vpop.f32.mrf.mxu0
    %v1769 = vpop.f32.mrf.mxu0
    %1770 = vdwg.mxu0
    %1771 = vmatprep.subr.bf16.mxu0 %v1278
    %1772 = vmatpush1.bf16.msra.mxu0 %v1277
    %1773 = vmatprep.subr.bf16.mxu0 %v1274
    %1774 = vmatpush1.bf16.msra.mxu0 %v1273
    %1775 = vmatprep.subr.bf16.mxu0 %v1270
    %1776 = vmatpush1.bf16.msra.mxu0 %v1269
    %1777 = vmatprep.subr.bf16.mxu0 %v1266
    %1778 = vmatpush1.bf16.msra.mxu0 %v1265
    %1779 = vmatprep.subr.bf16.mxu0 %v1262
    %1780 = vmatpush1.bf16.msra.mxu0 %v1261
    %1781 = vmatprep.subr.bf16.mxu0 %v1258
    %1782 = vmatpush1.bf16.msra.mxu0 %v1257
    %1783 = vmatprep.subr.bf16.mxu0 %v1254
    %1784 = vmatpush1.bf16.msra.mxu0 %v1253
    %1785 = vmatprep.subr.bf16.mxu0 %v1250
    %1786 = vmatpush1.bf16.msra.mxu0 %v1249
    %1787 = vmatprep.subr.bf16.mxu0 %v1310
    %1788 = vmatpush2.bf16.msra.mxu0 %v1309
    %1789 = vmatprep.subr.bf16.mxu0 %v1306
    %1790 = vmatpush2.bf16.msra.mxu0 %v1305
    %1791 = vmatprep.subr.bf16.mxu0 %v1302
    %1792 = vmatpush2.bf16.msra.mxu0 %v1301
    %1793 = vmatprep.subr.bf16.mxu0 %v1298
    %1794 = vmatpush2.bf16.msra.mxu0 %v1297
    %1795 = vmatprep.subr.bf16.mxu0 %v1294
    %1796 = vmatpush2.bf16.msra.mxu0 %v1293
    %1797 = vmatprep.subr.bf16.mxu0 %v1290
    %1798 = vmatpush2.bf16.msra.mxu0 %v1289
    %1799 = vmatprep.subr.bf16.mxu0 %v1286
    %1800 = vmatpush2.bf16.msra.mxu0 %v1285
    %1801 = vmatprep.subr.bf16.mxu0 %v1282
    %1802 = vmatpush2.bf16.msra.mxu0 %v1281
    %1803 = vmatprep.mubr.bf16.mxu0 %v384
    %1804 = vmatmul.mubr.bf16.gmra.mxu0 %v383
    %v1805 = vpop.f32.mrf.mxu0
    %v1806 = vadd.f32 %v1755, %v1805
    %v1807 = vpop.f32.mrf.mxu0
    %v1808 = vadd.f32 %v1757, %v1807
    %v1809 = vpop.f32.mrf.mxu0
    %v1810 = vadd.f32 %v1759, %v1809
    %v1811 = vpop.f32.mrf.mxu0
    %v1812 = vadd.f32 %v1761, %v1811
    %1813 = vmatprep.mubr.bf16.mxu0 %v390
    %1814 = vmatmul.mubr.bf16.gmra.mxu0 %v389
    %v1815 = vpop.f32.mrf.mxu0
    %v1816 = vadd.f32 %v1765, %v1815
    %v1817 = vpop.f32.mrf.mxu0
    %v1818 = vadd.f32 %v1767, %v1817
    %v1819 = vpop.f32.mrf.mxu0
    %v1820 = vpop.f32.mrf.mxu0
    %1821 = vdwg.mxu0
    %1822 = vmatprep.subr.bf16.mxu0 %v1342
    %1823 = vmatpush1.bf16.msra.mxu0 %v1341
    %1824 = vmatprep.subr.bf16.mxu0 %v1338
    %1825 = vmatpush1.bf16.msra.mxu0 %v1337
    %1826 = vmatprep.subr.bf16.mxu0 %v1334
    %1827 = vmatpush1.bf16.msra.mxu0 %v1333
    %1828 = vmatprep.subr.bf16.mxu0 %v1330
    %1829 = vmatpush1.bf16.msra.mxu0 %v1329
    %1830 = vmatprep.subr.bf16.mxu0 %v1326
    %1831 = vmatpush1.bf16.msra.mxu0 %v1325
    %1832 = vmatprep.subr.bf16.mxu0 %v1322
    %1833 = vmatpush1.bf16.msra.mxu0 %v1321
    %1834 = vmatprep.subr.bf16.mxu0 %v1318
    %1835 = vmatpush1.bf16.msra.mxu0 %v1317
    %1836 = vmatprep.subr.bf16.mxu0 %v1314
    %1837 = vmatpush1.bf16.msra.mxu0 %v1313
    %1838 = vmatprep.subr.bf16.mxu0 %v1374
    %1839 = vmatpush2.bf16.msra.mxu0 %v1373
    %1840 = vmatprep.subr.bf16.mxu0 %v1370
    %1841 = vmatpush2.bf16.msra.mxu0 %v1369
    %1842 = vmatprep.subr.bf16.mxu0 %v1366
    %1843 = vmatpush2.bf16.msra.mxu0 %v1365
    %1844 = vmatprep.subr.bf16.mxu0 %v1362
    %1845 = vmatpush2.bf16.msra.mxu0 %v1361
    %1846 = vmatprep.subr.bf16.mxu0 %v1358
    %1847 = vmatpush2.bf16.msra.mxu0 %v1357
    %1848 = vmatprep.subr.bf16.mxu0 %v1354
    %1849 = vmatpush2.bf16.msra.mxu0 %v1353
    %1850 = vmatprep.subr.bf16.mxu0 %v1350
    %1851 = vmatpush2.bf16.msra.mxu0 %v1349
    %1852 = vmatprep.subr.bf16.mxu0 %v1346
    %1853 = vmatpush2.bf16.msra.mxu0 %v1345
    %1854 = vmatprep.mubr.bf16.mxu0 %v386
    %1855 = vmatmul.mubr.bf16.gmra.mxu0 %v385
    %v1856 = vpop.f32.mrf.mxu0
    %v1857 = vadd.f32 %v1806, %v1856
    %v1858 = vpop.f32.mrf.mxu0
    %v1859 = vadd.f32 %v1808, %v1858
    %v1860 = vpop.f32.mrf.mxu0
    %v1861 = vadd.f32 %v1810, %v1860
    %v1862 = vpop.f32.mrf.mxu0
    %v1863 = vadd.f32 %v1812, %v1862
    %1864 = vmatprep.mubr.bf16.mxu0 %v392
    %1865 = vmatmul.mubr.bf16.gmra.mxu0 %v391
    %v1866 = vpop.f32.mrf.mxu0
    %v1867 = vadd.f32 %v1816, %v1866
    %v1868 = vpop.f32.mrf.mxu0
    %v1869 = vadd.f32 %v1818, %v1868
    %v1870 = vpop.f32.mrf.mxu0
    %v1871 = vpop.f32.mrf.mxu0
    %1872 = vdwg.mxu0
    %v1873 = vmax.f32 %v1704, 0.0
    %v1874 = vmax.f32 %v1706, 0.0
    %v1875 = vmax.f32 %v1857, 0.0
    %v1876 = vmax.f32 %v1859, 0.0
    %v1877 = vmax.f32 %v1708, 0.0
    %v1878 = vmax.f32 %v1710, 0.0
    %v1879 = vmax.f32 %v1861, 0.0
    %v1880 = vmax.f32 %v1863, 0.0
    %v1881 = vmax.f32 %v1714, 0.0
    %v1882 = vmax.f32 %v1716, 0.0
    %v1883 = vmax.f32 %v1867, 0.0
    %v1884 = vmax.f32 %v1869, 0.0
    %v1885 = vpack.c.bf16 %v1877, %v1873
    %v1886 = vpack.c.bf16 %v1878, %v1874
    %v1887 = vpack.c.bf16 %v1879, %v1875
    %v1888 = vpack.c.bf16 %v1880, %v1876
    %v1889 = vpack.c.bf16 %v1881, %v1881
    %v1890 = vpack.c.bf16 %v1882, %v1882
    %v1891 = vpack.c.bf16 %v1883, %v1883
    %v1892 = vpack.c.bf16 %v1884, %v1884
    %v1893 = vld [vmem:[#allocation10] sm:$0xff]
    %v1894 = vld [vmem:[#allocation10 + $0x8] sm:$0xff]
    %v1895 = vld [vmem:[#allocation10 + $0x10] sm:$0xff]
    %v1896 = vld [vmem:[#allocation10 + $0x18] sm:$0xff]
    %v1897 = vld [vmem:[#allocation10 + $0x20] sm:$0xff]
    %v1898 = vld [vmem:[#allocation10 + $0x28] sm:$0xff]
    %v1899 = vld [vmem:[#allocation10 + $0x30] sm:$0xff]
    %v1900 = vld [vmem:[#allocation10 + $0x38] sm:$0xff]
    %v1901 = vld [vmem:[#allocation10 + $0x40] sm:$0xff]
    %v1902 = vld [vmem:[#allocation10 + $0x48] sm:$0xff]
    %v1903 = vld [vmem:[#allocation10 + $0x50] sm:$0xff]
    %v1904 = vld [vmem:[#allocation10 + $0x58] sm:$0xff]
    %v1905 = vld [vmem:[#allocation10 + $0x60] sm:$0xff]
    %v1906 = vld [vmem:[#allocation10 + $0x68] sm:$0xff]
    %v1907 = vld [vmem:[#allocation10 + $0x70] sm:$0xff]
    %v1908 = vld [vmem:[#allocation10 + $0x78] sm:$0xff]
    %v1909 = vld [vmem:[#allocation10 + $0x80] sm:$0xff]
    %v1910 = vld [vmem:[#allocation10 + $0x88] sm:$0xff]
    %v1911 = vld [vmem:[#allocation10 + $0x90] sm:$0xff]
    %v1912 = vld [vmem:[#allocation10 + $0x98] sm:$0xff]
    %v1913 = vld [vmem:[#allocation10 + $0xa0] sm:$0xff]
    %v1914 = vld [vmem:[#allocation10 + $0xa8] sm:$0xff]
    %v1915 = vld [vmem:[#allocation10 + $0xb0] sm:$0xff]
    %v1916 = vld [vmem:[#allocation10 + $0xb8] sm:$0xff]
    %v1917 = vld [vmem:[#allocation10 + $0xc0] sm:$0xff]
    %v1918 = vld [vmem:[#allocation10 + $0xc8] sm:$0xff]
    %v1919 = vld [vmem:[#allocation10 + $0xd0] sm:$0xff]
    %v1920 = vld [vmem:[#allocation10 + $0xd8] sm:$0xff]
    %v1921 = vld [vmem:[#allocation10 + $0xe0] sm:$0xff]
    %v1922 = vld [vmem:[#allocation10 + $0xe8] sm:$0xff]
    %v1923 = vld [vmem:[#allocation10 + $0xf0] sm:$0xff]
    %v1924 = vld [vmem:[#allocation10 + $0xf8] sm:$0xff]
    %v1925 = vld [vmem:[#allocation10 + $0x100] sm:$0xff]
    %v1926 = vld [vmem:[#allocation10 + $0x108] sm:$0xff]
    %v1927 = vld [vmem:[#allocation10 + $0x110] sm:$0xff]
    %v1928 = vld [vmem:[#allocation10 + $0x118] sm:$0xff]
    %v1929 = vld [vmem:[#allocation10 + $0x120] sm:$0xff]
    %v1930 = vld [vmem:[#allocation10 + $0x128] sm:$0xff]
    %v1931 = vld [vmem:[#allocation10 + $0x130] sm:$0xff]
    %v1932 = vld [vmem:[#allocation10 + $0x138] sm:$0xff]
    %v1933 = vld [vmem:[#allocation10 + $0x140] sm:$0xff]
    %v1934 = vld [vmem:[#allocation10 + $0x148] sm:$0xff]
    %v1935 = vld [vmem:[#allocation10 + $0x150] sm:$0xff]
    %v1936 = vld [vmem:[#allocation10 + $0x158] sm:$0xff]
    %v1937 = vld [vmem:[#allocation10 + $0x160] sm:$0xff]
    %v1938 = vld [vmem:[#allocation10 + $0x168] sm:$0xff]
    %v1939 = vld [vmem:[#allocation10 + $0x170] sm:$0xff]
    %v1940 = vld [vmem:[#allocation10 + $0x178] sm:$0xff]
    %v1941 = vld [vmem:[#allocation10 + $0x180] sm:$0xff]
    %v1942 = vld [vmem:[#allocation10 + $0x188] sm:$0xff]
    %v1943 = vld [vmem:[#allocation10 + $0x190] sm:$0xff]
    %v1944 = vld [vmem:[#allocation10 + $0x198] sm:$0xff]
    %v1945 = vld [vmem:[#allocation10 + $0x1a0] sm:$0xff]
    %v1946 = vld [vmem:[#allocation10 + $0x1a8] sm:$0xff]
    %v1947 = vld [vmem:[#allocation10 + $0x1b0] sm:$0xff]
    %v1948 = vld [vmem:[#allocation10 + $0x1b8] sm:$0xff]
    %v1949 = vld [vmem:[#allocation10 + $0x1c0] sm:$0xff]
    %v1950 = vld [vmem:[#allocation10 + $0x1c8] sm:$0xff]
    %v1951 = vld [vmem:[#allocation10 + $0x1d0] sm:$0xff]
    %v1952 = vld [vmem:[#allocation10 + $0x1d8] sm:$0xff]
    %v1953 = vld [vmem:[#allocation10 + $0x1e0] sm:$0xff]
    %v1954 = vld [vmem:[#allocation10 + $0x1e8] sm:$0xff]
    %v1955 = vld [vmem:[#allocation10 + $0x1f0] sm:$0xff]
    %v1956 = vld [vmem:[#allocation10 + $0x1f8] sm:$0xff]
    %v1957 = vld [vmem:[#allocation10 + $0x200] sm:$0xff]
    %v1958 = vld [vmem:[#allocation10 + $0x208] sm:$0xff]
    %v1959 = vld [vmem:[#allocation10 + $0x210] sm:$0xff]
    %v1960 = vld [vmem:[#allocation10 + $0x218] sm:$0xff]
    %v1961 = vld [vmem:[#allocation10 + $0x220] sm:$0xff]
    %v1962 = vld [vmem:[#allocation10 + $0x228] sm:$0xff]
    %v1963 = vld [vmem:[#allocation10 + $0x230] sm:$0xff]
    %v1964 = vld [vmem:[#allocation10 + $0x238] sm:$0xff]
    %v1965 = vld [vmem:[#allocation10 + $0x240] sm:$0xff]
    %v1966 = vld [vmem:[#allocation10 + $0x248] sm:$0xff]
    %v1967 = vld [vmem:[#allocation10 + $0x250] sm:$0xff]
    %v1968 = vld [vmem:[#allocation10 + $0x258] sm:$0xff]
    %v1969 = vld [vmem:[#allocation10 + $0x260] sm:$0xff]
    %v1970 = vld [vmem:[#allocation10 + $0x268] sm:$0xff]
    %v1971 = vld [vmem:[#allocation10 + $0x270] sm:$0xff]
    %v1972 = vld [vmem:[#allocation10 + $0x278] sm:$0xff]
    %v1973 = vld [vmem:[#allocation10 + $0x280] sm:$0xff]
    %v1974 = vld [vmem:[#allocation10 + $0x288] sm:$0xff]
    %v1975 = vld [vmem:[#allocation10 + $0x290] sm:$0xff]
    %v1976 = vld [vmem:[#allocation10 + $0x298] sm:$0xff]
    %v1977 = vld [vmem:[#allocation10 + $0x2a0] sm:$0xff]
    %v1978 = vld [vmem:[#allocation10 + $0x2a8] sm:$0xff]
    %v1979 = vld [vmem:[#allocation10 + $0x2b0] sm:$0xff]
    %v1980 = vld [vmem:[#allocation10 + $0x2b8] sm:$0xff]
    %v1981 = vld [vmem:[#allocation10 + $0x2c0] sm:$0xff]
    %v1982 = vld [vmem:[#allocation10 + $0x2c8] sm:$0xff]
    %v1983 = vld [vmem:[#allocation10 + $0x2d0] sm:$0xff]
    %v1984 = vld [vmem:[#allocation10 + $0x2d8] sm:$0xff]
    %v1985 = vld [vmem:[#allocation10 + $0x2e0] sm:$0xff]
    %v1986 = vld [vmem:[#allocation10 + $0x2e8] sm:$0xff]
    %v1987 = vld [vmem:[#allocation10 + $0x2f0] sm:$0xff]
    %v1988 = vld [vmem:[#allocation10 + $0x2f8] sm:$0xff]
    %v1989 = vld [vmem:[#allocation10 + $0x300] sm:$0xff]
    %v1990 = vld [vmem:[#allocation10 + $0x308] sm:$0xff]
    %v1991 = vld [vmem:[#allocation10 + $0x310] sm:$0xff]
    %v1992 = vld [vmem:[#allocation10 + $0x318] sm:$0xff]
    %v1993 = vld [vmem:[#allocation10 + $0x320] sm:$0xff]
    %v1994 = vld [vmem:[#allocation10 + $0x328] sm:$0xff]
    %v1995 = vld [vmem:[#allocation10 + $0x330] sm:$0xff]
    %v1996 = vld [vmem:[#allocation10 + $0x338] sm:$0xff]
    %v1997 = vld [vmem:[#allocation10 + $0x340] sm:$0xff]
    %v1998 = vld [vmem:[#allocation10 + $0x348] sm:$0xff]
    %v1999 = vld [vmem:[#allocation10 + $0x350] sm:$0xff]
    %v2000 = vld [vmem:[#allocation10 + $0x358] sm:$0xff]
    %v2001 = vld [vmem:[#allocation10 + $0x360] sm:$0xff]
    %v2002 = vld [vmem:[#allocation10 + $0x368] sm:$0xff]
    %v2003 = vld [vmem:[#allocation10 + $0x370] sm:$0xff]
    %v2004 = vld [vmem:[#allocation10 + $0x378] sm:$0xff]
    %v2005 = vld [vmem:[#allocation10 + $0x380] sm:$0xff]
    %v2006 = vld [vmem:[#allocation10 + $0x388] sm:$0xff]
    %v2007 = vld [vmem:[#allocation10 + $0x390] sm:$0xff]
    %v2008 = vld [vmem:[#allocation10 + $0x398] sm:$0xff]
    %v2009 = vld [vmem:[#allocation10 + $0x3a0] sm:$0xff]
    %v2010 = vld [vmem:[#allocation10 + $0x3a8] sm:$0xff]
    %v2011 = vld [vmem:[#allocation10 + $0x3b0] sm:$0xff]
    %v2012 = vld [vmem:[#allocation10 + $0x3b8] sm:$0xff]
    %v2013 = vld [vmem:[#allocation10 + $0x3c0] sm:$0xff]
    %v2014 = vld [vmem:[#allocation10 + $0x3c8] sm:$0xff]
    %v2015 = vld [vmem:[#allocation10 + $0x3d0] sm:$0xff]
    %v2016 = vld [vmem:[#allocation10 + $0x3d8] sm:$0xff]
    %v2017 = vld [vmem:[#allocation10 + $0x3e0] sm:$0xff]
    %v2018 = vld [vmem:[#allocation10 + $0x3e8] sm:$0xff]
    %v2019 = vld [vmem:[#allocation10 + $0x3f0] sm:$0xff]
    %v2020 = vld [vmem:[#allocation10 + $0x3f8] sm:$0xff]
    %v2021 = vld [vmem:[#allocation10 + $0x400] sm:$0xff]
    %v2022 = vld [vmem:[#allocation10 + $0x408] sm:$0xff]
    %v2023 = vld [vmem:[#allocation10 + $0x410] sm:$0xff]
    %v2024 = vld [vmem:[#allocation10 + $0x418] sm:$0xff]
    %v2025 = vld [vmem:[#allocation10 + $0x420] sm:$0xff]
    %v2026 = vld [vmem:[#allocation10 + $0x428] sm:$0xff]
    %v2027 = vld [vmem:[#allocation10 + $0x430] sm:$0xff]
    %v2028 = vld [vmem:[#allocation10 + $0x438] sm:$0xff]
    %v2029 = vld [vmem:[#allocation10 + $0x440] sm:$0xff]
    %v2030 = vld [vmem:[#allocation10 + $0x448] sm:$0xff]
    %v2031 = vld [vmem:[#allocation10 + $0x450] sm:$0xff]
    %v2032 = vld [vmem:[#allocation10 + $0x458] sm:$0xff]
    %v2033 = vld [vmem:[#allocation10 + $0x460] sm:$0xff]
    %v2034 = vld [vmem:[#allocation10 + $0x468] sm:$0xff]
    %v2035 = vld [vmem:[#allocation10 + $0x470] sm:$0xff]
    %v2036 = vld [vmem:[#allocation10 + $0x478] sm:$0xff]
    %v2037 = vld [vmem:[#allocation10 + $0x480] sm:$0xff]
    %v2038 = vld [vmem:[#allocation10 + $0x488] sm:$0xff]
    %v2039 = vld [vmem:[#allocation10 + $0x490] sm:$0xff]
    %v2040 = vld [vmem:[#allocation10 + $0x498] sm:$0xff]
    %v2041 = vld [vmem:[#allocation10 + $0x4a0] sm:$0xff]
    %v2042 = vld [vmem:[#allocation10 + $0x4a8] sm:$0xff]
    %v2043 = vld [vmem:[#allocation10 + $0x4b0] sm:$0xff]
    %v2044 = vld [vmem:[#allocation10 + $0x4b8] sm:$0xff]
    %v2045 = vld [vmem:[#allocation10 + $0x4c0] sm:$0xff]
    %v2046 = vld [vmem:[#allocation10 + $0x4c8] sm:$0xff]
    %v2047 = vld [vmem:[#allocation10 + $0x4d0] sm:$0xff]
    %v2048 = vld [vmem:[#allocation10 + $0x4d8] sm:$0xff]
    %v2049 = vld [vmem:[#allocation10 + $0x4e0] sm:$0xff]
    %v2050 = vld [vmem:[#allocation10 + $0x4e8] sm:$0xff]
    %v2051 = vld [vmem:[#allocation10 + $0x4f0] sm:$0xff]
    %v2052 = vld [vmem:[#allocation10 + $0x4f8] sm:$0xff]
    %v2053 = vld [vmem:[#allocation10 + $0x500] sm:$0xff]
    %v2054 = vld [vmem:[#allocation10 + $0x508] sm:$0xff]
    %v2055 = vld [vmem:[#allocation10 + $0x510] sm:$0xff]
    %v2056 = vld [vmem:[#allocation10 + $0x518] sm:$0xff]
    %v2057 = vld [vmem:[#allocation10 + $0x520] sm:$0xff]
    %v2058 = vld [vmem:[#allocation10 + $0x528] sm:$0xff]
    %v2059 = vld [vmem:[#allocation10 + $0x530] sm:$0xff]
    %v2060 = vld [vmem:[#allocation10 + $0x538] sm:$0xff]
    %v2061 = vld [vmem:[#allocation10 + $0x540] sm:$0xff]
    %v2062 = vld [vmem:[#allocation10 + $0x548] sm:$0xff]
    %v2063 = vld [vmem:[#allocation10 + $0x550] sm:$0xff]
    %v2064 = vld [vmem:[#allocation10 + $0x558] sm:$0xff]
    %v2065 = vld [vmem:[#allocation10 + $0x560] sm:$0xff]
    %v2066 = vld [vmem:[#allocation10 + $0x568] sm:$0xff]
    %v2067 = vld [vmem:[#allocation10 + $0x570] sm:$0xff]
    %v2068 = vld [vmem:[#allocation10 + $0x578] sm:$0xff]
    %v2069 = vld [vmem:[#allocation10 + $0x580] sm:$0xff]
    %v2070 = vld [vmem:[#allocation10 + $0x588] sm:$0xff]
    %v2071 = vld [vmem:[#allocation10 + $0x590] sm:$0xff]
    %v2072 = vld [vmem:[#allocation10 + $0x598] sm:$0xff]
    %v2073 = vld [vmem:[#allocation10 + $0x5a0] sm:$0xff]
    %v2074 = vld [vmem:[#allocation10 + $0x5a8] sm:$0xff]
    %v2075 = vld [vmem:[#allocation10 + $0x5b0] sm:$0xff]
    %v2076 = vld [vmem:[#allocation10 + $0x5b8] sm:$0xff]
    %v2077 = vld [vmem:[#allocation10 + $0x5c0] sm:$0xff]
    %v2078 = vld [vmem:[#allocation10 + $0x5c8] sm:$0xff]
    %v2079 = vld [vmem:[#allocation10 + $0x5d0] sm:$0xff]
    %v2080 = vld [vmem:[#allocation10 + $0x5d8] sm:$0xff]
    %v2081 = vld [vmem:[#allocation10 + $0x5e0] sm:$0xff]
    %v2082 = vld [vmem:[#allocation10 + $0x5e8] sm:$0xff]
    %v2083 = vld [vmem:[#allocation10 + $0x5f0] sm:$0xff]
    %v2084 = vld [vmem:[#allocation10 + $0x5f8] sm:$0xff]
    %v2085 = vld [vmem:[%s6] sm:$0x3f]
    %v2087 = vlaneseq
    %v2088 = vshrl.u32 %v2087, 7
    %v2089 = vsub.s32 0, %v2088
    %v2090 = vrot.slane %v2085, %v2089
    %v2091 = vlaneseq
    %v2092 = vshrl.u32 %v2091, 7
    %v2093 = vsub.s32 1, %v2092
    %v2094 = vrot.slane %v2085, %v2093
    %v2095 = vlaneseq
    %v2096 = vshrl.u32 %v2095, 7
    %v2097 = vsub.s32 2, %v2096
    %v2098 = vrot.slane %v2085, %v2097
    %v2099 = vlaneseq
    %v2100 = vshrl.u32 %v2099, 7
    %v2101 = vsub.s32 3, %v2100
    %v2102 = vrot.slane %v2085, %v2101
    %v2103 = vlaneseq
    %v2104 = vshrl.u32 %v2103, 7
    %v2105 = vsub.s32 4, %v2104
    %v2106 = vrot.slane %v2085, %v2105
    %v2107 = vlaneseq
    %v2108 = vshrl.u32 %v2107, 7
    %v2109 = vsub.s32 5, %v2108
    %v2110 = vrot.slane %v2085, %v2109
    %v2309 = vunpack.c.l.b16 %v1893
    %v2310 = vunpack.c.h.b16 %v1893
    %v2311 = vunpack.c.l.b16 %v1894
    %v2312 = vunpack.c.h.b16 %v1894
    %v2313 = vunpack.c.l.b16 %v1895
    %v2314 = vunpack.c.h.b16 %v1895
    %v2315 = vunpack.c.l.b16 %v1896
    %v2316 = vunpack.c.h.b16 %v1896
    %v2317 = vunpack.c.l.b16 %v1897
    %v2318 = vunpack.c.h.b16 %v1897
    %v2319 = vunpack.c.l.b16 %v1898
    %v2320 = vunpack.c.h.b16 %v1898
    %v2321 = vunpack.c.l.b16 %v1899
    %v2322 = vunpack.c.h.b16 %v1899
    %v2323 = vunpack.c.l.b16 %v1900
    %v2324 = vunpack.c.h.b16 %v1900
    %v2325 = vunpack.c.l.b16 %v1901
    %v2326 = vunpack.c.h.b16 %v1901
    %v2327 = vunpack.c.l.b16 %v1902
    %v2328 = vunpack.c.h.b16 %v1902
    %v2329 = vunpack.c.l.b16 %v1903
    %v2330 = vunpack.c.h.b16 %v1903
    %v2331 = vunpack.c.l.b16 %v1904
    %v2332 = vunpack.c.h.b16 %v1904
    %v2333 = vunpack.c.l.b16 %v1905
    %v2334 = vunpack.c.h.b16 %v1905
    %v2335 = vunpack.c.l.b16 %v1906
    %v2336 = vunpack.c.h.b16 %v1906
    %v2337 = vunpack.c.l.b16 %v1907
    %v2338 = vunpack.c.h.b16 %v1907
    %v2339 = vunpack.c.l.b16 %v1908
    %v2340 = vunpack.c.h.b16 %v1908
    %v2341 = vunpack.c.l.b16 %v1909
    %v2342 = vunpack.c.h.b16 %v1909
    %v2343 = vunpack.c.l.b16 %v1910
    %v2344 = vunpack.c.h.b16 %v1910
    %v2345 = vunpack.c.l.b16 %v1911
    %v2346 = vunpack.c.h.b16 %v1911
    %v2347 = vunpack.c.l.b16 %v1912
    %v2348 = vunpack.c.h.b16 %v1912
    %v2349 = vunpack.c.l.b16 %v1913
    %v2350 = vunpack.c.h.b16 %v1913
    %v2351 = vunpack.c.l.b16 %v1914
    %v2352 = vunpack.c.h.b16 %v1914
    %v2353 = vunpack.c.l.b16 %v1915
    %v2354 = vunpack.c.h.b16 %v1915
    %v2355 = vunpack.c.l.b16 %v1916
    %v2356 = vunpack.c.h.b16 %v1916
    %v2357 = vunpack.c.l.b16 %v1917
    %v2358 = vunpack.c.h.b16 %v1917
    %v2359 = vunpack.c.l.b16 %v1918
    %v2360 = vunpack.c.h.b16 %v1918
    %v2361 = vunpack.c.l.b16 %v1919
    %v2362 = vunpack.c.h.b16 %v1919
    %v2363 = vunpack.c.l.b16 %v1920
    %v2364 = vunpack.c.h.b16 %v1920
    %v2365 = vunpack.c.l.b16 %v1921
    %v2366 = vunpack.c.h.b16 %v1921
    %v2367 = vunpack.c.l.b16 %v1922
    %v2368 = vunpack.c.h.b16 %v1922
    %v2369 = vunpack.c.l.b16 %v1923
    %v2370 = vunpack.c.h.b16 %v1923
    %v2371 = vunpack.c.l.b16 %v1924
    %v2372 = vunpack.c.h.b16 %v1924
    %v2373 = vunpack.c.l.b16 %v1925
    %v2374 = vunpack.c.h.b16 %v1925
    %v2375 = vunpack.c.l.b16 %v1926
    %v2376 = vunpack.c.h.b16 %v1926
    %v2377 = vunpack.c.l.b16 %v1927
    %v2378 = vunpack.c.h.b16 %v1927
    %v2379 = vunpack.c.l.b16 %v1928
    %v2380 = vunpack.c.h.b16 %v1928
    %v2381 = vunpack.c.l.b16 %v1929
    %v2382 = vunpack.c.h.b16 %v1929
    %v2383 = vunpack.c.l.b16 %v1930
    %v2384 = vunpack.c.h.b16 %v1930
    %v2385 = vunpack.c.l.b16 %v1931
    %v2386 = vunpack.c.h.b16 %v1931
    %v2387 = vunpack.c.l.b16 %v1932
    %v2388 = vunpack.c.h.b16 %v1932
    %v2389 = vunpack.c.l.b16 %v1933
    %v2390 = vunpack.c.h.b16 %v1933
    %v2391 = vunpack.c.l.b16 %v1934
    %v2392 = vunpack.c.h.b16 %v1934
    %v2393 = vunpack.c.l.b16 %v1935
    %v2394 = vunpack.c.h.b16 %v1935
    %v2395 = vunpack.c.l.b16 %v1936
    %v2396 = vunpack.c.h.b16 %v1936
    %v2397 = vunpack.c.l.b16 %v1937
    %v2398 = vunpack.c.h.b16 %v1937
    %v2399 = vunpack.c.l.b16 %v1938
    %v2400 = vunpack.c.h.b16 %v1938
    %v2401 = vunpack.c.l.b16 %v1939
    %v2402 = vunpack.c.h.b16 %v1939
    %v2403 = vunpack.c.l.b16 %v1940
    %v2404 = vunpack.c.h.b16 %v1940
    %v2405 = vunpack.c.l.b16 %v1941
    %v2406 = vunpack.c.h.b16 %v1941
    %v2407 = vunpack.c.l.b16 %v1942
    %v2408 = vunpack.c.h.b16 %v1942
    %v2409 = vunpack.c.l.b16 %v1943
    %v2410 = vunpack.c.h.b16 %v1943
    %v2411 = vunpack.c.l.b16 %v1944
    %v2412 = vunpack.c.h.b16 %v1944
    %v2413 = vunpack.c.l.b16 %v1945
    %v2414 = vunpack.c.h.b16 %v1945
    %v2415 = vunpack.c.l.b16 %v1946
    %v2416 = vunpack.c.h.b16 %v1946
    %v2417 = vunpack.c.l.b16 %v1947
    %v2418 = vunpack.c.h.b16 %v1947
    %v2419 = vunpack.c.l.b16 %v1948
    %v2420 = vunpack.c.h.b16 %v1948
    %v2421 = vunpack.c.l.b16 %v1949
    %v2422 = vunpack.c.h.b16 %v1949
    %v2423 = vunpack.c.l.b16 %v1950
    %v2424 = vunpack.c.h.b16 %v1950
    %v2425 = vunpack.c.l.b16 %v1951
    %v2426 = vunpack.c.h.b16 %v1951
    %v2427 = vunpack.c.l.b16 %v1952
    %v2428 = vunpack.c.h.b16 %v1952
    %v2429 = vunpack.c.l.b16 %v1953
    %v2430 = vunpack.c.h.b16 %v1953
    %v2431 = vunpack.c.l.b16 %v1954
    %v2432 = vunpack.c.h.b16 %v1954
    %v2433 = vunpack.c.l.b16 %v1955
    %v2434 = vunpack.c.h.b16 %v1955
    %v2435 = vunpack.c.l.b16 %v1956
    %v2436 = vunpack.c.h.b16 %v1956
    %v2437 = vunpack.c.l.b16 %v1957
    %v2438 = vunpack.c.h.b16 %v1957
    %v2439 = vunpack.c.l.b16 %v1958
    %v2440 = vunpack.c.h.b16 %v1958
    %v2441 = vunpack.c.l.b16 %v1959
    %v2442 = vunpack.c.h.b16 %v1959
    %v2443 = vunpack.c.l.b16 %v1960
    %v2444 = vunpack.c.h.b16 %v1960
    %v2445 = vunpack.c.l.b16 %v1961
    %v2446 = vunpack.c.h.b16 %v1961
    %v2447 = vunpack.c.l.b16 %v1962
    %v2448 = vunpack.c.h.b16 %v1962
    %v2449 = vunpack.c.l.b16 %v1963
    %v2450 = vunpack.c.h.b16 %v1963
    %v2451 = vunpack.c.l.b16 %v1964
    %v2452 = vunpack.c.h.b16 %v1964
    %v2453 = vunpack.c.l.b16 %v1965
    %v2454 = vunpack.c.h.b16 %v1965
    %v2455 = vunpack.c.l.b16 %v1966
    %v2456 = vunpack.c.h.b16 %v1966
    %v2457 = vunpack.c.l.b16 %v1967
    %v2458 = vunpack.c.h.b16 %v1967
    %v2459 = vunpack.c.l.b16 %v1968
    %v2460 = vunpack.c.h.b16 %v1968
    %v2461 = vunpack.c.l.b16 %v1969
    %v2462 = vunpack.c.h.b16 %v1969
    %v2463 = vunpack.c.l.b16 %v1970
    %v2464 = vunpack.c.h.b16 %v1970
    %v2465 = vunpack.c.l.b16 %v1971
    %v2466 = vunpack.c.h.b16 %v1971
    %v2467 = vunpack.c.l.b16 %v1972
    %v2468 = vunpack.c.h.b16 %v1972
    %v2469 = vunpack.c.l.b16 %v1973
    %v2470 = vunpack.c.h.b16 %v1973
    %v2471 = vunpack.c.l.b16 %v1974
    %v2472 = vunpack.c.h.b16 %v1974
    %v2473 = vunpack.c.l.b16 %v1975
    %v2474 = vunpack.c.h.b16 %v1975
    %v2475 = vunpack.c.l.b16 %v1976
    %v2476 = vunpack.c.h.b16 %v1976
    %v2477 = vunpack.c.l.b16 %v1977
    %v2478 = vunpack.c.h.b16 %v1977
    %v2479 = vunpack.c.l.b16 %v1978
    %v2480 = vunpack.c.h.b16 %v1978
    %v2481 = vunpack.c.l.b16 %v1979
    %v2482 = vunpack.c.h.b16 %v1979
    %v2483 = vunpack.c.l.b16 %v1980
    %v2484 = vunpack.c.h.b16 %v1980
    %v2485 = vunpack.c.l.b16 %v1981
    %v2486 = vunpack.c.h.b16 %v1981
    %v2487 = vunpack.c.l.b16 %v1982
    %v2488 = vunpack.c.h.b16 %v1982
    %v2489 = vunpack.c.l.b16 %v1983
    %v2490 = vunpack.c.h.b16 %v1983
    %v2491 = vunpack.c.l.b16 %v1984
    %v2492 = vunpack.c.h.b16 %v1984
    %v2493 = vunpack.c.l.b16 %v1985
    %v2494 = vunpack.c.h.b16 %v1985
    %v2495 = vunpack.c.l.b16 %v1986
    %v2496 = vunpack.c.h.b16 %v1986
    %v2497 = vunpack.c.l.b16 %v1987
    %v2498 = vunpack.c.h.b16 %v1987
    %v2499 = vunpack.c.l.b16 %v1988
    %v2500 = vunpack.c.h.b16 %v1988
    %v2501 = vunpack.c.l.b16 %v1989
    %v2502 = vunpack.c.h.b16 %v1989
    %v2503 = vunpack.c.l.b16 %v1990
    %v2504 = vunpack.c.h.b16 %v1990
    %v2505 = vunpack.c.l.b16 %v1991
    %v2506 = vunpack.c.h.b16 %v1991
    %v2507 = vunpack.c.l.b16 %v1992
    %v2508 = vunpack.c.h.b16 %v1992
    %v2509 = vunpack.c.l.b16 %v1993
    %v2510 = vunpack.c.h.b16 %v1993
    %v2511 = vunpack.c.l.b16 %v1994
    %v2512 = vunpack.c.h.b16 %v1994
    %v2513 = vunpack.c.l.b16 %v1995
    %v2514 = vunpack.c.h.b16 %v1995
    %v2515 = vunpack.c.l.b16 %v1996
    %v2516 = vunpack.c.h.b16 %v1996
    %v2517 = vunpack.c.l.b16 %v1997
    %v2518 = vunpack.c.h.b16 %v1997
    %v2519 = vunpack.c.l.b16 %v1998
    %v2520 = vunpack.c.h.b16 %v1998
    %v2521 = vunpack.c.l.b16 %v1999
    %v2522 = vunpack.c.h.b16 %v1999
    %v2523 = vunpack.c.l.b16 %v2000
    %v2524 = vunpack.c.h.b16 %v2000
    %v2525 = vunpack.c.l.b16 %v2001
    %v2526 = vunpack.c.h.b16 %v2001
    %v2527 = vunpack.c.l.b16 %v2002
    %v2528 = vunpack.c.h.b16 %v2002
    %v2529 = vunpack.c.l.b16 %v2003
    %v2530 = vunpack.c.h.b16 %v2003
    %v2531 = vunpack.c.l.b16 %v2004
    %v2532 = vunpack.c.h.b16 %v2004
    %v2533 = vunpack.c.l.b16 %v2005
    %v2534 = vunpack.c.h.b16 %v2005
    %v2535 = vunpack.c.l.b16 %v2006
    %v2536 = vunpack.c.h.b16 %v2006
    %v2537 = vunpack.c.l.b16 %v2007
    %v2538 = vunpack.c.h.b16 %v2007
    %v2539 = vunpack.c.l.b16 %v2008
    %v2540 = vunpack.c.h.b16 %v2008
    %v2541 = vunpack.c.l.b16 %v2009
    %v2542 = vunpack.c.h.b16 %v2009
    %v2543 = vunpack.c.l.b16 %v2010
    %v2544 = vunpack.c.h.b16 %v2010
    %v2545 = vunpack.c.l.b16 %v2011
    %v2546 = vunpack.c.h.b16 %v2011
    %v2547 = vunpack.c.l.b16 %v2012
    %v2548 = vunpack.c.h.b16 %v2012
    %v2549 = vunpack.c.l.b16 %v2013
    %v2550 = vunpack.c.h.b16 %v2013
    %v2551 = vunpack.c.l.b16 %v2014
    %v2552 = vunpack.c.h.b16 %v2014
    %v2553 = vunpack.c.l.b16 %v2015
    %v2554 = vunpack.c.h.b16 %v2015
    %v2555 = vunpack.c.l.b16 %v2016
    %v2556 = vunpack.c.h.b16 %v2016
    %v2557 = vunpack.c.l.b16 %v2017
    %v2558 = vunpack.c.h.b16 %v2017
    %v2559 = vunpack.c.l.b16 %v2018
    %v2560 = vunpack.c.h.b16 %v2018
    %v2561 = vunpack.c.l.b16 %v2019
    %v2562 = vunpack.c.h.b16 %v2019
    %v2563 = vunpack.c.l.b16 %v2020
    %v2564 = vunpack.c.h.b16 %v2020
    %v2565 = vunpack.c.l.b16 %v2021
    %v2566 = vunpack.c.h.b16 %v2021
    %v2567 = vunpack.c.l.b16 %v2022
    %v2568 = vunpack.c.h.b16 %v2022
    %v2569 = vunpack.c.l.b16 %v2023
    %v2570 = vunpack.c.h.b16 %v2023
    %v2571 = vunpack.c.l.b16 %v2024
    %v2572 = vunpack.c.h.b16 %v2024
    %v2573 = vunpack.c.l.b16 %v2025
    %v2574 = vunpack.c.h.b16 %v2025
    %v2575 = vunpack.c.l.b16 %v2026
    %v2576 = vunpack.c.h.b16 %v2026
    %v2577 = vunpack.c.l.b16 %v2027
    %v2578 = vunpack.c.h.b16 %v2027
    %v2579 = vunpack.c.l.b16 %v2028
    %v2580 = vunpack.c.h.b16 %v2028
    %v2581 = vunpack.c.l.b16 %v2029
    %v2582 = vunpack.c.h.b16 %v2029
    %v2583 = vunpack.c.l.b16 %v2030
    %v2584 = vunpack.c.h.b16 %v2030
    %v2585 = vunpack.c.l.b16 %v2031
    %v2586 = vunpack.c.h.b16 %v2031
    %v2587 = vunpack.c.l.b16 %v2032
    %v2588 = vunpack.c.h.b16 %v2032
    %v2589 = vunpack.c.l.b16 %v2033
    %v2590 = vunpack.c.h.b16 %v2033
    %v2591 = vunpack.c.l.b16 %v2034
    %v2592 = vunpack.c.h.b16 %v2034
    %v2593 = vunpack.c.l.b16 %v2035
    %v2594 = vunpack.c.h.b16 %v2035
    %v2595 = vunpack.c.l.b16 %v2036
    %v2596 = vunpack.c.h.b16 %v2036
    %v2597 = vunpack.c.l.b16 %v2037
    %v2598 = vunpack.c.h.b16 %v2037
    %v2599 = vunpack.c.l.b16 %v2038
    %v2600 = vunpack.c.h.b16 %v2038
    %v2601 = vunpack.c.l.b16 %v2039
    %v2602 = vunpack.c.h.b16 %v2039
    %v2603 = vunpack.c.l.b16 %v2040
    %v2604 = vunpack.c.h.b16 %v2040
    %v2605 = vunpack.c.l.b16 %v2041
    %v2606 = vunpack.c.h.b16 %v2041
    %v2607 = vunpack.c.l.b16 %v2042
    %v2608 = vunpack.c.h.b16 %v2042
    %v2609 = vunpack.c.l.b16 %v2043
    %v2610 = vunpack.c.h.b16 %v2043
    %v2611 = vunpack.c.l.b16 %v2044
    %v2612 = vunpack.c.h.b16 %v2044
    %v2613 = vunpack.c.l.b16 %v2045
    %v2614 = vunpack.c.h.b16 %v2045
    %v2615 = vunpack.c.l.b16 %v2046
    %v2616 = vunpack.c.h.b16 %v2046
    %v2617 = vunpack.c.l.b16 %v2047
    %v2618 = vunpack.c.h.b16 %v2047
    %v2619 = vunpack.c.l.b16 %v2048
    %v2620 = vunpack.c.h.b16 %v2048
    %v2621 = vunpack.c.l.b16 %v2049
    %v2622 = vunpack.c.h.b16 %v2049
    %v2623 = vunpack.c.l.b16 %v2050
    %v2624 = vunpack.c.h.b16 %v2050
    %v2625 = vunpack.c.l.b16 %v2051
    %v2626 = vunpack.c.h.b16 %v2051
    %v2627 = vunpack.c.l.b16 %v2052
    %v2628 = vunpack.c.h.b16 %v2052
    %v2629 = vunpack.c.l.b16 %v2053
    %v2630 = vunpack.c.h.b16 %v2053
    %v2631 = vunpack.c.l.b16 %v2054
    %v2632 = vunpack.c.h.b16 %v2054
    %v2633 = vunpack.c.l.b16 %v2055
    %v2634 = vunpack.c.h.b16 %v2055
    %v2635 = vunpack.c.l.b16 %v2056
    %v2636 = vunpack.c.h.b16 %v2056
    %v2637 = vunpack.c.l.b16 %v2057
    %v2638 = vunpack.c.h.b16 %v2057
    %v2639 = vunpack.c.l.b16 %v2058
    %v2640 = vunpack.c.h.b16 %v2058
    %v2641 = vunpack.c.l.b16 %v2059
    %v2642 = vunpack.c.h.b16 %v2059
    %v2643 = vunpack.c.l.b16 %v2060
    %v2644 = vunpack.c.h.b16 %v2060
    %v2645 = vunpack.c.l.b16 %v2061
    %v2646 = vunpack.c.h.b16 %v2061
    %v2647 = vunpack.c.l.b16 %v2062
    %v2648 = vunpack.c.h.b16 %v2062
    %v2649 = vunpack.c.l.b16 %v2063
    %v2650 = vunpack.c.h.b16 %v2063
    %v2651 = vunpack.c.l.b16 %v2064
    %v2652 = vunpack.c.h.b16 %v2064
    %v2653 = vunpack.c.l.b16 %v2065
    %v2654 = vunpack.c.h.b16 %v2065
    %v2655 = vunpack.c.l.b16 %v2066
    %v2656 = vunpack.c.h.b16 %v2066
    %v2657 = vunpack.c.l.b16 %v2067
    %v2658 = vunpack.c.h.b16 %v2067
    %v2659 = vunpack.c.l.b16 %v2068
    %v2660 = vunpack.c.h.b16 %v2068
    %v2661 = vunpack.c.l.b16 %v2069
    %v2662 = vunpack.c.h.b16 %v2069
    %v2663 = vunpack.c.l.b16 %v2070
    %v2664 = vunpack.c.h.b16 %v2070
    %v2665 = vunpack.c.l.b16 %v2071
    %v2666 = vunpack.c.h.b16 %v2071
    %v2667 = vunpack.c.l.b16 %v2072
    %v2668 = vunpack.c.h.b16 %v2072
    %v2669 = vunpack.c.l.b16 %v2073
    %v2670 = vunpack.c.h.b16 %v2073
    %v2671 = vunpack.c.l.b16 %v2074
    %v2672 = vunpack.c.h.b16 %v2074
    %v2673 = vunpack.c.l.b16 %v2075
    %v2674 = vunpack.c.h.b16 %v2075
    %v2675 = vunpack.c.l.b16 %v2076
    %v2676 = vunpack.c.h.b16 %v2076
    %v2677 = vunpack.c.l.b16 %v2077
    %v2678 = vunpack.c.h.b16 %v2077
    %v2679 = vunpack.c.l.b16 %v2078
    %v2680 = vunpack.c.h.b16 %v2078
    %v2681 = vunpack.c.l.b16 %v2079
    %v2682 = vunpack.c.h.b16 %v2079
    %v2683 = vunpack.c.l.b16 %v2080
    %v2684 = vunpack.c.h.b16 %v2080
    %v2685 = vunpack.c.l.b16 %v2081
    %v2686 = vunpack.c.h.b16 %v2081
    %v2687 = vunpack.c.l.b16 %v2082
    %v2688 = vunpack.c.h.b16 %v2082
    %v2689 = vunpack.c.l.b16 %v2083
    %v2690 = vunpack.c.h.b16 %v2083
    %v2691 = vunpack.c.l.b16 %v2084
    %v2692 = vunpack.c.h.b16 %v2084
    %v2693 = vpack.c.b16 %v2315, %v2309
    %v2694 = vpack.c.b16 %v2316, %v2310
    %v2695 = vpack.c.b16 %v2317, %v2311
    %v2696 = vpack.c.b16 %v2318, %v2312
    %v2697 = vpack.c.b16 %v2319, %v2313
    %v2698 = vpack.c.b16 %v2320, %v2314
    %v2699 = vpack.c.b16 %v2327, %v2321
    %v2700 = vpack.c.b16 %v2328, %v2322
    %v2701 = vpack.c.b16 %v2329, %v2323
    %v2702 = vpack.c.b16 %v2330, %v2324
    %v2703 = vpack.c.b16 %v2331, %v2325
    %v2704 = vpack.c.b16 %v2332, %v2326
    %v2705 = vpack.c.b16 %v2339, %v2333
    %v2706 = vpack.c.b16 %v2340, %v2334
    %v2707 = vpack.c.b16 %v2341, %v2335
    %v2708 = vpack.c.b16 %v2342, %v2336
    %v2709 = vpack.c.b16 %v2343, %v2337
    %v2710 = vpack.c.b16 %v2344, %v2338
    %v2711 = vpack.c.b16 %v2351, %v2345
    %v2712 = vpack.c.b16 %v2352, %v2346
    %v2713 = vpack.c.b16 %v2353, %v2347
    %v2714 = vpack.c.b16 %v2354, %v2348
    %v2715 = vpack.c.b16 %v2355, %v2349
    %v2716 = vpack.c.b16 %v2356, %v2350
    %v2717 = vpack.c.b16 %v2363, %v2357
    %v2718 = vpack.c.b16 %v2364, %v2358
    %v2719 = vpack.c.b16 %v2365, %v2359
    %v2720 = vpack.c.b16 %v2366, %v2360
    %v2721 = vpack.c.b16 %v2367, %v2361
    %v2722 = vpack.c.b16 %v2368, %v2362
    %v2723 = vpack.c.b16 %v2375, %v2369
    %v2724 = vpack.c.b16 %v2376, %v2370
    %v2725 = vpack.c.b16 %v2377, %v2371
    %v2726 = vpack.c.b16 %v2378, %v2372
    %v2727 = vpack.c.b16 %v2379, %v2373
    %v2728 = vpack.c.b16 %v2380, %v2374
    %v2729 = vpack.c.b16 %v2387, %v2381
    %v2730 = vpack.c.b16 %v2388, %v2382
    %v2731 = vpack.c.b16 %v2389, %v2383
    %v2732 = vpack.c.b16 %v2390, %v2384
    %v2733 = vpack.c.b16 %v2391, %v2385
    %v2734 = vpack.c.b16 %v2392, %v2386
    %v2735 = vpack.c.b16 %v2399, %v2393
    %v2736 = vpack.c.b16 %v2400, %v2394
    %v2737 = vpack.c.b16 %v2401, %v2395
    %v2738 = vpack.c.b16 %v2402, %v2396
    %v2739 = vpack.c.b16 %v2403, %v2397
    %v2740 = vpack.c.b16 %v2404, %v2398
    %v2741 = vpack.c.b16 %v2411, %v2405
    %v2742 = vpack.c.b16 %v2412, %v2406
    %v2743 = vpack.c.b16 %v2413, %v2407
    %v2744 = vpack.c.b16 %v2414, %v2408
    %v2745 = vpack.c.b16 %v2415, %v2409
    %v2746 = vpack.c.b16 %v2416, %v2410
    %v2747 = vpack.c.b16 %v2423, %v2417
    %v2748 = vpack.c.b16 %v2424, %v2418
    %v2749 = vpack.c.b16 %v2425, %v2419
    %v2750 = vpack.c.b16 %v2426, %v2420
    %v2751 = vpack.c.b16 %v2427, %v2421
    %v2752 = vpack.c.b16 %v2428, %v2422
    %v2753 = vpack.c.b16 %v2435, %v2429
    %v2754 = vpack.c.b16 %v2436, %v2430
    %v2755 = vpack.c.b16 %v2437, %v2431
    %v2756 = vpack.c.b16 %v2438, %v2432
    %v2757 = vpack.c.b16 %v2439, %v2433
    %v2758 = vpack.c.b16 %v2440, %v2434
    %v2759 = vpack.c.b16 %v2447, %v2441
    %v2760 = vpack.c.b16 %v2448, %v2442
    %v2761 = vpack.c.b16 %v2449, %v2443
    %v2762 = vpack.c.b16 %v2450, %v2444
    %v2763 = vpack.c.b16 %v2451, %v2445
    %v2764 = vpack.c.b16 %v2452, %v2446
    %v2765 = vpack.c.b16 %v2459, %v2453
    %v2766 = vpack.c.b16 %v2460, %v2454
    %v2767 = vpack.c.b16 %v2461, %v2455
    %v2768 = vpack.c.b16 %v2462, %v2456
    %v2769 = vpack.c.b16 %v2463, %v2457
    %v2770 = vpack.c.b16 %v2464, %v2458
    %v2771 = vpack.c.b16 %v2471, %v2465
    %v2772 = vpack.c.b16 %v2472, %v2466
    %v2773 = vpack.c.b16 %v2473, %v2467
    %v2774 = vpack.c.b16 %v2474, %v2468
    %v2775 = vpack.c.b16 %v2475, %v2469
    %v2776 = vpack.c.b16 %v2476, %v2470
    %v2777 = vpack.c.b16 %v2483, %v2477
    %v2778 = vpack.c.b16 %v2484, %v2478
    %v2779 = vpack.c.b16 %v2485, %v2479
    %v2780 = vpack.c.b16 %v2486, %v2480
    %v2781 = vpack.c.b16 %v2487, %v2481
    %v2782 = vpack.c.b16 %v2488, %v2482
    %v2783 = vpack.c.b16 %v2495, %v2489
    %v2784 = vpack.c.b16 %v2496, %v2490
    %v2785 = vpack.c.b16 %v2497, %v2491
    %v2786 = vpack.c.b16 %v2498, %v2492
    %v2787 = vpack.c.b16 %v2499, %v2493
    %v2788 = vpack.c.b16 %v2500, %v2494
    %v2789 = vpack.c.b16 %v2507, %v2501
    %v2790 = vpack.c.b16 %v2508, %v2502
    %v2791 = vpack.c.b16 %v2509, %v2503
    %v2792 = vpack.c.b16 %v2510, %v2504
    %v2793 = vpack.c.b16 %v2511, %v2505
    %v2794 = vpack.c.b16 %v2512, %v2506
    %v2795 = vpack.c.b16 %v2519, %v2513
    %v2796 = vpack.c.b16 %v2520, %v2514
    %v2797 = vpack.c.b16 %v2521, %v2515
    %v2798 = vpack.c.b16 %v2522, %v2516
    %v2799 = vpack.c.b16 %v2523, %v2517
    %v2800 = vpack.c.b16 %v2524, %v2518
    %v2801 = vpack.c.b16 %v2531, %v2525
    %v2802 = vpack.c.b16 %v2532, %v2526
    %v2803 = vpack.c.b16 %v2533, %v2527
    %v2804 = vpack.c.b16 %v2534, %v2528
    %v2805 = vpack.c.b16 %v2535, %v2529
    %v2806 = vpack.c.b16 %v2536, %v2530
    %v2807 = vpack.c.b16 %v2543, %v2537
    %v2808 = vpack.c.b16 %v2544, %v2538
    %v2809 = vpack.c.b16 %v2545, %v2539
    %v2810 = vpack.c.b16 %v2546, %v2540
    %v2811 = vpack.c.b16 %v2547, %v2541
    %v2812 = vpack.c.b16 %v2548, %v2542
    %v2813 = vpack.c.b16 %v2555, %v2549
    %v2814 = vpack.c.b16 %v2556, %v2550
    %v2815 = vpack.c.b16 %v2557, %v2551
    %v2816 = vpack.c.b16 %v2558, %v2552
    %v2817 = vpack.c.b16 %v2559, %v2553
    %v2818 = vpack.c.b16 %v2560, %v2554
    %v2819 = vpack.c.b16 %v2567, %v2561
    %v2820 = vpack.c.b16 %v2568, %v2562
    %v2821 = vpack.c.b16 %v2569, %v2563
    %v2822 = vpack.c.b16 %v2570, %v2564
    %v2823 = vpack.c.b16 %v2571, %v2565
    %v2824 = vpack.c.b16 %v2572, %v2566
    %v2825 = vpack.c.b16 %v2579, %v2573
    %v2826 = vpack.c.b16 %v2580, %v2574
    %v2827 = vpack.c.b16 %v2581, %v2575
    %v2828 = vpack.c.b16 %v2582, %v2576
    %v2829 = vpack.c.b16 %v2583, %v2577
    %v2830 = vpack.c.b16 %v2584, %v2578
    %v2831 = vpack.c.b16 %v2591, %v2585
    %v2832 = vpack.c.b16 %v2592, %v2586
    %v2833 = vpack.c.b16 %v2593, %v2587
    %v2834 = vpack.c.b16 %v2594, %v2588
    %v2835 = vpack.c.b16 %v2595, %v2589
    %v2836 = vpack.c.b16 %v2596, %v2590
    %v2837 = vpack.c.b16 %v2603, %v2597
    %v2838 = vpack.c.b16 %v2604, %v2598
    %v2839 = vpack.c.b16 %v2605, %v2599
    %v2840 = vpack.c.b16 %v2606, %v2600
    %v2841 = vpack.c.b16 %v2607, %v2601
    %v2842 = vpack.c.b16 %v2608, %v2602
    %v2843 = vpack.c.b16 %v2615, %v2609
    %v2844 = vpack.c.b16 %v2616, %v2610
    %v2845 = vpack.c.b16 %v2617, %v2611
    %v2846 = vpack.c.b16 %v2618, %v2612
    %v2847 = vpack.c.b16 %v2619, %v2613
    %v2848 = vpack.c.b16 %v2620, %v2614
    %v2849 = vpack.c.b16 %v2627, %v2621
    %v2850 = vpack.c.b16 %v2628, %v2622
    %v2851 = vpack.c.b16 %v2629, %v2623
    %v2852 = vpack.c.b16 %v2630, %v2624
    %v2853 = vpack.c.b16 %v2631, %v2625
    %v2854 = vpack.c.b16 %v2632, %v2626
    %v2855 = vpack.c.b16 %v2639, %v2633
    %v2856 = vpack.c.b16 %v2640, %v2634
    %v2857 = vpack.c.b16 %v2641, %v2635
    %v2858 = vpack.c.b16 %v2642, %v2636
    %v2859 = vpack.c.b16 %v2643, %v2637
    %v2860 = vpack.c.b16 %v2644, %v2638
    %v2861 = vpack.c.b16 %v2651, %v2645
    %v2862 = vpack.c.b16 %v2652, %v2646
    %v2863 = vpack.c.b16 %v2653, %v2647
    %v2864 = vpack.c.b16 %v2654, %v2648
    %v2865 = vpack.c.b16 %v2655, %v2649
    %v2866 = vpack.c.b16 %v2656, %v2650
    %v2867 = vpack.c.b16 %v2663, %v2657
    %v2868 = vpack.c.b16 %v2664, %v2658
    %v2869 = vpack.c.b16 %v2665, %v2659
    %v2870 = vpack.c.b16 %v2666, %v2660
    %v2871 = vpack.c.b16 %v2667, %v2661
    %v2872 = vpack.c.b16 %v2668, %v2662
    %v2873 = vpack.c.b16 %v2675, %v2669
    %v2874 = vpack.c.b16 %v2676, %v2670
    %v2875 = vpack.c.b16 %v2677, %v2671
    %v2876 = vpack.c.b16 %v2678, %v2672
    %v2877 = vpack.c.b16 %v2679, %v2673
    %v2878 = vpack.c.b16 %v2680, %v2674
    %v2879 = vpack.c.b16 %v2687, %v2681
    %v2880 = vpack.c.b16 %v2688, %v2682
    %v2881 = vpack.c.b16 %v2689, %v2683
    %v2882 = vpack.c.b16 %v2690, %v2684
    %v2883 = vpack.c.b16 %v2691, %v2685
    %v2884 = vpack.c.b16 %v2692, %v2686
    %3077 = vmatprep.subr.bf16.mxu0 %v2736
    %3078 = vmatpush1.bf16.msra.mxu0 %v2735
    %3079 = vmatprep.subr.bf16.mxu0 %v2730
    %3080 = vmatpush1.bf16.msra.mxu0 %v2729
    %3081 = vmatprep.subr.bf16.mxu0 %v2724
    %3082 = vmatpush1.bf16.msra.mxu0 %v2723
    %3083 = vmatprep.subr.bf16.mxu0 %v2718
    %3084 = vmatpush1.bf16.msra.mxu0 %v2717
    %3085 = vmatprep.subr.bf16.mxu0 %v2712
    %3086 = vmatpush1.bf16.msra.mxu0 %v2711
    %3087 = vmatprep.subr.bf16.mxu0 %v2706
    %3088 = vmatpush1.bf16.msra.mxu0 %v2705
    %3089 = vmatprep.subr.bf16.mxu0 %v2700
    %3090 = vmatpush1.bf16.msra.mxu0 %v2699
    %3091 = vmatprep.subr.bf16.mxu0 %v2694
    %3092 = vmatpush1.bf16.msra.mxu0 %v2693
    %3093 = vmatprep.subr.bf16.mxu0 %v2784
    %3094 = vmatpush2.bf16.msra.mxu0 %v2783
    %3095 = vmatprep.subr.bf16.mxu0 %v2778
    %3096 = vmatpush2.bf16.msra.mxu0 %v2777
    %3097 = vmatprep.subr.bf16.mxu0 %v2772
    %3098 = vmatpush2.bf16.msra.mxu0 %v2771
    %3099 = vmatprep.subr.bf16.mxu0 %v2766
    %3100 = vmatpush2.bf16.msra.mxu0 %v2765
    %3101 = vmatprep.subr.bf16.mxu0 %v2760
    %3102 = vmatpush2.bf16.msra.mxu0 %v2759
    %3103 = vmatprep.subr.bf16.mxu0 %v2754
    %3104 = vmatpush2.bf16.msra.mxu0 %v2753
    %3105 = vmatprep.subr.bf16.mxu0 %v2748
    %3106 = vmatpush2.bf16.msra.mxu0 %v2747
    %3107 = vmatprep.subr.bf16.mxu0 %v2742
    %3108 = vmatpush2.bf16.msra.mxu0 %v2741
    %3109 = vmatprep.mubr.bf16.mxu0 %v1886
    %3110 = vmatmul.mubr.bf16.gmra.mxu0 %v1885
    %v3111 = vpop.f32.mrf.mxu0
    %v3112 = vadd.f32 %v2090, %v3111
    %v3113 = vpop.f32.mrf.mxu0
    %v3114 = vadd.f32 %v2094, %v3113
    %v3115 = vpop.f32.mrf.mxu0
    %v3116 = vadd.f32 %v2090, %v3115
    %v3117 = vpop.f32.mrf.mxu0
    %v3118 = vadd.f32 %v2094, %v3117
    %3119 = vmatprep.mubr.bf16.mxu0 %v1890
    %3120 = vmatmul.mubr.bf16.gmra.mxu0 %v1889
    %v3121 = vpop.f32.mrf.mxu0
    %v3122 = vadd.f32 %v2090, %v3121
    %v3123 = vpop.f32.mrf.mxu0
    %v3124 = vadd.f32 %v2094, %v3123
    %v3125 = vpop.f32.mrf.mxu0
    %v3126 = vpop.f32.mrf.mxu0
    %3127 = vdwg.mxu0
    %3128 = vmatprep.subr.bf16.mxu0 %v2832
    %3129 = vmatpush1.bf16.msra.mxu0 %v2831
    %3130 = vmatprep.subr.bf16.mxu0 %v2826
    %3131 = vmatpush1.bf16.msra.mxu0 %v2825
    %3132 = vmatprep.subr.bf16.mxu0 %v2820
    %3133 = vmatpush1.bf16.msra.mxu0 %v2819
    %3134 = vmatprep.subr.bf16.mxu0 %v2814
    %3135 = vmatpush1.bf16.msra.mxu0 %v2813
    %3136 = vmatprep.subr.bf16.mxu0 %v2808
    %3137 = vmatpush1.bf16.msra.mxu0 %v2807
    %3138 = vmatprep.subr.bf16.mxu0 %v2802
    %3139 = vmatpush1.bf16.msra.mxu0 %v2801
    %3140 = vmatprep.subr.bf16.mxu0 %v2796
    %3141 = vmatpush1.bf16.msra.mxu0 %v2795
    %3142 = vmatprep.subr.bf16.mxu0 %v2790
    %3143 = vmatpush1.bf16.msra.mxu0 %v2789
    %3144 = vmatprep.subr.bf16.mxu0 %v2880
    %3145 = vmatpush2.bf16.msra.mxu0 %v2879
    %3146 = vmatprep.subr.bf16.mxu0 %v2874
    %3147 = vmatpush2.bf16.msra.mxu0 %v2873
    %3148 = vmatprep.subr.bf16.mxu0 %v2868
    %3149 = vmatpush2.bf16.msra.mxu0 %v2867
    %3150 = vmatprep.subr.bf16.mxu0 %v2862
    %3151 = vmatpush2.bf16.msra.mxu0 %v2861
    %3152 = vmatprep.subr.bf16.mxu0 %v2856
    %3153 = vmatpush2.bf16.msra.mxu0 %v2855
    %3154 = vmatprep.subr.bf16.mxu0 %v2850
    %3155 = vmatpush2.bf16.msra.mxu0 %v2849
    %3156 = vmatprep.subr.bf16.mxu0 %v2844
    %3157 = vmatpush2.bf16.msra.mxu0 %v2843
    %3158 = vmatprep.subr.bf16.mxu0 %v2838
    %3159 = vmatpush2.bf16.msra.mxu0 %v2837
    %3160 = vmatprep.mubr.bf16.mxu0 %v1888
    %3161 = vmatmul.mubr.bf16.gmra.mxu0 %v1887
    %v3162 = vpop.f32.mrf.mxu0
    %v3163 = vadd.f32 %v3112, %v3162
    %v3164 = vpop.f32.mrf.mxu0
    %v3165 = vadd.f32 %v3114, %v3164
    %v3166 = vpop.f32.mrf.mxu0
    %v3167 = vadd.f32 %v3116, %v3166
    %v3168 = vpop.f32.mrf.mxu0
    %v3169 = vadd.f32 %v3118, %v3168
    %3170 = vmatprep.mubr.bf16.mxu0 %v1892
    %3171 = vmatmul.mubr.bf16.gmra.mxu0 %v1891
    %v3172 = vpop.f32.mrf.mxu0
    %v3173 = vadd.f32 %v3122, %v3172
    %v3174 = vpop.f32.mrf.mxu0
    %v3175 = vadd.f32 %v3124, %v3174
    %v3176 = vpop.f32.mrf.mxu0
    %v3177 = vpop.f32.mrf.mxu0
    %3178 = vdwg.mxu0
    %3179 = vmatprep.subr.bf16.mxu0 %v2738
    %3180 = vmatpush1.bf16.msra.mxu0 %v2737
    %3181 = vmatprep.subr.bf16.mxu0 %v2732
    %3182 = vmatpush1.bf16.msra.mxu0 %v2731
    %3183 = vmatprep.subr.bf16.mxu0 %v2726
    %3184 = vmatpush1.bf16.msra.mxu0 %v2725
    %3185 = vmatprep.subr.bf16.mxu0 %v2720
    %3186 = vmatpush1.bf16.msra.mxu0 %v2719
    %3187 = vmatprep.subr.bf16.mxu0 %v2714
    %3188 = vmatpush1.bf16.msra.mxu0 %v2713
    %3189 = vmatprep.subr.bf16.mxu0 %v2708
    %3190 = vmatpush1.bf16.msra.mxu0 %v2707
    %3191 = vmatprep.subr.bf16.mxu0 %v2702
    %3192 = vmatpush1.bf16.msra.mxu0 %v2701
    %3193 = vmatprep.subr.bf16.mxu0 %v2696
    %3194 = vmatpush1.bf16.msra.mxu0 %v2695
    %3195 = vmatprep.subr.bf16.mxu0 %v2786
    %3196 = vmatpush2.bf16.msra.mxu0 %v2785
    %3197 = vmatprep.subr.bf16.mxu0 %v2780
    %3198 = vmatpush2.bf16.msra.mxu0 %v2779
    %3199 = vmatprep.subr.bf16.mxu0 %v2774
    %3200 = vmatpush2.bf16.msra.mxu0 %v2773
    %3201 = vmatprep.subr.bf16.mxu0 %v2768
    %3202 = vmatpush2.bf16.msra.mxu0 %v2767
    %3203 = vmatprep.subr.bf16.mxu0 %v2762
    %3204 = vmatpush2.bf16.msra.mxu0 %v2761
    %3205 = vmatprep.subr.bf16.mxu0 %v2756
    %3206 = vmatpush2.bf16.msra.mxu0 %v2755
    %3207 = vmatprep.subr.bf16.mxu0 %v2750
    %3208 = vmatpush2.bf16.msra.mxu0 %v2749
    %3209 = vmatprep.subr.bf16.mxu0 %v2744
    %3210 = vmatpush2.bf16.msra.mxu0 %v2743
    %3211 = vmatprep.mubr.bf16.mxu0 %v1886
    %3212 = vmatmul.mubr.bf16.gmra.mxu0 %v1885
    %v3213 = vpop.f32.mrf.mxu0
    %v3214 = vadd.f32 %v2098, %v3213
    %v3215 = vpop.f32.mrf.mxu0
    %v3216 = vadd.f32 %v2102, %v3215
    %v3217 = vpop.f32.mrf.mxu0
    %v3218 = vadd.f32 %v2098, %v3217
    %v3219 = vpop.f32.mrf.mxu0
    %v3220 = vadd.f32 %v2102, %v3219
    %3221 = vmatprep.mubr.bf16.mxu0 %v1890
    %3222 = vmatmul.mubr.bf16.gmra.mxu0 %v1889
    %v3223 = vpop.f32.mrf.mxu0
    %v3224 = vadd.f32 %v2098, %v3223
    %v3225 = vpop.f32.mrf.mxu0
    %v3226 = vadd.f32 %v2102, %v3225
    %v3227 = vpop.f32.mrf.mxu0
    %v3228 = vpop.f32.mrf.mxu0
    %3229 = vdwg.mxu0
    %3230 = vmatprep.subr.bf16.mxu0 %v2834
    %3231 = vmatpush1.bf16.msra.mxu0 %v2833
    %3232 = vmatprep.subr.bf16.mxu0 %v2828
    %3233 = vmatpush1.bf16.msra.mxu0 %v2827
    %3234 = vmatprep.subr.bf16.mxu0 %v2822
    %3235 = vmatpush1.bf16.msra.mxu0 %v2821
    %3236 = vmatprep.subr.bf16.mxu0 %v2816
    %3237 = vmatpush1.bf16.msra.mxu0 %v2815
    %3238 = vmatprep.subr.bf16.mxu0 %v2810
    %3239 = vmatpush1.bf16.msra.mxu0 %v2809
    %3240 = vmatprep.subr.bf16.mxu0 %v2804
    %3241 = vmatpush1.bf16.msra.mxu0 %v2803
    %3242 = vmatprep.subr.bf16.mxu0 %v2798
    %3243 = vmatpush1.bf16.msra.mxu0 %v2797
    %3244 = vmatprep.subr.bf16.mxu0 %v2792
    %3245 = vmatpush1.bf16.msra.mxu0 %v2791
    %3246 = vmatprep.subr.bf16.mxu0 %v2882
    %3247 = vmatpush2.bf16.msra.mxu0 %v2881
    %3248 = vmatprep.subr.bf16.mxu0 %v2876
    %3249 = vmatpush2.bf16.msra.mxu0 %v2875
    %3250 = vmatprep.subr.bf16.mxu0 %v2870
    %3251 = vmatpush2.bf16.msra.mxu0 %v2869
    %3252 = vmatprep.subr.bf16.mxu0 %v2864
    %3253 = vmatpush2.bf16.msra.mxu0 %v2863
    %3254 = vmatprep.subr.bf16.mxu0 %v2858
    %3255 = vmatpush2.bf16.msra.mxu0 %v2857
    %3256 = vmatprep.subr.bf16.mxu0 %v2852
    %3257 = vmatpush2.bf16.msra.mxu0 %v2851
    %3258 = vmatprep.subr.bf16.mxu0 %v2846
    %3259 = vmatpush2.bf16.msra.mxu0 %v2845
    %3260 = vmatprep.subr.bf16.mxu0 %v2840
    %3261 = vmatpush2.bf16.msra.mxu0 %v2839
    %3262 = vmatprep.mubr.bf16.mxu0 %v1888
    %3263 = vmatmul.mubr.bf16.gmra.mxu0 %v1887
    %v3264 = vpop.f32.mrf.mxu0
    %v3265 = vadd.f32 %v3214, %v3264
    %v3266 = vpop.f32.mrf.mxu0
    %v3267 = vadd.f32 %v3216, %v3266
    %v3268 = vpop.f32.mrf.mxu0
    %v3269 = vadd.f32 %v3218, %v3268
    %v3270 = vpop.f32.mrf.mxu0
    %v3271 = vadd.f32 %v3220, %v3270
    %3272 = vmatprep.mubr.bf16.mxu0 %v1892
    %3273 = vmatmul.mubr.bf16.gmra.mxu0 %v1891
    %v3274 = vpop.f32.mrf.mxu0
    %v3275 = vadd.f32 %v3224, %v3274
    %v3276 = vpop.f32.mrf.mxu0
    %v3277 = vadd.f32 %v3226, %v3276
    %v3278 = vpop.f32.mrf.mxu0
    %v3279 = vpop.f32.mrf.mxu0
    %3280 = vdwg.mxu0
    %3281 = vmatprep.subr.bf16.mxu0 %v2740
    %3282 = vmatpush1.bf16.msra.mxu0 %v2739
    %3283 = vmatprep.subr.bf16.mxu0 %v2734
    %3284 = vmatpush1.bf16.msra.mxu0 %v2733
    %3285 = vmatprep.subr.bf16.mxu0 %v2728
    %3286 = vmatpush1.bf16.msra.mxu0 %v2727
    %3287 = vmatprep.subr.bf16.mxu0 %v2722
    %3288 = vmatpush1.bf16.msra.mxu0 %v2721
    %3289 = vmatprep.subr.bf16.mxu0 %v2716
    %3290 = vmatpush1.bf16.msra.mxu0 %v2715
    %3291 = vmatprep.subr.bf16.mxu0 %v2710
    %3292 = vmatpush1.bf16.msra.mxu0 %v2709
    %3293 = vmatprep.subr.bf16.mxu0 %v2704
    %3294 = vmatpush1.bf16.msra.mxu0 %v2703
    %3295 = vmatprep.subr.bf16.mxu0 %v2698
    %3296 = vmatpush1.bf16.msra.mxu0 %v2697
    %3297 = vmatprep.subr.bf16.mxu0 %v2788
    %3298 = vmatpush2.bf16.msra.mxu0 %v2787
    %3299 = vmatprep.subr.bf16.mxu0 %v2782
    %3300 = vmatpush2.bf16.msra.mxu0 %v2781
    %3301 = vmatprep.subr.bf16.mxu0 %v2776
    %3302 = vmatpush2.bf16.msra.mxu0 %v2775
    %3303 = vmatprep.subr.bf16.mxu0 %v2770
    %3304 = vmatpush2.bf16.msra.mxu0 %v2769
    %3305 = vmatprep.subr.bf16.mxu0 %v2764
    %3306 = vmatpush2.bf16.msra.mxu0 %v2763
    %3307 = vmatprep.subr.bf16.mxu0 %v2758
    %3308 = vmatpush2.bf16.msra.mxu0 %v2757
    %3309 = vmatprep.subr.bf16.mxu0 %v2752
    %3310 = vmatpush2.bf16.msra.mxu0 %v2751
    %3311 = vmatprep.subr.bf16.mxu0 %v2746
    %3312 = vmatpush2.bf16.msra.mxu0 %v2745
    %3313 = vmatprep.mubr.bf16.mxu0 %v1886
    %3314 = vmatmul.mubr.bf16.gmra.mxu0 %v1885
    %v3315 = vpop.f32.mrf.mxu0
    %v3316 = vadd.f32 %v2106, %v3315
    %v3317 = vpop.f32.mrf.mxu0
    %v3318 = vadd.f32 %v2110, %v3317
    %v3319 = vpop.f32.mrf.mxu0
    %v3320 = vadd.f32 %v2106, %v3319
    %v3321 = vpop.f32.mrf.mxu0
    %v3322 = vadd.f32 %v2110, %v3321
    %3323 = vmatprep.mubr.bf16.mxu0 %v1890
    %3324 = vmatmul.mubr.bf16.gmra.mxu0 %v1889
    %v3325 = vpop.f32.mrf.mxu0
    %v3326 = vadd.f32 %v2106, %v3325
    %v3327 = vpop.f32.mrf.mxu0
    %v3328 = vadd.f32 %v2110, %v3327
    %v3329 = vpop.f32.mrf.mxu0
    %v3330 = vpop.f32.mrf.mxu0
    %3331 = vdwg.mxu0
    %3332 = vmatprep.subr.bf16.mxu0 %v2836
    %3333 = vmatpush1.bf16.msra.mxu0 %v2835
    %3334 = vmatprep.subr.bf16.mxu0 %v2830
    %3335 = vmatpush1.bf16.msra.mxu0 %v2829
    %3336 = vmatprep.subr.bf16.mxu0 %v2824
    %3337 = vmatpush1.bf16.msra.mxu0 %v2823
    %3338 = vmatprep.subr.bf16.mxu0 %v2818
    %3339 = vmatpush1.bf16.msra.mxu0 %v2817
    %3340 = vmatprep.subr.bf16.mxu0 %v2812
    %3341 = vmatpush1.bf16.msra.mxu0 %v2811
    %3342 = vmatprep.subr.bf16.mxu0 %v2806
    %3343 = vmatpush1.bf16.msra.mxu0 %v2805
    %3344 = vmatprep.subr.bf16.mxu0 %v2800
    %3345 = vmatpush1.bf16.msra.mxu0 %v2799
    %3346 = vmatprep.subr.bf16.mxu0 %v2794
    %3347 = vmatpush1.bf16.msra.mxu0 %v2793
    %3348 = vmatprep.subr.bf16.mxu0 %v2884
    %3349 = vmatpush2.bf16.msra.mxu0 %v2883
    %3350 = vmatprep.subr.bf16.mxu0 %v2878
    %3351 = vmatpush2.bf16.msra.mxu0 %v2877
    %3352 = vmatprep.subr.bf16.mxu0 %v2872
    %3353 = vmatpush2.bf16.msra.mxu0 %v2871
    %3354 = vmatprep.subr.bf16.mxu0 %v2866
    %3355 = vmatpush2.bf16.msra.mxu0 %v2865
    %3356 = vmatprep.subr.bf16.mxu0 %v2860
    %3357 = vmatpush2.bf16.msra.mxu0 %v2859
    %3358 = vmatprep.subr.bf16.mxu0 %v2854
    %3359 = vmatpush2.bf16.msra.mxu0 %v2853
    %3360 = vmatprep.subr.bf16.mxu0 %v2848
    %3361 = vmatpush2.bf16.msra.mxu0 %v2847
    %3362 = vmatprep.subr.bf16.mxu0 %v2842
    %3363 = vmatpush2.bf16.msra.mxu0 %v2841
    %3364 = vmatprep.mubr.bf16.mxu0 %v1888
    %3365 = vmatmul.mubr.bf16.gmra.mxu0 %v1887
    %v3366 = vpop.f32.mrf.mxu0
    %v3367 = vadd.f32 %v3316, %v3366
    %v3368 = vpop.f32.mrf.mxu0
    %v3369 = vadd.f32 %v3318, %v3368
    %v3370 = vpop.f32.mrf.mxu0
    %v3371 = vadd.f32 %v3320, %v3370
    %v3372 = vpop.f32.mrf.mxu0
    %v3373 = vadd.f32 %v3322, %v3372
    %3374 = vmatprep.mubr.bf16.mxu0 %v1892
    %3375 = vmatmul.mubr.bf16.gmra.mxu0 %v1891
    %v3376 = vpop.f32.mrf.mxu0
    %v3377 = vadd.f32 %v3326, %v3376
    %v3378 = vpop.f32.mrf.mxu0
    %v3379 = vadd.f32 %v3328, %v3378
    %v3380 = vpop.f32.mrf.mxu0
    %v3381 = vpop.f32.mrf.mxu0
    %3382 = vdwg.mxu0
    %3383 = vst [vmem:[#allocation11] sm:$0xff] %v3163
    %3384 = vst [vmem:[#allocation11 + $0x8] sm:$0xff] %v3165
    %3385 = vst [vmem:[#allocation11 + $0x10] sm:$0xff] %v3265
    %3386 = vst [vmem:[#allocation11 + $0x18] sm:$0xff] %v3267
    %3387 = vst [vmem:[#allocation11 + $0x20] sm:$0xff] %v3367
    %3388 = vst [vmem:[#allocation11 + $0x28] sm:$0xff] %v3369
    %3389 = vst [vmem:[#allocation11 + $0x30] sm:$0xff] %v3167
    %3390 = vst [vmem:[#allocation11 + $0x38] sm:$0xff] %v3169
    %3391 = vst [vmem:[#allocation11 + $0x40] sm:$0xff] %v3269
    %3392 = vst [vmem:[#allocation11 + $0x48] sm:$0xff] %v3271
    %3393 = vst [vmem:[#allocation11 + $0x50] sm:$0xff] %v3371
    %3394 = vst [vmem:[#allocation11 + $0x58] sm:$0xff] %v3373
    %3395 = vst [vmem:[#allocation11 + $0x60] sm:$0xf] %v3173
    %3396 = vst [vmem:[#allocation11 + $0x68] sm:$0xf] %v3175
    %3397 = vst [vmem:[#allocation11 + $0x70] sm:$0xf] %v3275
    %3398 = vst [vmem:[#allocation11 + $0x78] sm:$0xf] %v3277
    %3399 = vst [vmem:[#allocation11 + $0x80] sm:$0xf] %v3377
    %3400 = vst [vmem:[#allocation11 + $0x88] sm:$0xf] %v3379
    // Predicated region
    $region50: #{tpu_custom_call.1} parent=1 // pred_check
      _
    $region51: #{tpu_custom_call.1} parent=1 // pred_check_branch
      %3402 = sbr.rel (0) target = $region53
    $region52: #{tpu_custom_call.1} parent=1 // pred_region
      %s3404 = ssub.s32 2304, 2304
      %3405 = vsyncadd [#allocation4], %s3404
      %s3406 = sshll.u32 [#allocation11], 4
      %s3407 = int_to_ptr.vmem [resolvable:$true] %s3406
      %3412 = dma.vmem_to_hbm [thread:$0]  %s3407, 2304, %s7, [#allocation4], 768, 768, 48
    $region53: #{tpu_custom_call.1} parent=1 // pred_fallthru
      _
    // Predicated region
    $region54: #{tpu_custom_call.1} parent=1 // pred_check
      _
    $region55: #{tpu_custom_call.1} parent=1 // pred_check_branch
      %3414 = sbr.rel (0) target = $region57
    $region56: #{tpu_custom_call.1} parent=1 // pred_region
      %3415 = dma.done [#allocation4], 2304
    $region57: #{tpu_custom_call.1} parent=1 // pred_fallthru
      _
    %3416 = vsyncpa [#allocation3], 1
    %3417 = vsyncpa [#allocation6], 1
    %3418 = vsyncpa [#allocation9], 1
    %3419 = vsyncpa [#allocation4], 1

</llo_original>
